<compile_context>
chip_gen: v7x
topology: tpu7x:2x2x1
jax: 0.10.0
libtpu: 0.0.40
codegen_flags: <defaults>
</compile_context>

<pallas_src>
import math
from functools import partial

import jax
import jax.numpy as jnp
from jax.experimental import pallas as pl
from jax.experimental.pallas import tpu as pltpu


# ----------------------------- kernel helpers ------------------------------

def _layernorm(x, gamma, beta, eps=1e-6):
    mu = jnp.mean(x, axis=-1, keepdims=True)
    var = jnp.mean((x - mu) ** 2, axis=-1, keepdims=True)
    return (x - mu) * jax.lax.rsqrt(var + eps) * gamma + beta


def _gelu(x):
    c = math.sqrt(2.0 / math.pi)
    return 0.5 * x * (1.0 + jnp.tanh(c * (x + 0.044715 * x * x * x)))


# ------------------------------ fused kernel --------------------------------

def encoder_kernel(num_heads, batch, t_pad, t_valid, hooks,
                   patches_ref, pw_ref, tokbias_ref,
                   ln1g_ref, ln1b_ref, wqkv_ref, bqkv_ref,
                   wproj_ref, bproj_ref, ln2g_ref, ln2b_ref,
                   w1_ref, b1_ref, w2_ref, b2_ref,
                   hooks_ref, x_ref):
    d = pl.program_id(0)
    D = pw_ref.shape[1]
    hd = D // num_heads
    BT = batch * t_pad

    # ---- grid step 0: fused patch-embed + cls/pos/conv-bias addend ----
    # Padded rows of `patches` are zero and their addend is zero, so padded
    # token rows start at exactly 0.
    @pl.when(d == 0)
    def _init():
        emb = jnp.dot(patches_ref[...].astype(jnp.bfloat16), pw_ref[...],
                      preferred_element_type=jnp.float32)
        x_ref[...] = emb + tokbias_ref[...]

    x = x_ref[...]                                            # [BT, D] f32

    # ---------------- attention (pre-norm) ----------------
    h = _layernorm(x, ln1g_ref[0], ln1b_ref[0])
    qkv = jnp.dot(h.astype(jnp.bfloat16), wqkv_ref[0],
                  preferred_element_type=jnp.float32) + bqkv_ref[0]
    q = qkv[:, 0 * D:1 * D].reshape(batch, t_pad, D)  # scale folded into w_qkv
    k = qkv[:, 1 * D:2 * D].reshape(batch, t_pad, D)
    v = qkv[:, 2 * D:3 * D].reshape(batch, t_pad, D)

    key_ids = jax.lax.broadcasted_iota(jnp.int32, (1, t_pad, t_pad), 2)
    kmask = key_ids < t_valid                          # mask padded key tokens

    wproj = wproj_ref[0]
    attn = jnp.zeros((BT, D), jnp.float32)
    for hh in range(num_heads):                        # small static loop
        sl = slice(hh * hd, (hh + 1) * hd)
        qh = q[:, :, sl].astype(jnp.bfloat16)
        kh = k[:, :, sl].astype(jnp.bfloat16)
        vh = v[:, :, sl].astype(jnp.bfloat16)
        s = jnp.einsum('bqd,bkd->bqk', qh, kh,
                       preferred_element_type=jnp.float32)   # [B, T, T]
        s = jnp.where(kmask, s, -1e30)
        s = s - jnp.max(s, axis=-1, keepdims=True)
        e = jnp.exp(s)
        p = e * pl.reciprocal(jnp.sum(e, axis=-1, keepdims=True), approx=True)
        oh = jnp.einsum('bqk,bkd->bqd', p.astype(jnp.bfloat16), vh,
                        preferred_element_type=jnp.float32)  # [B, T, hd]
        # fold head output straight into the output projection (no concat)
        attn = attn + jnp.dot(oh.reshape(BT, hd).astype(jnp.bfloat16),
                              wproj[sl, :],
                              preferred_element_type=jnp.float32)
    x = x + attn + bproj_ref[0]

    # ---------------- MLP (pre-norm) ----------------
    h2 = _layernorm(x, ln2g_ref[0], ln2b_ref[0])
    m = jnp.dot(h2.astype(jnp.bfloat16), w1_ref[0],
                preferred_element_type=jnp.float32) + b1_ref[0]
    m = _gelu(m)
    m = jnp.dot(m.astype(jnp.bfloat16), w2_ref[0],
                preferred_element_type=jnp.float32) + b2_ref[0]
    x = x + m
    x_ref[...] = x

    # ---------------- forward hooks ----------------
    for idx, hk in enumerate(hooks):
        @pl.when(d == hk)
        def _store(idx=idx):
            hooks_ref[idx] = x


# ------------------------------ parameter init ------------------------------

def init_params(key, *, depth, dim, num_heads, mlp_ratio, patch, in_chans,
                num_tokens):
    mlp_dim = dim * mlp_ratio
    patch_in = in_chans * patch * patch
    hd = dim // num_heads
    scale = 1.0 / math.sqrt(hd)

    keys = jax.random.split(key, 8)

    def rnd(k, shape):
        return 0.02 * jax.random.normal(k, shape, jnp.float32)

    # fold the attention scale into the Q columns of the stacked qkv weight
    w_qkv = rnd(keys[3], (depth, dim, 3 * dim))
    w_qkv = w_qkv.at[:, :, :dim].multiply(scale)
    b_qkv = jnp.zeros((depth, 1, 3 * dim), jnp.float32)
    b_qkv = b_qkv.at[:, :, :dim].multiply(scale)

    return {
        'patch_w': rnd(keys[0], (patch_in, dim)).astype(jnp.bfloat16),
        'patch_b': jnp.zeros((1, dim), jnp.float32),
        'cls_token': rnd(keys[1], (1, 1, dim)),
        'pos_embed': rnd(keys[2], (1, num_tokens, dim)),
        'ln1_g': jnp.ones((depth, 1, dim), jnp.float32),
        'ln1_b': jnp.zeros((depth, 1, dim), jnp.float32),
        'w_qkv': w_qkv.astype(jnp.bfloat16),
        'b_qkv': b_qkv,
        'w_proj': rnd(keys[4], (depth, dim, dim)).astype(jnp.bfloat16),
        'b_proj': jnp.zeros((depth, 1, dim), jnp.float32),
        'ln2_g': jnp.ones((depth, 1, dim), jnp.float32),
        'ln2_b': jnp.zeros((depth, 1, dim), jnp.float32),
        'w_fc1': rnd(keys[5], (depth, dim, mlp_dim)).astype(jnp.bfloat16),
        'b_fc1': jnp.zeros((depth, 1, mlp_dim), jnp.float32),
        'w_fc2': rnd(keys[6], (depth, mlp_dim, dim)).astype(jnp.bfloat16),
        'b_fc2': jnp.zeros((depth, 1, dim), jnp.float32),
    }


# ------------------------------- forward pass -------------------------------

def encoder_forward(x, params, *, patch=16, num_heads=2, hooks=(2, 5, 8, 11)):
    B, C, H, W = x.shape
    gh, gw = H // patch, W // patch
    nP = gh * gw
    D = params['pos_embed'].shape[-1]
    depth = params['w_qkv'].shape[0]
    mlp_dim = params['w_fc1'].shape[-1]
    T = nP + 1
    Tpad = ((T + 7) // 8) * 8            # sublane-align token count
    BT = B * Tpad
    Cpp = C * patch * patch
    hooks = tuple(sorted(hooks))
    nhk = len(hooks)

    # Patch extraction (glue): NCHW -> [B, nP, C*p*p] in (c,u,v) order to match
    # PyTorch Conv2d weight layout; zero rows at the cls slot and pad slots.
    p = x.reshape(B, C, gh, patch, gw, patch)
    p = p.transpose(0, 2, 4, 1, 3, 5).reshape(B, nP, Cpp)
    patches_pad = jnp.zeros((B, Tpad, Cpp), jnp.float32)
    patches_pad = patches_pad.at[:, 1:1 + nP, :].set(p).reshape(BT, Cpp)

    # Token addend: cls+pos for row 0, pos+conv-bias for patch rows, 0 for pad.
    tokbias = jnp.zeros((B, Tpad, D), jnp.float32)
    tokbias = tokbias.at[:, 0, :].set(params['cls_token'][0, 0]
                                      + params['pos_embed'][0, 0])
    tokbias = tokbias.at[:, 1:1 + nP, :].set(params['pos_embed'][0, 1:]
                                             + params['patch_b'])
    tokbias = tokbias.reshape(BT, D)

    kern = partial(encoder_kernel, num_heads, B, Tpad, T, hooks)
    const2 = lambda d: (0, 0)
    per3 = lambda d: (d, 0, 0)

    grid_spec = pltpu.PrefetchScalarGridSpec(
        num_scalar_prefetch=0,
        grid=(depth,),
        in_specs=[
            pl.BlockSpec((BT, Cpp), const2),          # patches (resident)
            pl.BlockSpec((Cpp, D), const2),           # patch_w
            pl.BlockSpec((BT, D), const2),            # tokbias
            pl.BlockSpec((1, 1, D), per3),            # ln1_g
            pl.BlockSpec((1, 1, D), per3),            # ln1_b
            pl.BlockSpec((1, D, 3 * D), per3),        # w_qkv
            pl.BlockSpec((1, 1, 3 * D), per3),        # b_qkv
            pl.BlockSpec((1, D, D), per3),            # w_proj
            pl.BlockSpec((1, 1, D), per3),            # b_proj
            pl.BlockSpec((1, 1, D), per3),            # ln2_g
            pl.BlockSpec((1, 1, D), per3),            # ln2_b
            pl.BlockSpec((1, D, mlp_dim), per3),      # w_fc1
            pl.BlockSpec((1, 1, mlp_dim), per3),      # b_fc1
            pl.BlockSpec((1, mlp_dim, D), per3),      # w_fc2
            pl.BlockSpec((1, 1, D), per3),            # b_fc2
        ],
        out_specs=pl.BlockSpec((nhk, BT, D), lambda d: (0, 0, 0)),
        scratch_shapes=[pltpu.VMEM((BT, D), jnp.float32)],  # resident x
    )

    # advisory cost estimate
    hd = D // num_heads
    flops = 2 * BT * Cpp * D + depth * (
        2 * BT * D * 3 * D
        + 2 * 2 * B * num_heads * Tpad * Tpad * hd
        + 2 * BT * D * D
        + 2 * 2 * BT * D * mlp_dim)
    transcendentals = depth * (B * num_heads * Tpad * Tpad + BT * mlp_dim)
    inputs = (patches_pad, params['patch_w'], tokbias,
              params['ln1_g'], params['ln1_b'], params['w_qkv'],
              params['b_qkv'], params['w_proj'], params['b_proj'],
              params['ln2_g'], params['ln2_b'], params['w_fc1'],
              params['b_fc1'], params['w_fc2'], params['b_fc2'])
    bytes_accessed = int(sum(a.size * a.dtype.itemsize for a in inputs)
                         + nhk * BT * D * 4)

    out = pl.pallas_call(
        kern,
        grid_spec=grid_spec,
        out_shape=jax.ShapeDtypeStruct((nhk, BT, D), jnp.float32),
        compiler_params=pltpu.CompilerParams(
            dimension_semantics=("arbitrary",)),   # depth axis is sequential
        cost_estimate=pl.CostEstimate(flops=flops,
                                      transcendentals=transcendentals,
                                      bytes_accessed=bytes_accessed),
    )(*inputs)

    out = out.reshape(nhk, B, Tpad, D)[:, :, :T, :]   # drop padded tokens
    # Final norm / classification head do not affect the hook outputs.
    return [out[i] for i in range(nhk)]


# ----------------------------------- main ------------------------------------

if __name__ == "__main__":
    DEPTH = 12
    DIM = 128                    # lane-dense hidden size
    NUM_HEADS = 2                # head dim 64 (ViT-base head width)
    MLP_RATIO = 4
    PATCH = 16
    IN_CHANS = 3
    IMG = 64                     # 4x4 = 16 patches + cls = 17 tokens
    B = 2
    NUM_TOKENS = (IMG // PATCH) ** 2 + 1
    HOOKS = (2, 5, 8, 11)

    root = jax.random.PRNGKey(0)
    k_params, k_x = jax.random.split(root)
    params = init_params(k_params, depth=DEPTH, dim=DIM, num_heads=NUM_HEADS,
                         mlp_ratio=MLP_RATIO, patch=PATCH, in_chans=IN_CHANS,
                         num_tokens=NUM_TOKENS)
    x = jax.random.normal(k_x, (B, IN_CHANS, IMG, IMG), jnp.float32)

    fwd = jax.jit(partial(encoder_forward, patch=PATCH, num_heads=NUM_HEADS,
                          hooks=HOOKS))
    outs = jax.block_until_ready(fwd(x, params))

    assert len(outs) == len(HOOKS)
    for o in outs:
        assert o.shape == (B, NUM_TOKENS, DIM)
        assert bool(jnp.all(jnp.isfinite(o)))
    print("KERNEL_OK")
</pallas_src>

<mosaic_0001>
module attributes {stable_mosaic.version = 11 : i64} {
  func.func @encoder_kernel(%arg0: i32, %arg1: memref<48x768xf32, #tpu.memory_space<vmem>>, %arg2: memref<768x128xbf16, #tpu.memory_space<vmem>>, %arg3: memref<48x128xf32, #tpu.memory_space<vmem>>, %arg4: memref<1x1x128xf32, #tpu.memory_space<vmem>>, %arg5: memref<1x1x128xf32, #tpu.memory_space<vmem>>, %arg6: memref<1x128x384xbf16, #tpu.memory_space<vmem>>, %arg7: memref<1x1x384xf32, #tpu.memory_space<vmem>>, %arg8: memref<1x128x128xbf16, #tpu.memory_space<vmem>>, %arg9: memref<1x1x128xf32, #tpu.memory_space<vmem>>, %arg10: memref<1x1x128xf32, #tpu.memory_space<vmem>>, %arg11: memref<1x1x128xf32, #tpu.memory_space<vmem>>, %arg12: memref<1x128x512xbf16, #tpu.memory_space<vmem>>, %arg13: memref<1x1x512xf32, #tpu.memory_space<vmem>>, %arg14: memref<1x512x128xbf16, #tpu.memory_space<vmem>>, %arg15: memref<1x1x128xf32, #tpu.memory_space<vmem>>, %arg16: memref<4x48x128xf32, #tpu.memory_space<vmem>>, %arg17: memref<48x128xf32, #tpu.memory_space<vmem>>) attributes {dimension_semantics = [#tpu.dimension_semantics<arbitrary>], iteration_bounds = array<i64: 12>, scalar_prefetch = 0 : i64, scratch_operands = 1 : i64, tpu.core_type = #tpu.core_type<tc>, window_params = [{pipeline_mode = #tpu.pipeline_mode<synchronous>, transform_indices = @transform_0, window_bounds = array<i64: 48, 768>}, {pipeline_mode = #tpu.pipeline_mode<synchronous>, transform_indices = @transform_1, window_bounds = array<i64: 768, 128>}, {pipeline_mode = #tpu.pipeline_mode<synchronous>, transform_indices = @transform_2, window_bounds = array<i64: 48, 128>}, {transform_indices = @transform_3, window_bounds = array<i64: 1, 1, 128>}, {transform_indices = @transform_4, window_bounds = array<i64: 1, 1, 128>}, {transform_indices = @transform_5, window_bounds = array<i64: 1, 128, 384>}, {transform_indices = @transform_6, window_bounds = array<i64: 1, 1, 384>}, {transform_indices = @transform_7, window_bounds = array<i64: 1, 128, 128>}, {transform_indices = @transform_8, window_bounds = array<i64: 1, 1, 128>}, {transform_indices = @transform_9, window_bounds = array<i64: 1, 1, 128>}, {transform_indices = @transform_10, window_bounds = array<i64: 1, 1, 128>}, {transform_indices = @transform_11, window_bounds = array<i64: 1, 128, 512>}, {transform_indices = @transform_12, window_bounds = array<i64: 1, 1, 512>}, {transform_indices = @transform_13, window_bounds = array<i64: 1, 512, 128>}, {transform_indices = @transform_14, window_bounds = array<i64: 1, 1, 128>}, {pipeline_mode = #tpu.pipeline_mode<synchronous>, transform_indices = @transform_15, window_bounds = array<i64: 4, 48, 128>}]} {
    %c0_i32 = arith.constant 0 : i32
    %0 = arith.cmpi eq, %arg0, %c0_i32 : i32
    %1 = arith.extui %0 : i1 to i32
    %c0_i32_0 = arith.constant 0 : i32
    %2 = arith.cmpi ne, %1, %c0_i32_0 : i32
    scf.if %2 {
      %c0_73 = arith.constant 0 : index
      %c0_74 = arith.constant 0 : index
      %180 = vector.load %arg1[%c0_73, %c0_74] : memref<48x768xf32, #tpu.memory_space<vmem>>, vector<48x768xf32>
      %181 = arith.truncf %180 : vector<48x768xf32> to vector<48x768xbf16>
      %c0_75 = arith.constant 0 : index
      %c0_76 = arith.constant 0 : index
      %182 = vector.load %arg2[%c0_75, %c0_76] : memref<768x128xbf16, #tpu.memory_space<vmem>>, vector<768x128xbf16>
      %cst_77 = arith.constant dense<0.000000e+00> : vector<48x128xf32>
      %183 = tpu.matmul %181, %182, %cst_77 {dimension_numbers = #tpu.dot_dimension_numbers<[1], [0], [0], [1], [0, 0, 1, 1], [], []>} : vector<48x768xbf16>, vector<768x128xbf16>, vector<48x128xf32> -> vector<48x128xf32>
      %c0_78 = arith.constant 0 : index
      %c0_79 = arith.constant 0 : index
      %184 = vector.load %arg3[%c0_78, %c0_79] : memref<48x128xf32, #tpu.memory_space<vmem>>, vector<48x128xf32>
      %185 = arith.addf %183, %184 : vector<48x128xf32>
      %c0_80 = arith.constant 0 : index
      %c0_81 = arith.constant 0 : index
      %186 = vector.load %arg17[%c0_80, %c0_81] : memref<48x128xf32, #tpu.memory_space<vmem>>, vector<48x128xf32>
      tpu.vector_store %arg17[%c0_80, %c0_81], %185 {strides = array<i32>} : memref<48x128xf32, #tpu.memory_space<vmem>>, vector<48x128xf32>,
    } else {
    }
    %c0 = arith.constant 0 : index
    %c0_1 = arith.constant 0 : index
    %3 = vector.load %arg17[%c0, %c0_1] : memref<48x128xf32, #tpu.memory_space<vmem>>, vector<48x128xf32>
    %c0_2 = arith.constant 0 : index
    %c0_3 = arith.constant 0 : index
    %c0_4 = arith.constant 0 : index
    %4 = vector.load %arg4[%c0_2, %c0_3, %c0_4] : memref<1x1x128xf32, #tpu.memory_space<vmem>>, vector<1x1x128xf32>
    %5 = vector.shape_cast %4 : vector<1x1x128xf32> to vector<1x128xf32>
    %c0_5 = arith.constant 0 : index
    %c0_6 = arith.constant 0 : index
    %c0_7 = arith.constant 0 : index
    %6 = vector.load %arg5[%c0_5, %c0_6, %c0_7] : memref<1x1x128xf32, #tpu.memory_space<vmem>>, vector<1x1x128xf32>
    %7 = vector.shape_cast %6 : vector<1x1x128xf32> to vector<1x128xf32>
    %cst = arith.constant dense<0.000000e+00> : vector<48xf32>
    %8 = vector.multi_reduction <add>, %3, %cst [1] : vector<48x128xf32> to vector<48xf32>
    %9 = vector.shape_cast %8 : vector<48xf32> to vector<48x1xf32>
    %cst_8 = arith.constant 1.280000e+02 : f32
    %10 = vector.broadcast %cst_8 : f32 to vector<48x1xf32>
    %11 = arith.divf %9, %10 : vector<48x1xf32>
    %12 = vector.broadcast %11 : vector<48x1xf32> to vector<48x128xf32>
    %13 = arith.subf %3, %12 : vector<48x128xf32>
    %14 = arith.mulf %13, %13 : vector<48x128xf32>
    %cst_9 = arith.constant dense<0.000000e+00> : vector<48xf32>
    %15 = vector.multi_reduction <add>, %14, %cst_9 [1] : vector<48x128xf32> to vector<48xf32>
    %16 = vector.shape_cast %15 : vector<48xf32> to vector<48x1xf32>
    %cst_10 = arith.constant 1.280000e+02 : f32
    %17 = vector.broadcast %cst_10 : f32 to vector<48x1xf32>
    %18 = arith.divf %16, %17 : vector<48x1xf32>
    %19 = vector.broadcast %11 : vector<48x1xf32> to vector<48x128xf32>
    %20 = arith.subf %3, %19 : vector<48x128xf32>
    %cst_11 = arith.constant 9.99999997E-7 : f32
    %21 = vector.broadcast %cst_11 : f32 to vector<48x1xf32>
    %22 = arith.addf %18, %21 : vector<48x1xf32>
    %23 = math.rsqrt %22 : vector<48x1xf32>
    %24 = vector.broadcast %23 : vector<48x1xf32> to vector<48x128xf32>
    %25 = arith.mulf %20, %24 : vector<48x128xf32>
    %26 = vector.broadcast %5 : vector<1x128xf32> to vector<48x128xf32>
    %27 = arith.mulf %25, %26 : vector<48x128xf32>
    %28 = vector.broadcast %7 : vector<1x128xf32> to vector<48x128xf32>
    %29 = arith.addf %27, %28 : vector<48x128xf32>
    %30 = arith.truncf %29 : vector<48x128xf32> to vector<48x128xbf16>
    %c0_12 = arith.constant 0 : index
    %c0_13 = arith.constant 0 : index
    %c0_14 = arith.constant 0 : index
    %31 = vector.load %arg6[%c0_12, %c0_13, %c0_14] : memref<1x128x384xbf16, #tpu.memory_space<vmem>>, vector<1x128x384xbf16>
    %32 = vector.shape_cast %31 : vector<1x128x384xbf16> to vector<128x384xbf16>
    %cst_15 = arith.constant dense<0.000000e+00> : vector<48x384xf32>
    %33 = tpu.matmul %30, %32, %cst_15 {dimension_numbers = #tpu.dot_dimension_numbers<[1], [0], [0], [1], [0, 0, 1, 1], [], []>} : vector<48x128xbf16>, vector<128x384xbf16>, vector<48x384xf32> -> vector<48x384xf32>
    %c0_16 = arith.constant 0 : index
    %c0_17 = arith.constant 0 : index
    %c0_18 = arith.constant 0 : index
    %34 = vector.load %arg7[%c0_16, %c0_17, %c0_18] : memref<1x1x384xf32, #tpu.memory_space<vmem>>, vector<1x1x384xf32>
    %35 = vector.shape_cast %34 : vector<1x1x384xf32> to vector<1x384xf32>
    %36 = vector.broadcast %35 : vector<1x384xf32> to vector<48x384xf32>
    %37 = arith.addf %33, %36 : vector<48x384xf32>
    %38 = vector.extract_strided_slice %37 {offsets = [0, 0], sizes = [48, 128], strides = [1, 1]} : vector<48x384xf32> to vector<48x128xf32>
    %39 = vector.shape_cast %38 : vector<48x128xf32> to vector<2x24x128xf32>
    %40 = vector.extract_strided_slice %37 {offsets = [0, 128], sizes = [48, 128], strides = [1, 1]} : vector<48x384xf32> to vector<48x128xf32>
    %41 = vector.shape_cast %40 : vector<48x128xf32> to vector<2x24x128xf32>
    %42 = vector.extract_strided_slice %37 {offsets = [0, 256], sizes = [48, 128], strides = [1, 1]} : vector<48x384xf32> to vector<48x128xf32>
    %43 = vector.shape_cast %42 : vector<48x128xf32> to vector<2x24x128xf32>
    %44 = tpu.iota {dimensions = array<i32: 2>} : vector<1x24x24xi32>
    %c17_i32 = arith.constant 17 : i32
    %45 = vector.broadcast %c17_i32 : i32 to vector<1x24x24xi32>
    %46 = arith.cmpi slt, %44, %45 : vector<1x24x24xi32>
    %c0_19 = arith.constant 0 : index
    %c0_20 = arith.constant 0 : index
    %c0_21 = arith.constant 0 : index
    %47 = vector.load %arg8[%c0_19, %c0_20, %c0_21] : memref<1x128x128xbf16, #tpu.memory_space<vmem>>, vector<1x128x128xbf16>
    %48 = vector.shape_cast %47 : vector<1x128x128xbf16> to vector<128x128xbf16>
    %cst_22 = arith.constant 0.000000e+00 : f32
    %49 = vector.broadcast %cst_22 : f32 to vector<48x128xf32>
    %50 = vector.extract_strided_slice %39 {offsets = [0, 0, 0], sizes = [2, 24, 64], strides = [1, 1, 1]} : vector<2x24x128xf32> to vector<2x24x64xf32>
    %51 = arith.truncf %50 : vector<2x24x64xf32> to vector<2x24x64xbf16>
    %52 = vector.extract_strided_slice %41 {offsets = [0, 0, 0], sizes = [2, 24, 64], strides = [1, 1, 1]} : vector<2x24x128xf32> to vector<2x24x64xf32>
    %53 = arith.truncf %52 : vector<2x24x64xf32> to vector<2x24x64xbf16>
    %54 = vector.extract_strided_slice %43 {offsets = [0, 0, 0], sizes = [2, 24, 64], strides = [1, 1, 1]} : vector<2x24x128xf32> to vector<2x24x64xf32>
    %55 = arith.truncf %54 : vector<2x24x64xf32> to vector<2x24x64xbf16>
    "tpu.trace_start"() <{level = 10 : i32, message = "bqd,bkd->bqk"}> : () -> ()
    %cst_23 = arith.constant dense<0.000000e+00> : vector<2x24x24xf32>
    %56 = tpu.matmul %51, %53, %cst_23 {dimension_numbers = #tpu.dot_dimension_numbers<[2], [2], [1], [1], [0, 0, 0, 1, 1, 1], [0], [0]>} : vector<2x24x64xbf16>, vector<2x24x64xbf16>, vector<2x24x24xf32> -> vector<2x24x24xf32>
    %cst_24 = arith.constant -1.000000e+30 : f32
    "tpu.trace_stop"() : () -> ()
    %57 = vector.shape_cast %46 : vector<1x24x24xi1> to vector<1x24x24xi1>
    %58 = vector.broadcast %57 : vector<1x24x24xi1> to vector<2x24x24xi1>
    %59 = vector.broadcast %cst_24 : f32 to vector<2x24x24xf32>
    %60 = arith.select %58, %56, %59 : vector<2x24x24xi1>, vector<2x24x24xf32>
    %cst_25 = arith.constant dense<0xFF800000> : vector<2x24xf32>
    %61 = vector.multi_reduction <maximumf>, %60, %cst_25 [2] : vector<2x24x24xf32> to vector<2x24xf32>
    %62 = vector.shape_cast %61 : vector<2x24xf32> to vector<2x24x1xf32>
    %63 = vector.broadcast %62 : vector<2x24x1xf32> to vector<2x24x24xf32>
    %64 = arith.subf %60, %63 : vector<2x24x24xf32>
    %65 = math.exp %64 : vector<2x24x24xf32>
    %cst_26 = arith.constant dense<0.000000e+00> : vector<2x24xf32>
    %66 = vector.multi_reduction <add>, %65, %cst_26 [2] : vector<2x24x24xf32> to vector<2x24xf32>
    %67 = vector.shape_cast %66 : vector<2x24xf32> to vector<2x24x1xf32>
    %68 = tpu.reciprocal %67 {approx = true} : vector<2x24x1xf32> -> vector<2x24x1xf32>
    %69 = vector.broadcast %68 : vector<2x24x1xf32> to vector<2x24x24xf32>
    %70 = arith.mulf %65, %69 : vector<2x24x24xf32>
    %71 = arith.truncf %70 : vector<2x24x24xf32> to vector<2x24x24xbf16>
    "tpu.trace_start"() <{level = 10 : i32, message = "bqk,bkd->bqd"}> : () -> ()
    %cst_27 = arith.constant dense<0.000000e+00> : vector<2x24x64xf32>
    %72 = tpu.matmul %71, %55, %cst_27 {dimension_numbers = #tpu.dot_dimension_numbers<[2], [1], [1], [2], [0, 0, 0, 1, 1, 2], [0], [0]>} : vector<2x24x24xbf16>, vector<2x24x64xbf16>, vector<2x24x64xf32> -> vector<2x24x64xf32>
    "tpu.trace_stop"() : () -> ()
    %73 = vector.shape_cast %72 : vector<2x24x64xf32> to vector<48x64xf32>
    %74 = arith.truncf %73 : vector<48x64xf32> to vector<48x64xbf16>
    %75 = vector.extract_strided_slice %48 {offsets = [0, 0], sizes = [64, 128], strides = [1, 1]} : vector<128x128xbf16> to vector<64x128xbf16>
    %cst_28 = arith.constant dense<0.000000e+00> : vector<48x128xf32>
    %76 = tpu.matmul %74, %75, %cst_28 {dimension_numbers = #tpu.dot_dimension_numbers<[1], [0], [0], [1], [0, 0, 1, 1], [], []>} : vector<48x64xbf16>, vector<64x128xbf16>, vector<48x128xf32> -> vector<48x128xf32>
    %77 = arith.addf %49, %76 : vector<48x128xf32>
    %78 = vector.extract_strided_slice %39 {offsets = [0, 0, 64], sizes = [2, 24, 64], strides = [1, 1, 1]} : vector<2x24x128xf32> to vector<2x24x64xf32>
    %79 = arith.truncf %78 : vector<2x24x64xf32> to vector<2x24x64xbf16>
    %80 = vector.extract_strided_slice %41 {offsets = [0, 0, 64], sizes = [2, 24, 64], strides = [1, 1, 1]} : vector<2x24x128xf32> to vector<2x24x64xf32>
    %81 = arith.truncf %80 : vector<2x24x64xf32> to vector<2x24x64xbf16>
    %82 = vector.extract_strided_slice %43 {offsets = [0, 0, 64], sizes = [2, 24, 64], strides = [1, 1, 1]} : vector<2x24x128xf32> to vector<2x24x64xf32>
    %83 = arith.truncf %82 : vector<2x24x64xf32> to vector<2x24x64xbf16>
    "tpu.trace_start"() <{level = 10 : i32, message = "bqd,bkd->bqk"}> : () -> ()
    %cst_29 = arith.constant dense<0.000000e+00> : vector<2x24x24xf32>
    %84 = tpu.matmul %79, %81, %cst_29 {dimension_numbers = #tpu.dot_dimension_numbers<[2], [2], [1], [1], [0, 0, 0, 1, 1, 1], [0], [0]>} : vector<2x24x64xbf16>, vector<2x24x64xbf16>, vector<2x24x24xf32> -> vector<2x24x24xf32>
    %cst_30 = arith.constant -1.000000e+30 : f32
    "tpu.trace_stop"() : () -> ()
    %85 = vector.shape_cast %46 : vector<1x24x24xi1> to vector<1x24x24xi1>
    %86 = vector.broadcast %85 : vector<1x24x24xi1> to vector<2x24x24xi1>
    %87 = vector.broadcast %cst_30 : f32 to vector<2x24x24xf32>
    %88 = arith.select %86, %84, %87 : vector<2x24x24xi1>, vector<2x24x24xf32>
    %cst_31 = arith.constant dense<0xFF800000> : vector<2x24xf32>
    %89 = vector.multi_reduction <maximumf>, %88, %cst_31 [2] : vector<2x24x24xf32> to vector<2x24xf32>
    %90 = vector.shape_cast %89 : vector<2x24xf32> to vector<2x24x1xf32>
    %91 = vector.broadcast %90 : vector<2x24x1xf32> to vector<2x24x24xf32>
    %92 = arith.subf %88, %91 : vector<2x24x24xf32>
    %93 = math.exp %92 : vector<2x24x24xf32>
    %cst_32 = arith.constant dense<0.000000e+00> : vector<2x24xf32>
    %94 = vector.multi_reduction <add>, %93, %cst_32 [2] : vector<2x24x24xf32> to vector<2x24xf32>
    %95 = vector.shape_cast %94 : vector<2x24xf32> to vector<2x24x1xf32>
    %96 = tpu.reciprocal %95 {approx = true} : vector<2x24x1xf32> -> vector<2x24x1xf32>
    %97 = vector.broadcast %96 : vector<2x24x1xf32> to vector<2x24x24xf32>
    %98 = arith.mulf %93, %97 : vector<2x24x24xf32>
    %99 = arith.truncf %98 : vector<2x24x24xf32> to vector<2x24x24xbf16>
    "tpu.trace_start"() <{level = 10 : i32, message = "bqk,bkd->bqd"}> : () -> ()
    %cst_33 = arith.constant dense<0.000000e+00> : vector<2x24x64xf32>
    %100 = tpu.matmul %99, %83, %cst_33 {dimension_numbers = #tpu.dot_dimension_numbers<[2], [1], [1], [2], [0, 0, 0, 1, 1, 2], [0], [0]>} : vector<2x24x24xbf16>, vector<2x24x64xbf16>, vector<2x24x64xf32> -> vector<2x24x64xf32>
    "tpu.trace_stop"() : () -> ()
    %101 = vector.shape_cast %100 : vector<2x24x64xf32> to vector<48x64xf32>
    %102 = arith.truncf %101 : vector<48x64xf32> to vector<48x64xbf16>
    %103 = vector.extract_strided_slice %48 {offsets = [64, 0], sizes = [64, 128], strides = [1, 1]} : vector<128x128xbf16> to vector<64x128xbf16>
    %cst_34 = arith.constant dense<0.000000e+00> : vector<48x128xf32>
    %104 = tpu.matmul %102, %103, %cst_34 {dimension_numbers = #tpu.dot_dimension_numbers<[1], [0], [0], [1], [0, 0, 1, 1], [], []>} : vector<48x64xbf16>, vector<64x128xbf16>, vector<48x128xf32> -> vector<48x128xf32>
    %105 = arith.addf %77, %104 : vector<48x128xf32>
    %106 = arith.addf %3, %105 : vector<48x128xf32>
    %c0_35 = arith.constant 0 : index
    %c0_36 = arith.constant 0 : index
    %c0_37 = arith.constant 0 : index
    %107 = vector.load %arg9[%c0_35, %c0_36, %c0_37] : memref<1x1x128xf32, #tpu.memory_space<vmem>>, vector<1x1x128xf32>
    %108 = vector.shape_cast %107 : vector<1x1x128xf32> to vector<1x128xf32>
    %109 = vector.broadcast %108 : vector<1x128xf32> to vector<48x128xf32>
    %110 = arith.addf %106, %109 : vector<48x128xf32>
    %c0_38 = arith.constant 0 : index
    %c0_39 = arith.constant 0 : index
    %c0_40 = arith.constant 0 : index
    %111 = vector.load %arg10[%c0_38, %c0_39, %c0_40] : memref<1x1x128xf32, #tpu.memory_space<vmem>>, vector<1x1x128xf32>
    %112 = vector.shape_cast %111 : vector<1x1x128xf32> to vector<1x128xf32>
    %c0_41 = arith.constant 0 : index
    %c0_42 = arith.constant 0 : index
    %c0_43 = arith.constant 0 : index
    %113 = vector.load %arg11[%c0_41, %c0_42, %c0_43] : memref<1x1x128xf32, #tpu.memory_space<vmem>>, vector<1x1x128xf32>
    %114 = vector.shape_cast %113 : vector<1x1x128xf32> to vector<1x128xf32>
    %cst_44 = arith.constant dense<0.000000e+00> : vector<48xf32>
    %115 = vector.multi_reduction <add>, %110, %cst_44 [1] : vector<48x128xf32> to vector<48xf32>
    %116 = vector.shape_cast %115 : vector<48xf32> to vector<48x1xf32>
    %cst_45 = arith.constant 1.280000e+02 : f32
    %117 = vector.broadcast %cst_45 : f32 to vector<48x1xf32>
    %118 = arith.divf %116, %117 : vector<48x1xf32>
    %119 = vector.broadcast %118 : vector<48x1xf32> to vector<48x128xf32>
    %120 = arith.subf %110, %119 : vector<48x128xf32>
    %121 = arith.mulf %120, %120 : vector<48x128xf32>
    %cst_46 = arith.constant dense<0.000000e+00> : vector<48xf32>
    %122 = vector.multi_reduction <add>, %121, %cst_46 [1] : vector<48x128xf32> to vector<48xf32>
    %123 = vector.shape_cast %122 : vector<48xf32> to vector<48x1xf32>
    %cst_47 = arith.constant 1.280000e+02 : f32
    %124 = vector.broadcast %cst_47 : f32 to vector<48x1xf32>
    %125 = arith.divf %123, %124 : vector<48x1xf32>
    %126 = vector.broadcast %118 : vector<48x1xf32> to vector<48x128xf32>
    %127 = arith.subf %110, %126 : vector<48x128xf32>
    %cst_48 = arith.constant 9.99999997E-7 : f32
    %128 = vector.broadcast %cst_48 : f32 to vector<48x1xf32>
    %129 = arith.addf %125, %128 : vector<48x1xf32>
    %130 = math.rsqrt %129 : vector<48x1xf32>
    %131 = vector.broadcast %130 : vector<48x1xf32> to vector<48x128xf32>
    %132 = arith.mulf %127, %131 : vector<48x128xf32>
    %133 = vector.broadcast %112 : vector<1x128xf32> to vector<48x128xf32>
    %134 = arith.mulf %132, %133 : vector<48x128xf32>
    %135 = vector.broadcast %114 : vector<1x128xf32> to vector<48x128xf32>
    %136 = arith.addf %134, %135 : vector<48x128xf32>
    %137 = arith.truncf %136 : vector<48x128xf32> to vector<48x128xbf16>
    %c0_49 = arith.constant 0 : index
    %c0_50 = arith.constant 0 : index
    %c0_51 = arith.constant 0 : index
    %138 = vector.load %arg12[%c0_49, %c0_50, %c0_51] : memref<1x128x512xbf16, #tpu.memory_space<vmem>>, vector<1x128x512xbf16>
    %139 = vector.shape_cast %138 : vector<1x128x512xbf16> to vector<128x512xbf16>
    %cst_52 = arith.constant dense<0.000000e+00> : vector<48x512xf32>
    %140 = tpu.matmul %137, %139, %cst_52 {dimension_numbers = #tpu.dot_dimension_numbers<[1], [0], [0], [1], [0, 0, 1, 1], [], []>} : vector<48x128xbf16>, vector<128x512xbf16>, vector<48x512xf32> -> vector<48x512xf32>
    %c0_53 = arith.constant 0 : index
    %c0_54 = arith.constant 0 : index
    %c0_55 = arith.constant 0 : index
    %141 = vector.load %arg13[%c0_53, %c0_54, %c0_55] : memref<1x1x512xf32, #tpu.memory_space<vmem>>, vector<1x1x512xf32>
    %142 = vector.shape_cast %141 : vector<1x1x512xf32> to vector<1x512xf32>
    %143 = vector.broadcast %142 : vector<1x512xf32> to vector<48x512xf32>
    %144 = arith.addf %140, %143 : vector<48x512xf32>
    %cst_56 = arith.constant 5.000000e-01 : f32
    %145 = vector.broadcast %cst_56 : f32 to vector<48x512xf32>
    %146 = arith.mulf %145, %144 : vector<48x512xf32>
    %cst_57 = arith.constant 4.471500e-02 : f32
    %147 = vector.broadcast %cst_57 : f32 to vector<48x512xf32>
    %148 = arith.mulf %147, %144 : vector<48x512xf32>
    %149 = arith.mulf %148, %144 : vector<48x512xf32>
    %150 = arith.mulf %149, %144 : vector<48x512xf32>
    %151 = arith.addf %144, %150 : vector<48x512xf32>
    %cst_58 = arith.constant 0.797884583 : f32
    %152 = vector.broadcast %cst_58 : f32 to vector<48x512xf32>
    %153 = arith.mulf %152, %151 : vector<48x512xf32>
    %154 = math.tanh %153 : vector<48x512xf32>
    %cst_59 = arith.constant 1.000000e+00 : f32
    %155 = vector.broadcast %cst_59 : f32 to vector<48x512xf32>
    %156 = arith.addf %155, %154 : vector<48x512xf32>
    %157 = arith.mulf %146, %156 : vector<48x512xf32>
    %158 = arith.truncf %157 : vector<48x512xf32> to vector<48x512xbf16>
    %c0_60 = arith.constant 0 : index
    %c0_61 = arith.constant 0 : index
    %c0_62 = arith.constant 0 : index
    %159 = vector.load %arg14[%c0_60, %c0_61, %c0_62] : memref<1x512x128xbf16, #tpu.memory_space<vmem>>, vector<1x512x128xbf16>
    %160 = vector.shape_cast %159 : vector<1x512x128xbf16> to vector<512x128xbf16>
    %cst_63 = arith.constant dense<0.000000e+00> : vector<48x128xf32>
    %161 = tpu.matmul %158, %160, %cst_63 {dimension_numbers = #tpu.dot_dimension_numbers<[1], [0], [0], [1], [0, 0, 1, 1], [], []>} : vector<48x512xbf16>, vector<512x128xbf16>, vector<48x128xf32> -> vector<48x128xf32>
    %c0_64 = arith.constant 0 : index
    %c0_65 = arith.constant 0 : index
    %c0_66 = arith.constant 0 : index
    %162 = vector.load %arg15[%c0_64, %c0_65, %c0_66] : memref<1x1x128xf32, #tpu.memory_space<vmem>>, vector<1x1x128xf32>
    %163 = vector.shape_cast %162 : vector<1x1x128xf32> to vector<1x128xf32>
    %164 = vector.broadcast %163 : vector<1x128xf32> to vector<48x128xf32>
    %165 = arith.addf %161, %164 : vector<48x128xf32>
    %166 = arith.addf %110, %165 : vector<48x128xf32>
    %c0_67 = arith.constant 0 : index
    %c0_68 = arith.constant 0 : index
    %167 = vector.load %arg17[%c0_67, %c0_68] : memref<48x128xf32, #tpu.memory_space<vmem>>, vector<48x128xf32>
    tpu.vector_store %arg17[%c0_67, %c0_68], %166 {strides = array<i32>} : memref<48x128xf32, #tpu.memory_space<vmem>>, vector<48x128xf32>,
    %c2_i32 = arith.constant 2 : i32
    %168 = arith.cmpi eq, %arg0, %c2_i32 : i32
    %169 = arith.extui %168 : i1 to i32
    %c0_i32_69 = arith.constant 0 : i32
    %170 = arith.cmpi ne, %169, %c0_i32_69 : i32
    scf.if %170 {
      %c0_73 = arith.constant 0 : index
      %c0_74 = arith.constant 0 : index
      %c0_75 = arith.constant 0 : index
      %180 = vector.load %arg16[%c0_73, %c0_74, %c0_75] : memref<4x48x128xf32, #tpu.memory_space<vmem>>, vector<1x48x128xf32>
      %181 = vector.shape_cast %180 : vector<1x48x128xf32> to vector<48x128xf32>
      %182 = vector.shape_cast %166 : vector<48x128xf32> to vector<1x48x128xf32>
      tpu.vector_store %arg16[%c0_73, %c0_74, %c0_75], %182 {strides = array<i32>} : memref<4x48x128xf32, #tpu.memory_space<vmem>>, vector<1x48x128xf32>,
    } else {
    }
    %c5_i32 = arith.constant 5 : i32
    %171 = arith.cmpi eq, %arg0, %c5_i32 : i32
    %172 = arith.extui %171 : i1 to i32
    %c0_i32_70 = arith.constant 0 : i32
    %173 = arith.cmpi ne, %172, %c0_i32_70 : i32
    scf.if %173 {
      %c1 = arith.constant 1 : index
      %c0_73 = arith.constant 0 : index
      %c0_74 = arith.constant 0 : index
      %180 = vector.load %arg16[%c1, %c0_73, %c0_74] : memref<4x48x128xf32, #tpu.memory_space<vmem>>, vector<1x48x128xf32>
      %181 = vector.shape_cast %180 : vector<1x48x128xf32> to vector<48x128xf32>
      %182 = vector.shape_cast %166 : vector<48x128xf32> to vector<1x48x128xf32>
      tpu.vector_store %arg16[%c1, %c0_73, %c0_74], %182 {strides = array<i32>} : memref<4x48x128xf32, #tpu.memory_space<vmem>>, vector<1x48x128xf32>,
    } else {
    }
    %c8_i32 = arith.constant 8 : i32
    %174 = arith.cmpi eq, %arg0, %c8_i32 : i32
    %175 = arith.extui %174 : i1 to i32
    %c0_i32_71 = arith.constant 0 : i32
    %176 = arith.cmpi ne, %175, %c0_i32_71 : i32
    scf.if %176 {
      %c2 = arith.constant 2 : index
      %c0_73 = arith.constant 0 : index
      %c0_74 = arith.constant 0 : index
      %180 = vector.load %arg16[%c2, %c0_73, %c0_74] : memref<4x48x128xf32, #tpu.memory_space<vmem>>, vector<1x48x128xf32>
      %181 = vector.shape_cast %180 : vector<1x48x128xf32> to vector<48x128xf32>
      %182 = vector.shape_cast %166 : vector<48x128xf32> to vector<1x48x128xf32>
      tpu.vector_store %arg16[%c2, %c0_73, %c0_74], %182 {strides = array<i32>} : memref<4x48x128xf32, #tpu.memory_space<vmem>>, vector<1x48x128xf32>,
    } else {
    }
    %c11_i32 = arith.constant 11 : i32
    %177 = arith.cmpi eq, %arg0, %c11_i32 : i32
    %178 = arith.extui %177 : i1 to i32
    %c0_i32_72 = arith.constant 0 : i32
    %179 = arith.cmpi ne, %178, %c0_i32_72 : i32
    scf.if %179 {
      %c3 = arith.constant 3 : index
      %c0_73 = arith.constant 0 : index
      %c0_74 = arith.constant 0 : index
      %180 = vector.load %arg16[%c3, %c0_73, %c0_74] : memref<4x48x128xf32, #tpu.memory_space<vmem>>, vector<1x48x128xf32>
      %181 = vector.shape_cast %180 : vector<1x48x128xf32> to vector<48x128xf32>
      %182 = vector.shape_cast %166 : vector<48x128xf32> to vector<1x48x128xf32>
      tpu.vector_store %arg16[%c3, %c0_73, %c0_74], %182 {strides = array<i32>} : memref<4x48x128xf32, #tpu.memory_space<vmem>>, vector<1x48x128xf32>,
    } else {
    }
    return
  }
  func.func @transform_0(%arg0: i32) -> (i32, i32) {
    %c0_i32 = arith.constant 0 : i32
    %c0_i32_0 = arith.constant 0 : i32
    %c0_i32_1 = arith.constant 0 : i32
    return %c0_i32, %c0_i32_0 : i32, i32
  }
  func.func @transform_1(%arg0: i32) -> (i32, i32) {
    %c0_i32 = arith.constant 0 : i32
    %c0_i32_0 = arith.constant 0 : i32
    %c0_i32_1 = arith.constant 0 : i32
    return %c0_i32, %c0_i32_0 : i32, i32
  }
  func.func @transform_2(%arg0: i32) -> (i32, i32) {
    %c0_i32 = arith.constant 0 : i32
    %c0_i32_0 = arith.constant 0 : i32
    %c0_i32_1 = arith.constant 0 : i32
    return %c0_i32, %c0_i32_0 : i32, i32
  }
  func.func @transform_3(%arg0: i32) -> (i32, i32, i32) {
    %c0_i32 = arith.constant 0 : i32
    %c0_i32_0 = arith.constant 0 : i32
    %c0_i32_1 = arith.constant 0 : i32
    return %arg0, %c0_i32, %c0_i32_0 : i32, i32, i32
  }
  func.func @transform_4(%arg0: i32) -> (i32, i32, i32) {
    %c0_i32 = arith.constant 0 : i32
    %c0_i32_0 = arith.constant 0 : i32
    %c0_i32_1 = arith.constant 0 : i32
    return %arg0, %c0_i32, %c0_i32_0 : i32, i32, i32
  }
  func.func @transform_5(%arg0: i32) -> (i32, i32, i32) {
    %c0_i32 = arith.constant 0 : i32
    %c0_i32_0 = arith.constant 0 : i32
    %c0_i32_1 = arith.constant 0 : i32
    return %arg0, %c0_i32, %c0_i32_0 : i32, i32, i32
  }
  func.func @transform_6(%arg0: i32) -> (i32, i32, i32) {
    %c0_i32 = arith.constant 0 : i32
    %c0_i32_0 = arith.constant 0 : i32
    %c0_i32_1 = arith.constant 0 : i32
    return %arg0, %c0_i32, %c0_i32_0 : i32, i32, i32
  }
  func.func @transform_7(%arg0: i32) -> (i32, i32, i32) {
    %c0_i32 = arith.constant 0 : i32
    %c0_i32_0 = arith.constant 0 : i32
    %c0_i32_1 = arith.constant 0 : i32
    return %arg0, %c0_i32, %c0_i32_0 : i32, i32, i32
  }
  func.func @transform_8(%arg0: i32) -> (i32, i32, i32) {
    %c0_i32 = arith.constant 0 : i32
    %c0_i32_0 = arith.constant 0 : i32
    %c0_i32_1 = arith.constant 0 : i32
    return %arg0, %c0_i32, %c0_i32_0 : i32, i32, i32
  }
  func.func @transform_9(%arg0: i32) -> (i32, i32, i32) {
    %c0_i32 = arith.constant 0 : i32
    %c0_i32_0 = arith.constant 0 : i32
    %c0_i32_1 = arith.constant 0 : i32
    return %arg0, %c0_i32, %c0_i32_0 : i32, i32, i32
  }
  func.func @transform_10(%arg0: i32) -> (i32, i32, i32) {
    %c0_i32 = arith.constant 0 : i32
    %c0_i32_0 = arith.constant 0 : i32
    %c0_i32_1 = arith.constant 0 : i32
    return %arg0, %c0_i32, %c0_i32_0 : i32, i32, i32
  }
  func.func @transform_11(%arg0: i32) -> (i32, i32, i32) {
    %c0_i32 = arith.constant 0 : i32
    %c0_i32_0 = arith.constant 0 : i32
    %c0_i32_1 = arith.constant 0 : i32
    return %arg0, %c0_i32, %c0_i32_0 : i32, i32, i32
  }
  func.func @transform_12(%arg0: i32) -> (i32, i32, i32) {
    %c0_i32 = arith.constant 0 : i32
    %c0_i32_0 = arith.constant 0 : i32
    %c0_i32_1 = arith.constant 0 : i32
    return %arg0, %c0_i32, %c0_i32_0 : i32, i32, i32
  }
  func.func @transform_13(%arg0: i32) -> (i32, i32, i32) {
    %c0_i32 = arith.constant 0 : i32
    %c0_i32_0 = arith.constant 0 : i32
    %c0_i32_1 = arith.constant 0 : i32
    return %arg0, %c0_i32, %c0_i32_0 : i32, i32, i32
  }
  func.func @transform_14(%arg0: i32) -> (i32, i32, i32) {
    %c0_i32 = arith.constant 0 : i32
    %c0_i32_0 = arith.constant 0 : i32
    %c0_i32_1 = arith.constant 0 : i32
    return %arg0, %c0_i32, %c0_i32_0 : i32, i32, i32
  }
  func.func @transform_15(%arg0: i32) -> (i32, i32, i32) {
    %c0_i32 = arith.constant 0 : i32
    %c0_i32_0 = arith.constant 0 : i32
    %c0_i32_1 = arith.constant 0 : i32
    %c0_i32_2 = arith.constant 0 : i32
    return %c0_i32, %c0_i32_0, %c0_i32_1 : i32, i32, i32
  }
}

</mosaic_0001>

<llo_original>
// kernel: encoder_forward.1
$region0: #{encoder_forward.1}
  #allocation0 [shape = 'u32[]', space=smem, size = 0x4, offset = 0x4, fixed_abs, tag = 'smem constant byte address 0x4 - core index']
  #allocation1 [shape = 'u32[144,128]{1,0:T(1,128)}', space=vmem, size = 0x12000, scoped, tag = 'internal scratch']
  #allocation2 [shape = 'f32[48,128]{1,0:T(8,128)}', space=vmem, size = 0x6000, scoped, tag = 'scratch operand']
  %s0 = inlined_call_operand.vmem [shape: f32[48,768], index: 0, kind: input, shape index: {}]
  %s1 = inlined_call_operand.vmem [shape: bf16[768,128], index: 1, kind: input, shape index: {}]
  %s2 = inlined_call_operand.vmem [shape: f32[48,128], index: 2, kind: input, shape index: {}]
  %s3 = inlined_call_operand.vmem [shape: f32[12,1,128], index: 3, kind: input, shape index: {}]
  %s4 = inlined_call_operand.vmem [shape: f32[12,1,128], index: 4, kind: input, shape index: {}]
  %s5 = inlined_call_operand.hbm [shape: bf16[12,128,384], index: 5, kind: input, shape index: {}]
  %s6 = inlined_call_operand.vmem [shape: f32[12,1,384], index: 6, kind: input, shape index: {}]
  %s7 = inlined_call_operand.vmem [shape: bf16[12,128,128], index: 7, kind: input, shape index: {}]
  %s8 = inlined_call_operand.vmem [shape: f32[12,1,128], index: 8, kind: input, shape index: {}]
  %s9 = inlined_call_operand.hbm [shape: f32[12,1,128], index: 9, kind: input, shape index: {}]
  %s10 = inlined_call_operand.hbm [shape: f32[12,1,128], index: 10, kind: input, shape index: {}]
  %s11 = inlined_call_operand.vmem [shape: bf16[12,128,512], index: 11, kind: input, shape index: {}]
  %s12 = inlined_call_operand.vmem [shape: f32[12,1,512], index: 12, kind: input, shape index: {}]
  %s13 = inlined_call_operand.vmem [shape: bf16[12,512,128], index: 13, kind: input, shape index: {}]
  %s14 = inlined_call_operand.hbm [shape: f32[12,1,128], index: 14, kind: input, shape index: {}]
  %s15 = inlined_call_operand.vmem [shape: f32[4,48,128], index: 15, kind: output, shape index: {}]
  %s16 = sld [smem:[#allocation0]]
  $region129: #{encoder_forward.1} parent=0
    _
  %s18 = ssub.s32 1, %s16
  %s19 = scalar_select 0, %s18, %s16
  $region1: #{encoder_forward.1} parent=0
    #allocation3 [shape = 'u8[196608]{0}', space=vmem, size = 0x30000, scoped, tag = 'input window, operand 5']
    #allocation4 [shape = 's32[2]{0}', space=sflag, size = 0x8, scoped, tag = 'scoped memory for encoder_forward.1']
    #allocation5 [shape = 'u8[1024]{0}', space=vmem, size = 0x400, scoped, tag = 'input window, operand 9']
    #allocation6 [shape = 's32[2]{0}', space=sflag, size = 0x8, scoped, tag = 'scoped memory for encoder_forward.1']
    #allocation7 [shape = 'u8[1024]{0}', space=vmem, size = 0x400, scoped, tag = 'input window, operand 10']
    #allocation8 [shape = 'u8[1024]{0}', space=vmem, size = 0x400, scoped, tag = 'input window, operand 14']
    #allocation9 [shape = 's32[2]{0}', space=sflag, size = 0x8, scoped, tag = 'scoped memory for encoder_forward.1']
    %20 = vsyncpa [#allocation4], 0
    %s21 = scalar_lea.sflag [#allocation4], 1
    %22 = vsyncpa %s21, 0
    %23 = vsyncpa [#allocation6], 0
    %s24 = scalar_lea.sflag [#allocation6], 1
    %25 = vsyncpa %s24, 0
    %26 = vsyncpa [#allocation9], 0
    %s27 = scalar_lea.sflag [#allocation9], 1
    %28 = vsyncpa %s27, 0
    loop: start=0, step=1, limit=14
    $region2: #{encoder_forward.1} parent=1 // loop_pre_header
      _
    $region3: #{encoder_forward.1} parent=1 // loop_header
      %s30 = sphi 0, %s34
      %p31 = scmp.ge.s32.totalorder %s30, 14
      %s38 = sphi 0, %s38
      %s40 = sphi 0, %s38
      %s41 = sphi 0, %s40
      %s55 = sphi 0, %s41
      %s59 = sphi 0, %s59
      %s61 = sphi 0, %s59
      %s62 = sphi 0, %s61
      %s76 = sphi 0, %s62
      %s80 = sphi 0, %s80
      %s82 = sphi 0, %s80
      %s83 = sphi 0, %s82
      %s97 = sphi 0, %s83
      %s103 = sphi 0, %s105
      %s106 = sphi 0, %s103
      %s107 = sphi 0, %s106
      %s123 = sphi 0, %s107
      %s129 = sphi 0, %s131
      %s132 = sphi 0, %s129
      %s133 = sphi 0, %s132
      %s149 = sphi 0, %s133
      %s155 = sphi 0, %s157
      %s158 = sphi 0, %s155
      %s159 = sphi 0, %s158
      %s175 = sphi 0, %s159
      %s181 = sphi 0, %s183
      %s184 = sphi 0, %s181
      %s185 = sphi 0, %s184
      %s201 = sphi 0, %s185
      %s207 = sphi 0, %s209
      %s210 = sphi 0, %s207
      %s211 = sphi 0, %s210
      %s227 = sphi 0, %s211
      %s233 = sphi 0, %s235
      %s236 = sphi 0, %s233
      %s237 = sphi 0, %s236
      %s253 = sphi 0, %s237
      %s259 = sphi 0, %s261
      %s262 = sphi 0, %s259
      %s263 = sphi 0, %s262
      %s279 = sphi 0, %s263
      %s285 = sphi 0, %s287
      %s288 = sphi 0, %s285
      %s289 = sphi 0, %s288
      %s305 = sphi 0, %s289
      %s311 = sphi 0, %s313
      %s314 = sphi 0, %s311
      %s315 = sphi 0, %s314
      %s331 = sphi 0, %s315
      %s337 = sphi 0, %s339
      %s340 = sphi 0, %s337
      %s341 = sphi 0, %s340
      %s357 = sphi 0, %s341
      %s363 = sphi 0, %s365
      %s366 = sphi 0, %s363
      %s367 = sphi 0, %s366
      %s383 = sphi 0, %s367
      %s389 = sphi 0, %s391
      %s392 = sphi 0, %s389
      %s393 = sphi 0, %s392
      %s409 = sphi 0, %s393
      %s413 = sphi 0, %s413
      %s415 = sphi 0, %s413
      %s416 = sphi 0, %s415
      %s430 = sphi 0, %s416
    $region4: #{encoder_forward.1} parent=1 // loop_header_branch
      %33 = sbr.rel (%p31) target = $region8
    $region5: #{encoder_forward.1} parent=1 // loop_body
      %s35 = ssub.s32 %s30, 1
      %s36 = ssub.s32 %s30, 2
      %s37 = sadd.s32 %s30, 1
      %s39 = sadd.s32 %s38, 1
      %p42 = scmp.eq.s32.totalorder %s30, 11
      %p43 = scmp.ne.s32.totalorder %s38, %s40
      %p44 = scmp.eq.s32.totalorder %s30, 0
      %p45 = por %p43, %p44
      %p46 = scmp.ne.s32.totalorder %s38, %s40
      %p47 = scmp.eq.s32.totalorder %s35, 11
      %p48 = por %p46, %p47
      %p49 = scmp.ne.s32.totalorder %s40, %s41
      %p50 = scmp.eq.s32.totalorder %s35, 0
      %p51 = por %p49, %p50
      %p52 = scmp.ne.s32.totalorder %s40, %s41
      %p53 = scmp.eq.s32.totalorder %s36, 11
      %p54 = por %p52, %p53
      %p56 = scmp.ne.s32.totalorder %s41, %s55
      %p57 = scmp.eq.s32.totalorder %s36, 0
      %p58 = por %p56, %p57
      %s60 = sadd.s32 %s59, 1
      %p63 = scmp.eq.s32.totalorder %s30, 11
      %p64 = scmp.ne.s32.totalorder %s59, %s61
      %p65 = scmp.eq.s32.totalorder %s30, 0
      %p66 = por %p64, %p65
      %p67 = scmp.ne.s32.totalorder %s59, %s61
      %p68 = scmp.eq.s32.totalorder %s35, 11
      %p69 = por %p67, %p68
      %p70 = scmp.ne.s32.totalorder %s61, %s62
      %p71 = scmp.eq.s32.totalorder %s35, 0
      %p72 = por %p70, %p71
      %p73 = scmp.ne.s32.totalorder %s61, %s62
      %p74 = scmp.eq.s32.totalorder %s36, 11
      %p75 = por %p73, %p74
      %p77 = scmp.ne.s32.totalorder %s62, %s76
      %p78 = scmp.eq.s32.totalorder %s36, 0
      %p79 = por %p77, %p78
      %s81 = sadd.s32 %s80, 1
      %p84 = scmp.eq.s32.totalorder %s30, 11
      %p85 = scmp.ne.s32.totalorder %s80, %s82
      %p86 = scmp.eq.s32.totalorder %s30, 0
      %p87 = por %p85, %p86
      %p88 = scmp.ne.s32.totalorder %s80, %s82
      %p89 = scmp.eq.s32.totalorder %s35, 11
      %p90 = por %p88, %p89
      %p91 = scmp.ne.s32.totalorder %s82, %s83
      %p92 = scmp.eq.s32.totalorder %s35, 0
      %p93 = por %p91, %p92
      %p94 = scmp.ne.s32.totalorder %s82, %s83
      %p95 = scmp.eq.s32.totalorder %s36, 11
      %p96 = por %p94, %p95
      %p98 = scmp.ne.s32.totalorder %s83, %s97
      %p99 = scmp.eq.s32.totalorder %s36, 0
      %p100 = por %p98, %p99
      %s101 = ssub.s32 %s30, %s37
      %p102 = scmp.eq.s32.totalorder %s101, 0
      %s104 = sadd.s32 %s103, 1
      %s105 = scalar_select %p102, %s103, %s104
      %p108 = pneg %p102
      %p109 = scmp.eq.s32.totalorder %s30, 11
      %p110 = por %p108, %p109
      %p111 = scmp.ne.s32.totalorder %s103, %s106
      %p112 = scmp.eq.s32.totalorder %s30, 0
      %p113 = por %p111, %p112
      %p114 = scmp.ne.s32.totalorder %s103, %s106
      %p115 = scmp.eq.s32.totalorder %s35, 11
      %p116 = por %p114, %p115
      %p117 = scmp.ne.s32.totalorder %s106, %s107
      %p118 = scmp.eq.s32.totalorder %s35, 0
      %p119 = por %p117, %p118
      %p120 = scmp.ne.s32.totalorder %s106, %s107
      %p121 = scmp.eq.s32.totalorder %s36, 11
      %p122 = por %p120, %p121
      %p124 = scmp.ne.s32.totalorder %s107, %s123
      %p125 = scmp.eq.s32.totalorder %s36, 0
      %p126 = por %p124, %p125
      %s127 = ssub.s32 %s30, %s37
      %p128 = scmp.eq.s32.totalorder %s127, 0
      %s130 = sadd.s32 %s129, 1
      %s131 = scalar_select %p128, %s129, %s130
      %p134 = pneg %p128
      %p135 = scmp.eq.s32.totalorder %s30, 11
      %p136 = por %p134, %p135
      %p137 = scmp.ne.s32.totalorder %s129, %s132
      %p138 = scmp.eq.s32.totalorder %s30, 0
      %p139 = por %p137, %p138
      %p140 = scmp.ne.s32.totalorder %s129, %s132
      %p141 = scmp.eq.s32.totalorder %s35, 11
      %p142 = por %p140, %p141
      %p143 = scmp.ne.s32.totalorder %s132, %s133
      %p144 = scmp.eq.s32.totalorder %s35, 0
      %p145 = por %p143, %p144
      %p146 = scmp.ne.s32.totalorder %s132, %s133
      %p147 = scmp.eq.s32.totalorder %s36, 11
      %p148 = por %p146, %p147
      %p150 = scmp.ne.s32.totalorder %s133, %s149
      %p151 = scmp.eq.s32.totalorder %s36, 0
      %p152 = por %p150, %p151
      %s153 = ssub.s32 %s30, %s37
      %p154 = scmp.eq.s32.totalorder %s153, 0
      %s156 = sadd.s32 %s155, 1
      %s157 = scalar_select %p154, %s155, %s156
      %p160 = pneg %p154
      %p161 = scmp.eq.s32.totalorder %s30, 11
      %p162 = por %p160, %p161
      %p163 = scmp.ne.s32.totalorder %s155, %s158
      %p164 = scmp.eq.s32.totalorder %s30, 0
      %p165 = por %p163, %p164
      %p166 = scmp.ne.s32.totalorder %s155, %s158
      %p167 = scmp.eq.s32.totalorder %s35, 11
      %p168 = por %p166, %p167
      %p169 = scmp.ne.s32.totalorder %s158, %s159
      %p170 = scmp.eq.s32.totalorder %s35, 0
      %p171 = por %p169, %p170
      %p172 = scmp.ne.s32.totalorder %s158, %s159
      %p173 = scmp.eq.s32.totalorder %s36, 11
      %p174 = por %p172, %p173
      %p176 = scmp.ne.s32.totalorder %s159, %s175
      %p177 = scmp.eq.s32.totalorder %s36, 0
      %p178 = por %p176, %p177
      %s179 = ssub.s32 %s30, %s37
      %p180 = scmp.eq.s32.totalorder %s179, 0
      %s182 = sadd.s32 %s181, 1
      %s183 = scalar_select %p180, %s181, %s182
      %p186 = pneg %p180
      %p187 = scmp.eq.s32.totalorder %s30, 11
      %p188 = por %p186, %p187
      %p189 = scmp.ne.s32.totalorder %s181, %s184
      %p190 = scmp.eq.s32.totalorder %s30, 0
      %p191 = por %p189, %p190
      %p192 = scmp.ne.s32.totalorder %s181, %s184
      %p193 = scmp.eq.s32.totalorder %s35, 11
      %p194 = por %p192, %p193
      %p195 = scmp.ne.s32.totalorder %s184, %s185
      %p196 = scmp.eq.s32.totalorder %s35, 0
      %p197 = por %p195, %p196
      %p198 = scmp.ne.s32.totalorder %s184, %s185
      %p199 = scmp.eq.s32.totalorder %s36, 11
      %p200 = por %p198, %p199
      %p202 = scmp.ne.s32.totalorder %s185, %s201
      %p203 = scmp.eq.s32.totalorder %s36, 0
      %p204 = por %p202, %p203
      %s205 = ssub.s32 %s30, %s37
      %p206 = scmp.eq.s32.totalorder %s205, 0
      %s208 = sadd.s32 %s207, 1
      %s209 = scalar_select %p206, %s207, %s208
      %p212 = pneg %p206
      %p213 = scmp.eq.s32.totalorder %s30, 11
      %p214 = por %p212, %p213
      %p215 = scmp.ne.s32.totalorder %s207, %s210
      %p216 = scmp.eq.s32.totalorder %s30, 0
      %p217 = por %p215, %p216
      %p218 = scmp.ne.s32.totalorder %s207, %s210
      %p219 = scmp.eq.s32.totalorder %s35, 11
      %p220 = por %p218, %p219
      %p221 = scmp.ne.s32.totalorder %s210, %s211
      %p222 = scmp.eq.s32.totalorder %s35, 0
      %p223 = por %p221, %p222
      %p224 = scmp.ne.s32.totalorder %s210, %s211
      %p225 = scmp.eq.s32.totalorder %s36, 11
      %p226 = por %p224, %p225
      %p228 = scmp.ne.s32.totalorder %s211, %s227
      %p229 = scmp.eq.s32.totalorder %s36, 0
      %p230 = por %p228, %p229
      %s231 = ssub.s32 %s30, %s37
      %p232 = scmp.eq.s32.totalorder %s231, 0
      %s234 = sadd.s32 %s233, 1
      %s235 = scalar_select %p232, %s233, %s234
      %p238 = pneg %p232
      %p239 = scmp.eq.s32.totalorder %s30, 11
      %p240 = por %p238, %p239
      %p241 = scmp.ne.s32.totalorder %s233, %s236
      %p242 = scmp.eq.s32.totalorder %s30, 0
      %p243 = por %p241, %p242
      %p244 = scmp.ne.s32.totalorder %s233, %s236
      %p245 = scmp.eq.s32.totalorder %s35, 11
      %p246 = por %p244, %p245
      %p247 = scmp.ne.s32.totalorder %s236, %s237
      %p248 = scmp.eq.s32.totalorder %s35, 0
      %p249 = por %p247, %p248
      %p250 = scmp.ne.s32.totalorder %s236, %s237
      %p251 = scmp.eq.s32.totalorder %s36, 11
      %p252 = por %p250, %p251
      %p254 = scmp.ne.s32.totalorder %s237, %s253
      %p255 = scmp.eq.s32.totalorder %s36, 0
      %p256 = por %p254, %p255
      %s257 = ssub.s32 %s30, %s37
      %p258 = scmp.eq.s32.totalorder %s257, 0
      %s260 = sadd.s32 %s259, 1
      %s261 = scalar_select %p258, %s259, %s260
      %p264 = pneg %p258
      %p265 = scmp.eq.s32.totalorder %s30, 11
      %p266 = por %p264, %p265
      %p267 = scmp.ne.s32.totalorder %s259, %s262
      %p268 = scmp.eq.s32.totalorder %s30, 0
      %p269 = por %p267, %p268
      %p270 = scmp.ne.s32.totalorder %s259, %s262
      %p271 = scmp.eq.s32.totalorder %s35, 11
      %p272 = por %p270, %p271
      %p273 = scmp.ne.s32.totalorder %s262, %s263
      %p274 = scmp.eq.s32.totalorder %s35, 0
      %p275 = por %p273, %p274
      %p276 = scmp.ne.s32.totalorder %s262, %s263
      %p277 = scmp.eq.s32.totalorder %s36, 11
      %p278 = por %p276, %p277
      %p280 = scmp.ne.s32.totalorder %s263, %s279
      %p281 = scmp.eq.s32.totalorder %s36, 0
      %p282 = por %p280, %p281
      %s283 = ssub.s32 %s30, %s37
      %p284 = scmp.eq.s32.totalorder %s283, 0
      %s286 = sadd.s32 %s285, 1
      %s287 = scalar_select %p284, %s285, %s286
      %p290 = pneg %p284
      %p291 = scmp.eq.s32.totalorder %s30, 11
      %p292 = por %p290, %p291
      %p293 = scmp.ne.s32.totalorder %s285, %s288
      %p294 = scmp.eq.s32.totalorder %s30, 0
      %p295 = por %p293, %p294
      %p296 = scmp.ne.s32.totalorder %s285, %s288
      %p297 = scmp.eq.s32.totalorder %s35, 11
      %p298 = por %p296, %p297
      %p299 = scmp.ne.s32.totalorder %s288, %s289
      %p300 = scmp.eq.s32.totalorder %s35, 0
      %p301 = por %p299, %p300
      %p302 = scmp.ne.s32.totalorder %s288, %s289
      %p303 = scmp.eq.s32.totalorder %s36, 11
      %p304 = por %p302, %p303
      %p306 = scmp.ne.s32.totalorder %s289, %s305
      %p307 = scmp.eq.s32.totalorder %s36, 0
      %p308 = por %p306, %p307
      %s309 = ssub.s32 %s30, %s37
      %p310 = scmp.eq.s32.totalorder %s309, 0
      %s312 = sadd.s32 %s311, 1
      %s313 = scalar_select %p310, %s311, %s312
      %p316 = pneg %p310
      %p317 = scmp.eq.s32.totalorder %s30, 11
      %p318 = por %p316, %p317
      %p319 = scmp.ne.s32.totalorder %s311, %s314
      %p320 = scmp.eq.s32.totalorder %s30, 0
      %p321 = por %p319, %p320
      %p322 = scmp.ne.s32.totalorder %s311, %s314
      %p323 = scmp.eq.s32.totalorder %s35, 11
      %p324 = por %p322, %p323
      %p325 = scmp.ne.s32.totalorder %s314, %s315
      %p326 = scmp.eq.s32.totalorder %s35, 0
      %p327 = por %p325, %p326
      %p328 = scmp.ne.s32.totalorder %s314, %s315
      %p329 = scmp.eq.s32.totalorder %s36, 11
      %p330 = por %p328, %p329
      %p332 = scmp.ne.s32.totalorder %s315, %s331
      %p333 = scmp.eq.s32.totalorder %s36, 0
      %p334 = por %p332, %p333
      %s335 = ssub.s32 %s30, %s37
      %p336 = scmp.eq.s32.totalorder %s335, 0
      %s338 = sadd.s32 %s337, 1
      %s339 = scalar_select %p336, %s337, %s338
      %p342 = pneg %p336
      %p343 = scmp.eq.s32.totalorder %s30, 11
      %p344 = por %p342, %p343
      %p345 = scmp.ne.s32.totalorder %s337, %s340
      %p346 = scmp.eq.s32.totalorder %s30, 0
      %p347 = por %p345, %p346
      %p348 = scmp.ne.s32.totalorder %s337, %s340
      %p349 = scmp.eq.s32.totalorder %s35, 11
      %p350 = por %p348, %p349
      %p351 = scmp.ne.s32.totalorder %s340, %s341
      %p352 = scmp.eq.s32.totalorder %s35, 0
      %p353 = por %p351, %p352
      %p354 = scmp.ne.s32.totalorder %s340, %s341
      %p355 = scmp.eq.s32.totalorder %s36, 11
      %p356 = por %p354, %p355
      %p358 = scmp.ne.s32.totalorder %s341, %s357
      %p359 = scmp.eq.s32.totalorder %s36, 0
      %p360 = por %p358, %p359
      %s361 = ssub.s32 %s30, %s37
      %p362 = scmp.eq.s32.totalorder %s361, 0
      %s364 = sadd.s32 %s363, 1
      %s365 = scalar_select %p362, %s363, %s364
      %p368 = pneg %p362
      %p369 = scmp.eq.s32.totalorder %s30, 11
      %p370 = por %p368, %p369
      %p371 = scmp.ne.s32.totalorder %s363, %s366
      %p372 = scmp.eq.s32.totalorder %s30, 0
      %p373 = por %p371, %p372
      %p374 = scmp.ne.s32.totalorder %s363, %s366
      %p375 = scmp.eq.s32.totalorder %s35, 11
      %p376 = por %p374, %p375
      %p377 = scmp.ne.s32.totalorder %s366, %s367
      %p378 = scmp.eq.s32.totalorder %s35, 0
      %p379 = por %p377, %p378
      %p380 = scmp.ne.s32.totalorder %s366, %s367
      %p381 = scmp.eq.s32.totalorder %s36, 11
      %p382 = por %p380, %p381
      %p384 = scmp.ne.s32.totalorder %s367, %s383
      %p385 = scmp.eq.s32.totalorder %s36, 0
      %p386 = por %p384, %p385
      %s387 = ssub.s32 %s30, %s37
      %p388 = scmp.eq.s32.totalorder %s387, 0
      %s390 = sadd.s32 %s389, 1
      %s391 = scalar_select %p388, %s389, %s390
      %p394 = pneg %p388
      %p395 = scmp.eq.s32.totalorder %s30, 11
      %p396 = por %p394, %p395
      %p397 = scmp.ne.s32.totalorder %s389, %s392
      %p398 = scmp.eq.s32.totalorder %s30, 0
      %p399 = por %p397, %p398
      %p400 = scmp.ne.s32.totalorder %s389, %s392
      %p401 = scmp.eq.s32.totalorder %s35, 11
      %p402 = por %p400, %p401
      %p403 = scmp.ne.s32.totalorder %s392, %s393
      %p404 = scmp.eq.s32.totalorder %s35, 0
      %p405 = por %p403, %p404
      %p406 = scmp.ne.s32.totalorder %s392, %s393
      %p407 = scmp.eq.s32.totalorder %s36, 11
      %p408 = por %p406, %p407
      %p410 = scmp.ne.s32.totalorder %s393, %s409
      %p411 = scmp.eq.s32.totalorder %s36, 0
      %p412 = por %p410, %p411
      %s414 = sadd.s32 %s413, 1
      %p417 = scmp.eq.s32.totalorder %s30, 11
      %p418 = scmp.ne.s32.totalorder %s413, %s415
      %p419 = scmp.eq.s32.totalorder %s30, 0
      %p420 = por %p418, %p419
      %p421 = scmp.ne.s32.totalorder %s413, %s415
      %p422 = scmp.eq.s32.totalorder %s35, 11
      %p423 = por %p421, %p422
      %p424 = scmp.ne.s32.totalorder %s415, %s416
      %p425 = scmp.eq.s32.totalorder %s35, 0
      %p426 = por %p424, %p425
      %p427 = scmp.ne.s32.totalorder %s415, %s416
      %p428 = scmp.eq.s32.totalorder %s36, 11
      %p429 = por %p427, %p428
      %p431 = scmp.ne.s32.totalorder %s416, %s430
      %p432 = scmp.eq.s32.totalorder %s36, 0
      %p433 = por %p431, %p432
      %p434 = scmp.le.s32.totalorder 1, %s30
      %p435 = scmp.lt.s32.totalorder %s30, 13
      %p436 = pnand %p434, %p435
      %p437 = pneg %p436
      // Predicated region
      $region9: #{encoder_forward.1} parent=5 // pred_check
        _
      $region10: #{encoder_forward.1} parent=5 // pred_check_branch
        %439 = sbr.rel (%p436) target = $region12
      $region11: #{encoder_forward.1} parent=5 // pred_region
        %s440 = ssub.s32 %s30, 1
        // Predicated region
        $region13: #{encoder_forward.1} parent=11 // pred_check
          %p441 = pneg %p51
        $region14: #{encoder_forward.1} parent=11 // pred_check_branch
          %443 = sbr.rel (%p441) target = $region16
        $region15: #{encoder_forward.1} parent=11 // pred_region
          _
        $region16: #{encoder_forward.1} parent=11 // pred_fallthru
          _
        // Predicated region
        $region17: #{encoder_forward.1} parent=11 // pred_check
          %p444 = pneg %p72
        $region18: #{encoder_forward.1} parent=11 // pred_check_branch
          %446 = sbr.rel (%p444) target = $region20
        $region19: #{encoder_forward.1} parent=11 // pred_region
          _
        $region20: #{encoder_forward.1} parent=11 // pred_fallthru
          _
        // Predicated region
        $region21: #{encoder_forward.1} parent=11 // pred_check
          %p447 = pneg %p93
        $region22: #{encoder_forward.1} parent=11 // pred_check_branch
          %449 = sbr.rel (%p447) target = $region24
        $region23: #{encoder_forward.1} parent=11 // pred_region
          _
        $region24: #{encoder_forward.1} parent=11 // pred_fallthru
          _
      $region12: #{encoder_forward.1} parent=5 // pred_fallthru
        _
      %p450 = scmp.lt.s32.totalorder %s30, 12
      // Predicated region
      $region25: #{encoder_forward.1} parent=5 // pred_check
        %p451 = pneg %p450
      $region26: #{encoder_forward.1} parent=5 // pred_check_branch
        %453 = sbr.rel (%p451) target = $region28
      $region27: #{encoder_forward.1} parent=5 // pred_region
        // Predicated region
        $region29: #{encoder_forward.1} parent=27 // pred_check
          %p454 = pneg %p113
        $region30: #{encoder_forward.1} parent=27 // pred_check_branch
          %456 = sbr.rel (%p454) target = $region32
        $region31: #{encoder_forward.1} parent=27 // pred_region
          %p457 = scmp.lt.s32.totalorder %s30, 11
          %s458 = scalar_select %p457, %s30, 11
          %s459 = scalar_lea.vmem %s3, %s458
        $region32: #{encoder_forward.1} parent=27 // pred_fallthru
          _
        // Predicated region
        $region33: #{encoder_forward.1} parent=27 // pred_check
          %p460 = pneg %p139
        $region34: #{encoder_forward.1} parent=27 // pred_check_branch
          %462 = sbr.rel (%p460) target = $region36
        $region35: #{encoder_forward.1} parent=27 // pred_region
          %p463 = scmp.lt.s32.totalorder %s30, 11
          %s464 = scalar_select %p463, %s30, 11
          %s465 = scalar_lea.vmem %s4, %s464
        $region36: #{encoder_forward.1} parent=27 // pred_fallthru
          _
        // Predicated region
        $region37: #{encoder_forward.1} parent=27 // pred_check
          %p466 = pneg %p165
        $region38: #{encoder_forward.1} parent=27 // pred_check_branch
          %468 = sbr.rel (%p466) target = $region40
        $region39: #{encoder_forward.1} parent=27 // pred_region
          %s469 = sand.u32 %s155, 1
          %s470 = scalar_lea.sflag [#allocation4], %s469
          %s471 = sand.u32 %s155, 1
          %s472 = smul.addr %s471, 192
          %s473 = scalar_lea.vmem [#allocation3], %s472
          %s475 = ssub.s32 3072, 3072
          %476 = vsyncadd %s470, %s475
          %s477 = smul.addr %s30, 48
          %s478 = smul.addr %s477, 64
          %s479 = scalar_lea.hbm %s5, %s478
          %s480 = sshll.u32 %s473, 4
          %s481 = int_to_ptr.vmem [resolvable:$true] %s480
          %486 = dma.hbm_to_vmem [thread:$0]  %s479, 3072, %s481, %s470, 192, 192, 12
        $region40: #{encoder_forward.1} parent=27 // pred_fallthru
          _
        // Predicated region
        $region41: #{encoder_forward.1} parent=27 // pred_check
          %p487 = pneg %p191
        $region42: #{encoder_forward.1} parent=27 // pred_check_branch
          %489 = sbr.rel (%p487) target = $region44
        $region43: #{encoder_forward.1} parent=27 // pred_region
          %p490 = scmp.lt.s32.totalorder %s30, 11
          %s491 = scalar_select %p490, %s30, 11
          %s492 = smul.addr %s491, 3
          %s493 = scalar_lea.vmem %s6, %s492
        $region44: #{encoder_forward.1} parent=27 // pred_fallthru
          _
        // Predicated region
        $region45: #{encoder_forward.1} parent=27 // pred_check
          %p494 = pneg %p217
        $region46: #{encoder_forward.1} parent=27 // pred_check_branch
          %496 = sbr.rel (%p494) target = $region48
        $region47: #{encoder_forward.1} parent=27 // pred_region
          %p497 = scmp.lt.s32.totalorder %s30, 11
          %s498 = scalar_select %p497, %s30, 11
          %s499 = smul.addr %s498, 16
          %s500 = smul.addr %s499, 4
          %s501 = scalar_lea.vmem %s7, %s500
        $region48: #{encoder_forward.1} parent=27 // pred_fallthru
          _
        // Predicated region
        $region49: #{encoder_forward.1} parent=27 // pred_check
          %p502 = pneg %p243
        $region50: #{encoder_forward.1} parent=27 // pred_check_branch
          %504 = sbr.rel (%p502) target = $region52
        $region51: #{encoder_forward.1} parent=27 // pred_region
          %p505 = scmp.lt.s32.totalorder %s30, 11
          %s506 = scalar_select %p505, %s30, 11
          %s507 = scalar_lea.vmem %s8, %s506
        $region52: #{encoder_forward.1} parent=27 // pred_fallthru
          _
        // Predicated region
        $region53: #{encoder_forward.1} parent=27 // pred_check
          %p508 = pneg %p269
        $region54: #{encoder_forward.1} parent=27 // pred_check_branch
          %510 = sbr.rel (%p508) target = $region56
        $region55: #{encoder_forward.1} parent=27 // pred_region
          %s511 = sand.u32 %s30, 1
          %s512 = scalar_lea.sflag [#allocation6], %s511
          %s513 = sand.u32 %s259, 1
          %s514 = scalar_lea.vmem [#allocation5], %s513
          %s516 = ssub.s32 16, 16
          %517 = vsyncadd %s512, %s516
          %s518 = smul.addr %s30, 16
          %s519 = scalar_lea.hbm %s9, %s518
          %s521 = sshll.u32 %s514, 4
          %s522 = int_to_ptr.vmem [resolvable:$true] %s521
          %524 = dma.hbm_to_vmem [thread:$0]  %s519, 16, %s522, %s512
        $region56: #{encoder_forward.1} parent=27 // pred_fallthru
          _
        // Predicated region
        $region57: #{encoder_forward.1} parent=27 // pred_check
          %p525 = pneg %p295
        $region58: #{encoder_forward.1} parent=27 // pred_check_branch
          %527 = sbr.rel (%p525) target = $region60
        $region59: #{encoder_forward.1} parent=27 // pred_region
          %s528 = sand.u32 %s30, 1
          %s529 = scalar_lea.sflag [#allocation6], %s528
          %s530 = sand.u32 %s285, 1
          %s531 = scalar_lea.vmem [#allocation7], %s530
          %s533 = ssub.s32 16, 16
          %534 = vsyncadd %s529, %s533
          %s535 = smul.addr %s30, 16
          %s536 = scalar_lea.hbm %s10, %s535
          %s538 = sshll.u32 %s531, 4
          %s539 = int_to_ptr.vmem [resolvable:$true] %s538
          %541 = dma.hbm_to_vmem [thread:$0]  %s536, 16, %s539, %s529
        $region60: #{encoder_forward.1} parent=27 // pred_fallthru
          _
        // Predicated region
        $region61: #{encoder_forward.1} parent=27 // pred_check
          %p542 = pneg %p321
        $region62: #{encoder_forward.1} parent=27 // pred_check_branch
          %544 = sbr.rel (%p542) target = $region64
        $region63: #{encoder_forward.1} parent=27 // pred_region
          %p545 = scmp.lt.s32.totalorder %s30, 11
          %s546 = scalar_select %p545, %s30, 11
          %s547 = smul.addr %s546, 64
          %s548 = smul.addr %s547, 4
          %s549 = scalar_lea.vmem %s11, %s548
        $region64: #{encoder_forward.1} parent=27 // pred_fallthru
          _
        // Predicated region
        $region65: #{encoder_forward.1} parent=27 // pred_check
          %p550 = pneg %p347
        $region66: #{encoder_forward.1} parent=27 // pred_check_branch
          %552 = sbr.rel (%p550) target = $region68
        $region67: #{encoder_forward.1} parent=27 // pred_region
          %p553 = scmp.lt.s32.totalorder %s30, 11
          %s554 = scalar_select %p553, %s30, 11
          %s555 = smul.addr %s554, 4
          %s556 = scalar_lea.vmem %s12, %s555
        $region68: #{encoder_forward.1} parent=27 // pred_fallthru
          _
        // Predicated region
        $region69: #{encoder_forward.1} parent=27 // pred_check
          %p557 = pneg %p373
        $region70: #{encoder_forward.1} parent=27 // pred_check_branch
          %559 = sbr.rel (%p557) target = $region72
        $region71: #{encoder_forward.1} parent=27 // pred_region
          %p560 = scmp.lt.s32.totalorder %s30, 11
          %s561 = scalar_select %p560, %s30, 11
          %s562 = smul.addr %s561, 64
          %s563 = smul.addr %s562, 4
          %s564 = scalar_lea.vmem %s13, %s563
        $region72: #{encoder_forward.1} parent=27 // pred_fallthru
          _
        // Predicated region
        $region73: #{encoder_forward.1} parent=27 // pred_check
          %p565 = pneg %p399
        $region74: #{encoder_forward.1} parent=27 // pred_check_branch
          %567 = sbr.rel (%p565) target = $region76
        $region75: #{encoder_forward.1} parent=27 // pred_region
          %s568 = sand.u32 %s389, 1
          %s569 = scalar_lea.sflag [#allocation9], %s568
          %s570 = sand.u32 %s389, 1
          %s571 = scalar_lea.vmem [#allocation8], %s570
          %s573 = ssub.s32 16, 16
          %574 = vsyncadd %s569, %s573
          %s575 = smul.addr %s30, 16
          %s576 = scalar_lea.hbm %s14, %s575
          %s578 = sshll.u32 %s571, 4
          %s579 = int_to_ptr.vmem [resolvable:$true] %s578
          %581 = dma.hbm_to_vmem [thread:$0]  %s576, 16, %s579, %s569
        $region76: #{encoder_forward.1} parent=27 // pred_fallthru
          _
      $region28: #{encoder_forward.1} parent=5 // pred_fallthru
        _
      %p582 = scmp.le.s32.totalorder 1, %s30
      %p583 = scmp.lt.s32.totalorder %s30, 13
      %p584 = pnand %p582, %p583
      %p585 = pneg %p584
      // Predicated region
      $region77: #{encoder_forward.1} parent=5 // pred_check
        _
      $region78: #{encoder_forward.1} parent=5 // pred_check_branch
        %587 = sbr.rel (%p584) target = $region80
      $region79: #{encoder_forward.1} parent=5 // pred_region
        %s588 = ssub.s32 %s30, 1
        %s589 = sand.u32 %s158, 1
        %s590 = scalar_lea.sflag [#allocation4], %s589
        %s591 = sand.u32 %s158, 1
        %s592 = smul.addr %s591, 192
        %s593 = scalar_lea.vmem [#allocation3], %s592
        // Predicated region
        $region81: #{encoder_forward.1} parent=79 // pred_check
          %p594 = pneg %p171
        $region82: #{encoder_forward.1} parent=79 // pred_check_branch
          %596 = sbr.rel (%p594) target = $region84
        $region83: #{encoder_forward.1} parent=79 // pred_region
          %597 = dma.done %s590, 3072
        $region84: #{encoder_forward.1} parent=79 // pred_fallthru
          _
        %s598 = sand.u32 %s35, 1
        %s599 = scalar_lea.sflag [#allocation6], %s598
        %s600 = sand.u32 %s262, 1
        %s601 = scalar_lea.vmem [#allocation5], %s600
        // Predicated region
        $region85: #{encoder_forward.1} parent=79 // pred_check
          %p602 = pneg %p275
        $region86: #{encoder_forward.1} parent=79 // pred_check_branch
          %604 = sbr.rel (%p602) target = $region88
        $region87: #{encoder_forward.1} parent=79 // pred_region
          %605 = dma.done %s599, 16
        $region88: #{encoder_forward.1} parent=79 // pred_fallthru
          _
        %s606 = sand.u32 %s35, 1
        %s607 = scalar_lea.sflag [#allocation6], %s606
        %s608 = sand.u32 %s288, 1
        %s609 = scalar_lea.vmem [#allocation7], %s608
        // Predicated region
        $region89: #{encoder_forward.1} parent=79 // pred_check
          %p610 = pneg %p301
        $region90: #{encoder_forward.1} parent=79 // pred_check_branch
          %612 = sbr.rel (%p610) target = $region92
        $region91: #{encoder_forward.1} parent=79 // pred_region
          %613 = dma.done %s607, 16
        $region92: #{encoder_forward.1} parent=79 // pred_fallthru
          _
        %s614 = sand.u32 %s392, 1
        %s615 = scalar_lea.sflag [#allocation9], %s614
        %s616 = sand.u32 %s392, 1
        %s617 = scalar_lea.vmem [#allocation8], %s616
        // Predicated region
        $region93: #{encoder_forward.1} parent=79 // pred_check
          %p618 = pneg %p405
        $region94: #{encoder_forward.1} parent=79 // pred_check_branch
          %620 = sbr.rel (%p618) target = $region96
        $region95: #{encoder_forward.1} parent=79 // pred_region
          %621 = dma.done %s615, 16
        $region96: #{encoder_forward.1} parent=79 // pred_fallthru
          _
        %p622 = pneg %p51
        %p623 = pneg %p48
        %p624 = pneg %p72
        %p625 = pneg %p69
        %p626 = pneg %p93
        %p627 = pneg %p90
        %p628 = scmp.lt.s32.totalorder %s35, 11
        %s629 = scalar_select %p628, %s35, 11
        %s630 = scalar_lea.vmem %s3, %s629
        %p631 = pneg %p119
        %p632 = pneg %p116
        %p633 = scmp.lt.s32.totalorder %s35, 11
        %s634 = scalar_select %p633, %s35, 11
        %s635 = scalar_lea.vmem %s4, %s634
        %p636 = pneg %p145
        %p637 = pneg %p142
        %s638 = sand.u32 %s158, 1
        %s639 = scalar_lea.sflag [#allocation4], %s638
        %s640 = sand.u32 %s158, 1
        %s641 = smul.addr %s640, 192
        %s642 = scalar_lea.vmem [#allocation3], %s641
        %p643 = pneg %p171
        %p644 = pneg %p168
        %p645 = scmp.lt.s32.totalorder %s35, 11
        %s646 = scalar_select %p645, %s35, 11
        %s647 = smul.addr %s646, 3
        %s648 = scalar_lea.vmem %s6, %s647
        %p649 = pneg %p197
        %p650 = pneg %p194
        %p651 = scmp.lt.s32.totalorder %s35, 11
        %s652 = scalar_select %p651, %s35, 11
        %s653 = smul.addr %s652, 16
        %s654 = smul.addr %s653, 4
        %s655 = scalar_lea.vmem %s7, %s654
        %p656 = pneg %p223
        %p657 = pneg %p220
        %p658 = scmp.lt.s32.totalorder %s35, 11
        %s659 = scalar_select %p658, %s35, 11
        %s660 = scalar_lea.vmem %s8, %s659
        %p661 = pneg %p249
        %p662 = pneg %p246
        %s663 = sand.u32 %s35, 1
        %s664 = scalar_lea.sflag [#allocation6], %s663
        %s665 = sand.u32 %s262, 1
        %s666 = scalar_lea.vmem [#allocation5], %s665
        %p667 = pneg %p275
        %p668 = pneg %p272
        %s669 = sand.u32 %s35, 1
        %s670 = scalar_lea.sflag [#allocation6], %s669
        %s671 = sand.u32 %s288, 1
        %s672 = scalar_lea.vmem [#allocation7], %s671
        %p673 = pneg %p301
        %p674 = pneg %p298
        %p675 = scmp.lt.s32.totalorder %s35, 11
        %s676 = scalar_select %p675, %s35, 11
        %s677 = smul.addr %s676, 64
        %s678 = smul.addr %s677, 4
        %s679 = scalar_lea.vmem %s11, %s678
        %p680 = pneg %p327
        %p681 = pneg %p324
        %p682 = scmp.lt.s32.totalorder %s35, 11
        %s683 = scalar_select %p682, %s35, 11
        %s684 = smul.addr %s683, 4
        %s685 = scalar_lea.vmem %s12, %s684
        %p686 = pneg %p353
        %p687 = pneg %p350
        %p688 = scmp.lt.s32.totalorder %s35, 11
        %s689 = scalar_select %p688, %s35, 11
        %s690 = smul.addr %s689, 64
        %s691 = smul.addr %s690, 4
        %s692 = scalar_lea.vmem %s13, %s691
        %p693 = pneg %p379
        %p694 = pneg %p376
        %s695 = sand.u32 %s392, 1
        %s696 = scalar_lea.sflag [#allocation9], %s695
        %s697 = sand.u32 %s392, 1
        %s698 = scalar_lea.vmem [#allocation8], %s697
        %p699 = pneg %p405
        %p700 = pneg %p402
        %p701 = pneg %p426
        %p702 = pneg %p423
        %p703 = scmp.lt.s32.totalorder %s35, 11
        %s704 = scalar_select %p703, %s35, 11
        %s705 = scalar_lea.vmem %s3, %s704
        %p706 = scmp.lt.s32.totalorder %s35, 11
        %s707 = scalar_select %p706, %s35, 11
        %s708 = scalar_lea.vmem %s4, %s707
        %p709 = scmp.lt.s32.totalorder %s35, 11
        %s710 = scalar_select %p709, %s35, 11
        %s711 = smul.addr %s710, 3
        %s712 = scalar_lea.vmem %s6, %s711
        %p713 = scmp.lt.s32.totalorder %s35, 11
        %s714 = scalar_select %p713, %s35, 11
        %s715 = smul.addr %s714, 16
        %s716 = smul.addr %s715, 4
        %s717 = scalar_lea.vmem %s7, %s716
        %p718 = scmp.lt.s32.totalorder %s35, 11
        %s719 = scalar_select %p718, %s35, 11
        %s720 = scalar_lea.vmem %s8, %s719
        %p721 = scmp.lt.s32.totalorder %s35, 11
        %s722 = scalar_select %p721, %s35, 11
        %s723 = smul.addr %s722, 64
        %s724 = smul.addr %s723, 4
        %s725 = scalar_lea.vmem %s11, %s724
        %p726 = scmp.lt.s32.totalorder %s35, 11
        %s727 = scalar_select %p726, %s35, 11
        %s728 = smul.addr %s727, 4
        %s729 = scalar_lea.vmem %s12, %s728
        %p730 = scmp.lt.s32.totalorder %s35, 11
        %s731 = scalar_select %p730, %s35, 11
        %s732 = smul.addr %s731, 64
        %s733 = smul.addr %s732, 4
        %s734 = scalar_lea.vmem %s13, %s733
        %p736 = scmp.eq.s32.totalorder %s35, 0
        // Predicated region
        $region97: #{encoder_forward.1} parent=79 // pred_check
          %p737 = pneg %p736
        $region98: #{encoder_forward.1} parent=79 // pred_check_branch
          %739 = sbr.rel (%p737) target = $region100
        $region99: #{encoder_forward.1} parent=79 // pred_region
          %v740 = vld [vmem:[%s0] sm:$0xff]
          %v741 = vld [vmem:[%s0 + $0x8] sm:$0xff]
          %v742 = vld [vmem:[%s0 + $0x10] sm:$0xff]
          %v743 = vld [vmem:[%s0 + $0x18] sm:$0xff]
          %v744 = vld [vmem:[%s0 + $0x20] sm:$0xff]
          %v745 = vld [vmem:[%s0 + $0x28] sm:$0xff]
          %v746 = vld [vmem:[%s0 + $0x30] sm:$0xff]
          %v747 = vld [vmem:[%s0 + $0x38] sm:$0xff]
          %v748 = vld [vmem:[%s0 + $0x40] sm:$0xff]
          %v749 = vld [vmem:[%s0 + $0x48] sm:$0xff]
          %v750 = vld [vmem:[%s0 + $0x50] sm:$0xff]
          %v751 = vld [vmem:[%s0 + $0x58] sm:$0xff]
          %v752 = vld [vmem:[%s0 + $0x60] sm:$0xff]
          %v753 = vld [vmem:[%s0 + $0x68] sm:$0xff]
          %v754 = vld [vmem:[%s0 + $0x70] sm:$0xff]
          %v755 = vld [vmem:[%s0 + $0x78] sm:$0xff]
          %v756 = vld [vmem:[%s0 + $0x80] sm:$0xff]
          %v757 = vld [vmem:[%s0 + $0x88] sm:$0xff]
          %v758 = vld [vmem:[%s0 + $0x90] sm:$0xff]
          %v759 = vld [vmem:[%s0 + $0x98] sm:$0xff]
          %v760 = vld [vmem:[%s0 + $0xa0] sm:$0xff]
          %v761 = vld [vmem:[%s0 + $0xa8] sm:$0xff]
          %v762 = vld [vmem:[%s0 + $0xb0] sm:$0xff]
          %v763 = vld [vmem:[%s0 + $0xb8] sm:$0xff]
          %v764 = vld [vmem:[%s0 + $0xc0] sm:$0xff]
          %v765 = vld [vmem:[%s0 + $0xc8] sm:$0xff]
          %v766 = vld [vmem:[%s0 + $0xd0] sm:$0xff]
          %v767 = vld [vmem:[%s0 + $0xd8] sm:$0xff]
          %v768 = vld [vmem:[%s0 + $0xe0] sm:$0xff]
          %v769 = vld [vmem:[%s0 + $0xe8] sm:$0xff]
          %v770 = vld [vmem:[%s0 + $0xf0] sm:$0xff]
          %v771 = vld [vmem:[%s0 + $0xf8] sm:$0xff]
          %v772 = vld [vmem:[%s0 + $0x100] sm:$0xff]
          %v773 = vld [vmem:[%s0 + $0x108] sm:$0xff]
          %v774 = vld [vmem:[%s0 + $0x110] sm:$0xff]
          %v775 = vld [vmem:[%s0 + $0x118] sm:$0xff]
          %v776 = vpack.c.bf16 %v746, %v740
          %v777 = vpack.c.bf16 %v747, %v741
          %v778 = vpack.c.bf16 %v748, %v742
          %v779 = vpack.c.bf16 %v749, %v743
          %v780 = vpack.c.bf16 %v750, %v744
          %v781 = vpack.c.bf16 %v751, %v745
          %v782 = vpack.c.bf16 %v758, %v752
          %v783 = vpack.c.bf16 %v759, %v753
          %v784 = vpack.c.bf16 %v760, %v754
          %v785 = vpack.c.bf16 %v761, %v755
          %v786 = vpack.c.bf16 %v762, %v756
          %v787 = vpack.c.bf16 %v763, %v757
          %v788 = vpack.c.bf16 %v770, %v764
          %v789 = vpack.c.bf16 %v771, %v765
          %v790 = vpack.c.bf16 %v772, %v766
          %v791 = vpack.c.bf16 %v773, %v767
          %v792 = vpack.c.bf16 %v774, %v768
          %v793 = vpack.c.bf16 %v775, %v769
          %v794 = vld [vmem:[%s1] sm:$0xf]
          %v795 = vld [vmem:[%s1 + $0x4] sm:$0xf]
          %v796 = vld [vmem:[%s1 + $0x8] sm:$0xf]
          %v797 = vld [vmem:[%s1 + $0xc] sm:$0xf]
          %v798 = vld [vmem:[%s1 + $0x10] sm:$0xf]
          %v799 = vld [vmem:[%s1 + $0x14] sm:$0xf]
          %v800 = vld [vmem:[%s1 + $0x18] sm:$0xf]
          %v801 = vld [vmem:[%s1 + $0x1c] sm:$0xf]
          %v802 = vld [vmem:[%s1 + $0x20] sm:$0xf]
          %v803 = vld [vmem:[%s1 + $0x24] sm:$0xf]
          %v804 = vld [vmem:[%s1 + $0x28] sm:$0xf]
          %v805 = vld [vmem:[%s1 + $0x2c] sm:$0xf]
          %v806 = vld [vmem:[%s1 + $0x30] sm:$0xf]
          %v807 = vld [vmem:[%s1 + $0x34] sm:$0xf]
          %v808 = vld [vmem:[%s1 + $0x38] sm:$0xf]
          %v809 = vld [vmem:[%s1 + $0x3c] sm:$0xf]
          %v810 = vld [vmem:[%s1 + $0x40] sm:$0xf]
          %v811 = vld [vmem:[%s1 + $0x44] sm:$0xf]
          %v812 = vld [vmem:[%s1 + $0x48] sm:$0xf]
          %v813 = vld [vmem:[%s1 + $0x4c] sm:$0xf]
          %v814 = vld [vmem:[%s1 + $0x50] sm:$0xf]
          %v815 = vld [vmem:[%s1 + $0x54] sm:$0xf]
          %v816 = vld [vmem:[%s1 + $0x58] sm:$0xf]
          %v817 = vld [vmem:[%s1 + $0x5c] sm:$0xf]
          %v818 = vld [vmem:[%s1 + $0x60] sm:$0xf]
          %v819 = vld [vmem:[%s1 + $0x64] sm:$0xf]
          %v820 = vld [vmem:[%s1 + $0x68] sm:$0xf]
          %v821 = vld [vmem:[%s1 + $0x6c] sm:$0xf]
          %v822 = vld [vmem:[%s1 + $0x70] sm:$0xf]
          %v823 = vld [vmem:[%s1 + $0x74] sm:$0xf]
          %v824 = vld [vmem:[%s1 + $0x78] sm:$0xf]
          %v825 = vld [vmem:[%s1 + $0x7c] sm:$0xf]
          %v826 = vld [vmem:[%s1 + $0x80] sm:$0xf]
          %v827 = vld [vmem:[%s1 + $0x84] sm:$0xf]
          %v828 = vld [vmem:[%s1 + $0x88] sm:$0xf]
          %v829 = vld [vmem:[%s1 + $0x8c] sm:$0xf]
          %v830 = vld [vmem:[%s1 + $0x90] sm:$0xf]
          %v831 = vld [vmem:[%s1 + $0x94] sm:$0xf]
          %v832 = vld [vmem:[%s1 + $0x98] sm:$0xf]
          %v833 = vld [vmem:[%s1 + $0x9c] sm:$0xf]
          %v834 = vld [vmem:[%s1 + $0xa0] sm:$0xf]
          %v835 = vld [vmem:[%s1 + $0xa4] sm:$0xf]
          %v836 = vld [vmem:[%s1 + $0xa8] sm:$0xf]
          %v837 = vld [vmem:[%s1 + $0xac] sm:$0xf]
          %v838 = vld [vmem:[%s1 + $0xb0] sm:$0xf]
          %v839 = vld [vmem:[%s1 + $0xb4] sm:$0xf]
          %v840 = vld [vmem:[%s1 + $0xb8] sm:$0xf]
          %v841 = vld [vmem:[%s1 + $0xbc] sm:$0xf]
          %v842 = vld [vmem:[%s1 + $0xc0] sm:$0xf]
          %v843 = vld [vmem:[%s1 + $0xc4] sm:$0xf]
          %v844 = vld [vmem:[%s1 + $0xc8] sm:$0xf]
          %v845 = vld [vmem:[%s1 + $0xcc] sm:$0xf]
          %v846 = vld [vmem:[%s1 + $0xd0] sm:$0xf]
          %v847 = vld [vmem:[%s1 + $0xd4] sm:$0xf]
          %v848 = vld [vmem:[%s1 + $0xd8] sm:$0xf]
          %v849 = vld [vmem:[%s1 + $0xdc] sm:$0xf]
          %v850 = vld [vmem:[%s1 + $0xe0] sm:$0xf]
          %v851 = vld [vmem:[%s1 + $0xe4] sm:$0xf]
          %v852 = vld [vmem:[%s1 + $0xe8] sm:$0xf]
          %v853 = vld [vmem:[%s1 + $0xec] sm:$0xf]
          %v854 = vld [vmem:[%s1 + $0xf0] sm:$0xf]
          %v855 = vld [vmem:[%s1 + $0xf4] sm:$0xf]
          %v856 = vld [vmem:[%s1 + $0xf8] sm:$0xf]
          %v857 = vld [vmem:[%s1 + $0xfc] sm:$0xf]
          %v858 = vld [vmem:[%s1 + $0x100] sm:$0xf]
          %v859 = vld [vmem:[%s1 + $0x104] sm:$0xf]
          %v860 = vld [vmem:[%s1 + $0x108] sm:$0xf]
          %v861 = vld [vmem:[%s1 + $0x10c] sm:$0xf]
          %v862 = vld [vmem:[%s1 + $0x110] sm:$0xf]
          %v863 = vld [vmem:[%s1 + $0x114] sm:$0xf]
          %v864 = vld [vmem:[%s1 + $0x118] sm:$0xf]
          %v865 = vld [vmem:[%s1 + $0x11c] sm:$0xf]
          %v866 = vld [vmem:[%s1 + $0x120] sm:$0xf]
          %v867 = vld [vmem:[%s1 + $0x124] sm:$0xf]
          %v868 = vld [vmem:[%s1 + $0x128] sm:$0xf]
          %v869 = vld [vmem:[%s1 + $0x12c] sm:$0xf]
          %v870 = vld [vmem:[%s1 + $0x130] sm:$0xf]
          %v871 = vld [vmem:[%s1 + $0x134] sm:$0xf]
          %v872 = vld [vmem:[%s1 + $0x138] sm:$0xf]
          %v873 = vld [vmem:[%s1 + $0x13c] sm:$0xf]
          %v874 = vld [vmem:[%s1 + $0x140] sm:$0xf]
          %v875 = vld [vmem:[%s1 + $0x144] sm:$0xf]
          %v876 = vld [vmem:[%s1 + $0x148] sm:$0xf]
          %v877 = vld [vmem:[%s1 + $0x14c] sm:$0xf]
          %v878 = vld [vmem:[%s1 + $0x150] sm:$0xf]
          %v879 = vld [vmem:[%s1 + $0x154] sm:$0xf]
          %v880 = vld [vmem:[%s1 + $0x158] sm:$0xf]
          %v881 = vld [vmem:[%s1 + $0x15c] sm:$0xf]
          %v882 = vld [vmem:[%s1 + $0x160] sm:$0xf]
          %v883 = vld [vmem:[%s1 + $0x164] sm:$0xf]
          %v884 = vld [vmem:[%s1 + $0x168] sm:$0xf]
          %v885 = vld [vmem:[%s1 + $0x16c] sm:$0xf]
          %v886 = vld [vmem:[%s1 + $0x170] sm:$0xf]
          %v887 = vld [vmem:[%s1 + $0x174] sm:$0xf]
          %v888 = vld [vmem:[%s1 + $0x178] sm:$0xf]
          %v889 = vld [vmem:[%s1 + $0x17c] sm:$0xf]
          %v890 = vld [vmem:[%s2] sm:$0xff]
          %v891 = vld [vmem:[%s2 + $0x8] sm:$0xff]
          %v892 = vld [vmem:[%s2 + $0x10] sm:$0xff]
          %v893 = vld [vmem:[%s2 + $0x18] sm:$0xff]
          %v894 = vld [vmem:[%s2 + $0x20] sm:$0xff]
          %v895 = vld [vmem:[%s2 + $0x28] sm:$0xff]
          %v992 = vunpack.c.l.b16 %v794
          %v993 = vunpack.c.l.b16 %v795
          %v994 = vunpack.c.l.b16 %v796
          %v995 = vunpack.c.l.b16 %v797
          %v996 = vunpack.c.l.b16 %v798
          %v997 = vunpack.c.l.b16 %v799
          %v998 = vunpack.c.l.b16 %v800
          %v999 = vunpack.c.l.b16 %v801
          %v1000 = vunpack.c.l.b16 %v802
          %v1001 = vunpack.c.l.b16 %v803
          %v1002 = vunpack.c.l.b16 %v804
          %v1003 = vunpack.c.l.b16 %v805
          %v1004 = vunpack.c.l.b16 %v806
          %v1005 = vunpack.c.l.b16 %v807
          %v1006 = vunpack.c.l.b16 %v808
          %v1007 = vunpack.c.l.b16 %v809
          %v1008 = vunpack.c.l.b16 %v810
          %v1009 = vunpack.c.l.b16 %v811
          %v1010 = vunpack.c.l.b16 %v812
          %v1011 = vunpack.c.l.b16 %v813
          %v1012 = vunpack.c.l.b16 %v814
          %v1013 = vunpack.c.l.b16 %v815
          %v1014 = vunpack.c.l.b16 %v816
          %v1015 = vunpack.c.l.b16 %v817
          %v1016 = vunpack.c.l.b16 %v818
          %v1017 = vunpack.c.l.b16 %v819
          %v1018 = vunpack.c.l.b16 %v820
          %v1019 = vunpack.c.l.b16 %v821
          %v1020 = vunpack.c.l.b16 %v822
          %v1021 = vunpack.c.l.b16 %v823
          %v1022 = vunpack.c.l.b16 %v824
          %v1023 = vunpack.c.l.b16 %v825
          %v1024 = vunpack.c.l.b16 %v826
          %v1025 = vunpack.c.l.b16 %v827
          %v1026 = vunpack.c.l.b16 %v828
          %v1027 = vunpack.c.l.b16 %v829
          %v1028 = vunpack.c.l.b16 %v830
          %v1029 = vunpack.c.l.b16 %v831
          %v1030 = vunpack.c.l.b16 %v832
          %v1031 = vunpack.c.l.b16 %v833
          %v1032 = vunpack.c.l.b16 %v834
          %v1033 = vunpack.c.l.b16 %v835
          %v1034 = vunpack.c.l.b16 %v836
          %v1035 = vunpack.c.l.b16 %v837
          %v1036 = vunpack.c.l.b16 %v838
          %v1037 = vunpack.c.l.b16 %v839
          %v1038 = vunpack.c.l.b16 %v840
          %v1039 = vunpack.c.l.b16 %v841
          %v1040 = vunpack.c.l.b16 %v842
          %v1041 = vunpack.c.l.b16 %v843
          %v1042 = vunpack.c.l.b16 %v844
          %v1043 = vunpack.c.l.b16 %v845
          %v1044 = vunpack.c.l.b16 %v846
          %v1045 = vunpack.c.l.b16 %v847
          %v1046 = vunpack.c.l.b16 %v848
          %v1047 = vunpack.c.l.b16 %v849
          %v1048 = vunpack.c.l.b16 %v850
          %v1049 = vunpack.c.l.b16 %v851
          %v1050 = vunpack.c.l.b16 %v852
          %v1051 = vunpack.c.l.b16 %v853
          %v1052 = vunpack.c.l.b16 %v854
          %v1053 = vunpack.c.l.b16 %v855
          %v1054 = vunpack.c.l.b16 %v856
          %v1055 = vunpack.c.l.b16 %v857
          %v1056 = vunpack.c.l.b16 %v858
          %v1057 = vunpack.c.l.b16 %v859
          %v1058 = vunpack.c.l.b16 %v860
          %v1059 = vunpack.c.l.b16 %v861
          %v1060 = vunpack.c.l.b16 %v862
          %v1061 = vunpack.c.l.b16 %v863
          %v1062 = vunpack.c.l.b16 %v864
          %v1063 = vunpack.c.l.b16 %v865
          %v1064 = vunpack.c.l.b16 %v866
          %v1065 = vunpack.c.l.b16 %v867
          %v1066 = vunpack.c.l.b16 %v868
          %v1067 = vunpack.c.l.b16 %v869
          %v1068 = vunpack.c.l.b16 %v870
          %v1069 = vunpack.c.l.b16 %v871
          %v1070 = vunpack.c.l.b16 %v872
          %v1071 = vunpack.c.l.b16 %v873
          %v1072 = vunpack.c.l.b16 %v874
          %v1073 = vunpack.c.l.b16 %v875
          %v1074 = vunpack.c.l.b16 %v876
          %v1075 = vunpack.c.l.b16 %v877
          %v1076 = vunpack.c.l.b16 %v878
          %v1077 = vunpack.c.l.b16 %v879
          %v1078 = vunpack.c.l.b16 %v880
          %v1079 = vunpack.c.l.b16 %v881
          %v1080 = vunpack.c.l.b16 %v882
          %v1081 = vunpack.c.l.b16 %v883
          %v1082 = vunpack.c.l.b16 %v884
          %v1083 = vunpack.c.l.b16 %v885
          %v1084 = vunpack.c.l.b16 %v886
          %v1085 = vunpack.c.l.b16 %v887
          %v1086 = vunpack.c.l.b16 %v888
          %v1087 = vunpack.c.l.b16 %v889
          %v1088 = vpack.c.b16 %v993, %v992
          %v1089 = vpack.c.b16 %v995, %v994
          %v1090 = vpack.c.b16 %v997, %v996
          %v1091 = vpack.c.b16 %v999, %v998
          %v1092 = vpack.c.b16 %v1001, %v1000
          %v1093 = vpack.c.b16 %v1003, %v1002
          %v1094 = vpack.c.b16 %v1005, %v1004
          %v1095 = vpack.c.b16 %v1007, %v1006
          %v1096 = vpack.c.b16 %v1009, %v1008
          %v1097 = vpack.c.b16 %v1011, %v1010
          %v1098 = vpack.c.b16 %v1013, %v1012
          %v1099 = vpack.c.b16 %v1015, %v1014
          %v1100 = vpack.c.b16 %v1017, %v1016
          %v1101 = vpack.c.b16 %v1019, %v1018
          %v1102 = vpack.c.b16 %v1021, %v1020
          %v1103 = vpack.c.b16 %v1023, %v1022
          %v1104 = vpack.c.b16 %v1025, %v1024
          %v1105 = vpack.c.b16 %v1027, %v1026
          %v1106 = vpack.c.b16 %v1029, %v1028
          %v1107 = vpack.c.b16 %v1031, %v1030
          %v1108 = vpack.c.b16 %v1033, %v1032
          %v1109 = vpack.c.b16 %v1035, %v1034
          %v1110 = vpack.c.b16 %v1037, %v1036
          %v1111 = vpack.c.b16 %v1039, %v1038
          %v1112 = vpack.c.b16 %v1041, %v1040
          %v1113 = vpack.c.b16 %v1043, %v1042
          %v1114 = vpack.c.b16 %v1045, %v1044
          %v1115 = vpack.c.b16 %v1047, %v1046
          %v1116 = vpack.c.b16 %v1049, %v1048
          %v1117 = vpack.c.b16 %v1051, %v1050
          %v1118 = vpack.c.b16 %v1053, %v1052
          %v1119 = vpack.c.b16 %v1055, %v1054
          %v1120 = vpack.c.b16 %v1057, %v1056
          %v1121 = vpack.c.b16 %v1059, %v1058
          %v1122 = vpack.c.b16 %v1061, %v1060
          %v1123 = vpack.c.b16 %v1063, %v1062
          %v1124 = vpack.c.b16 %v1065, %v1064
          %v1125 = vpack.c.b16 %v1067, %v1066
          %v1126 = vpack.c.b16 %v1069, %v1068
          %v1127 = vpack.c.b16 %v1071, %v1070
          %v1128 = vpack.c.b16 %v1073, %v1072
          %v1129 = vpack.c.b16 %v1075, %v1074
          %v1130 = vpack.c.b16 %v1077, %v1076
          %v1131 = vpack.c.b16 %v1079, %v1078
          %v1132 = vpack.c.b16 %v1081, %v1080
          %v1133 = vpack.c.b16 %v1083, %v1082
          %v1134 = vpack.c.b16 %v1085, %v1084
          %v1135 = vpack.c.b16 %v1087, %v1086
          %1184 = vmatprep.subr.bf16.mxu0 0
          %1185 = vmatpush1.bf16.msra.mxu0 %v1088
          %1186 = vmatprep.subr.bf16.mxu0 0
          %1187 = vmatpush1.bf16.msra.mxu0 %v1089
          %1188 = vmatprep.subr.bf16.mxu0 0
          %1189 = vmatpush1.bf16.msra.mxu0 %v1090
          %1190 = vmatprep.subr.bf16.mxu0 0
          %1191 = vmatpush1.bf16.msra.mxu0 %v1091
          %1192 = vmatprep.subr.bf16.mxu0 0
          %1193 = vmatpush1.bf16.msra.mxu0 %v1092
          %1194 = vmatprep.subr.bf16.mxu0 0
          %1195 = vmatpush1.bf16.msra.mxu0 %v1093
          %1196 = vmatprep.subr.bf16.mxu0 0
          %1197 = vmatpush1.bf16.msra.mxu0 %v1094
          %1198 = vmatprep.subr.bf16.mxu0 0
          %1199 = vmatpush1.bf16.msra.mxu0 %v1095
          %1200 = vmatprep.subr.bf16.mxu0 0
          %1201 = vmatpush1.bf16.msra.mxu0 %v1096
          %1202 = vmatprep.subr.bf16.mxu0 0
          %1203 = vmatpush1.bf16.msra.mxu0 %v1097
          %1204 = vmatprep.subr.bf16.mxu0 0
          %1205 = vmatpush1.bf16.msra.mxu0 %v1098
          %1206 = vmatprep.subr.bf16.mxu0 0
          %1207 = vmatpush1.bf16.msra.mxu0 %v1099
          %1208 = vmatprep.subr.bf16.mxu0 0
          %1209 = vmatpush1.bf16.msra.mxu0 %v1100
          %1210 = vmatprep.subr.bf16.mxu0 0
          %1211 = vmatpush1.bf16.msra.mxu0 %v1101
          %1212 = vmatprep.subr.bf16.mxu0 0
          %1213 = vmatpush1.bf16.msra.mxu0 %v1102
          %1214 = vmatprep.subr.bf16.mxu0 0
          %1215 = vmatpush1.bf16.msra.mxu0 %v1103
          %1216 = vmatprep.mubr.bf16.mxu0 %v777
          %1217 = vmatmul.mubr.bf16.gmra.mrb[0].mxu0 %v776
          %v1218 = vpop.f32.mrb[0].mxu0
          %v1219 = vadd.f32 %v890, %v1218
          %v1220 = vpop.f32.mrb[0].mxu0
          %v1221 = vpop.f32.mrb[0].mxu0
          %v1222 = vadd.f32 %v891, %v1221
          %v1223 = vpop.f32.mrb[0].mxu0
          %1224 = vmatprep.mubr.bf16.mxu0 %v783
          %1225 = vmatmul.mubr.bf16.gmra.mrb[0].mxu0 %v782
          %v1226 = vpop.f32.mrb[0].mxu0
          %v1227 = vadd.f32 %v892, %v1226
          %v1228 = vpop.f32.mrb[0].mxu0
          %v1229 = vpop.f32.mrb[0].mxu0
          %v1230 = vadd.f32 %v893, %v1229
          %v1231 = vpop.f32.mrb[0].mxu0
          %1232 = vmatprep.mubr.bf16.mxu0 %v789
          %1233 = vmatmul.mubr.bf16.gmra.mrb[0].mxu0 %v788
          %v1234 = vpop.f32.mrb[0].mxu0
          %v1235 = vadd.f32 %v894, %v1234
          %v1236 = vpop.f32.mrb[0].mxu0
          %v1237 = vpop.f32.mrb[0].mxu0
          %v1238 = vadd.f32 %v895, %v1237
          %v1239 = vpop.f32.mrb[0].mxu0
          %1240 = vdwg.mxu0
          %1241 = vmatprep.subr.bf16.mxu0 0
          %1242 = vmatpush1.bf16.msra.mxu0 %v1104
          %1243 = vmatprep.subr.bf16.mxu0 0
          %1244 = vmatpush1.bf16.msra.mxu0 %v1105
          %1245 = vmatprep.subr.bf16.mxu0 0
          %1246 = vmatpush1.bf16.msra.mxu0 %v1106
          %1247 = vmatprep.subr.bf16.mxu0 0
          %1248 = vmatpush1.bf16.msra.mxu0 %v1107
          %1249 = vmatprep.subr.bf16.mxu0 0
          %1250 = vmatpush1.bf16.msra.mxu0 %v1108
          %1251 = vmatprep.subr.bf16.mxu0 0
          %1252 = vmatpush1.bf16.msra.mxu0 %v1109
          %1253 = vmatprep.subr.bf16.mxu0 0
          %1254 = vmatpush1.bf16.msra.mxu0 %v1110
          %1255 = vmatprep.subr.bf16.mxu0 0
          %1256 = vmatpush1.bf16.msra.mxu0 %v1111
          %1257 = vmatprep.subr.bf16.mxu0 0
          %1258 = vmatpush1.bf16.msra.mxu0 %v1112
          %1259 = vmatprep.subr.bf16.mxu0 0
          %1260 = vmatpush1.bf16.msra.mxu0 %v1113
          %1261 = vmatprep.subr.bf16.mxu0 0
          %1262 = vmatpush1.bf16.msra.mxu0 %v1114
          %1263 = vmatprep.subr.bf16.mxu0 0
          %1264 = vmatpush1.bf16.msra.mxu0 %v1115
          %1265 = vmatprep.subr.bf16.mxu0 0
          %1266 = vmatpush1.bf16.msra.mxu0 %v1116
          %1267 = vmatprep.subr.bf16.mxu0 0
          %1268 = vmatpush1.bf16.msra.mxu0 %v1117
          %1269 = vmatprep.subr.bf16.mxu0 0
          %1270 = vmatpush1.bf16.msra.mxu0 %v1118
          %1271 = vmatprep.subr.bf16.mxu0 0
          %1272 = vmatpush1.bf16.msra.mxu0 %v1119
          %1273 = vmatprep.mubr.bf16.mxu0 %v779
          %1274 = vmatmul.mubr.bf16.gmra.mrb[0].mxu0 %v778
          %v1275 = vpop.f32.mrb[0].mxu0
          %v1276 = vadd.f32 %v1219, %v1275
          %v1277 = vpop.f32.mrb[0].mxu0
          %v1278 = vpop.f32.mrb[0].mxu0
          %v1279 = vadd.f32 %v1222, %v1278
          %v1280 = vpop.f32.mrb[0].mxu0
          %1281 = vmatprep.mubr.bf16.mxu0 %v785
          %1282 = vmatmul.mubr.bf16.gmra.mrb[0].mxu0 %v784
          %v1283 = vpop.f32.mrb[0].mxu0
          %v1284 = vadd.f32 %v1227, %v1283
          %v1285 = vpop.f32.mrb[0].mxu0
          %v1286 = vpop.f32.mrb[0].mxu0
          %v1287 = vadd.f32 %v1230, %v1286
          %v1288 = vpop.f32.mrb[0].mxu0
          %1289 = vmatprep.mubr.bf16.mxu0 %v791
          %1290 = vmatmul.mubr.bf16.gmra.mrb[0].mxu0 %v790
          %v1291 = vpop.f32.mrb[0].mxu0
          %v1292 = vadd.f32 %v1235, %v1291
          %v1293 = vpop.f32.mrb[0].mxu0
          %v1294 = vpop.f32.mrb[0].mxu0
          %v1295 = vadd.f32 %v1238, %v1294
          %v1296 = vpop.f32.mrb[0].mxu0
          %1297 = vdwg.mxu0
          %1298 = vmatprep.subr.bf16.mxu0 0
          %1299 = vmatpush1.bf16.msra.mxu0 %v1120
          %1300 = vmatprep.subr.bf16.mxu0 0
          %1301 = vmatpush1.bf16.msra.mxu0 %v1121
          %1302 = vmatprep.subr.bf16.mxu0 0
          %1303 = vmatpush1.bf16.msra.mxu0 %v1122
          %1304 = vmatprep.subr.bf16.mxu0 0
          %1305 = vmatpush1.bf16.msra.mxu0 %v1123
          %1306 = vmatprep.subr.bf16.mxu0 0
          %1307 = vmatpush1.bf16.msra.mxu0 %v1124
          %1308 = vmatprep.subr.bf16.mxu0 0
          %1309 = vmatpush1.bf16.msra.mxu0 %v1125
          %1310 = vmatprep.subr.bf16.mxu0 0
          %1311 = vmatpush1.bf16.msra.mxu0 %v1126
          %1312 = vmatprep.subr.bf16.mxu0 0
          %1313 = vmatpush1.bf16.msra.mxu0 %v1127
          %1314 = vmatprep.subr.bf16.mxu0 0
          %1315 = vmatpush1.bf16.msra.mxu0 %v1128
          %1316 = vmatprep.subr.bf16.mxu0 0
          %1317 = vmatpush1.bf16.msra.mxu0 %v1129
          %1318 = vmatprep.subr.bf16.mxu0 0
          %1319 = vmatpush1.bf16.msra.mxu0 %v1130
          %1320 = vmatprep.subr.bf16.mxu0 0
          %1321 = vmatpush1.bf16.msra.mxu0 %v1131
          %1322 = vmatprep.subr.bf16.mxu0 0
          %1323 = vmatpush1.bf16.msra.mxu0 %v1132
          %1324 = vmatprep.subr.bf16.mxu0 0
          %1325 = vmatpush1.bf16.msra.mxu0 %v1133
          %1326 = vmatprep.subr.bf16.mxu0 0
          %1327 = vmatpush1.bf16.msra.mxu0 %v1134
          %1328 = vmatprep.subr.bf16.mxu0 0
          %1329 = vmatpush1.bf16.msra.mxu0 %v1135
          %1330 = vmatprep.mubr.bf16.mxu0 %v781
          %1331 = vmatmul.mubr.bf16.gmra.mrb[0].mxu0 %v780
          %v1332 = vpop.f32.mrb[0].mxu0
          %v1333 = vadd.f32 %v1276, %v1332
          %v1334 = vpop.f32.mrb[0].mxu0
          %v1335 = vpop.f32.mrb[0].mxu0
          %v1336 = vadd.f32 %v1279, %v1335
          %v1337 = vpop.f32.mrb[0].mxu0
          %1338 = vmatprep.mubr.bf16.mxu0 %v787
          %1339 = vmatmul.mubr.bf16.gmra.mrb[0].mxu0 %v786
          %v1340 = vpop.f32.mrb[0].mxu0
          %v1341 = vadd.f32 %v1284, %v1340
          %v1342 = vpop.f32.mrb[0].mxu0
          %v1343 = vpop.f32.mrb[0].mxu0
          %v1344 = vadd.f32 %v1287, %v1343
          %v1345 = vpop.f32.mrb[0].mxu0
          %1346 = vmatprep.mubr.bf16.mxu0 %v793
          %1347 = vmatmul.mubr.bf16.gmra.mrb[0].mxu0 %v792
          %v1348 = vpop.f32.mrb[0].mxu0
          %v1349 = vadd.f32 %v1292, %v1348
          %v1350 = vpop.f32.mrb[0].mxu0
          %v1351 = vpop.f32.mrb[0].mxu0
          %v1352 = vadd.f32 %v1295, %v1351
          %v1353 = vpop.f32.mrb[0].mxu0
          %1354 = vdwg.mxu0
          %1355 = vst [vmem:[#allocation2] sm:$0xff] %v1333
          %1356 = vst [vmem:[#allocation2 + $0x8] sm:$0xff] %v1336
          %1357 = vst [vmem:[#allocation2 + $0x10] sm:$0xff] %v1341
          %1358 = vst [vmem:[#allocation2 + $0x18] sm:$0xff] %v1344
          %1359 = vst [vmem:[#allocation2 + $0x20] sm:$0xff] %v1349
          %1360 = vst [vmem:[#allocation2 + $0x28] sm:$0xff] %v1352
        $region100: #{encoder_forward.1} parent=79 // pred_fallthru
          _
        %v1361 = vld [vmem:[#allocation2] sm:$0xff]
        %v1362 = vld [vmem:[#allocation2 + $0x8] sm:$0xff]
        %v1363 = vld [vmem:[#allocation2 + $0x10] sm:$0xff]
        %v1364 = vld [vmem:[#allocation2 + $0x18] sm:$0xff]
        %v1365 = vld [vmem:[#allocation2 + $0x20] sm:$0xff]
        %v1366 = vld [vmem:[#allocation2 + $0x28] sm:$0xff]
        %v1367 = vld [vmem:[%s705] sm:$0x1]
        %v1368 = vld [vmem:[%s708] sm:$0x1]
        %1369 = vadd.xlane.f32.xlu0 %v1361
        %v1370 = vpop.xlane.xlu0 %1369
        %1371 = vadd.xlane.f32.xlu0 %v1362
        %v1372 = vpop.xlane.xlu0 %1371
        %1373 = vadd.xlane.f32.xlu0 %v1363
        %v1374 = vpop.xlane.xlu0 %1373
        %1375 = vadd.xlane.f32.xlu0 %v1364
        %v1376 = vpop.xlane.xlu0 %1375
        %1377 = vadd.xlane.f32.xlu0 %v1365
        %v1378 = vpop.xlane.xlu0 %1377
        %1379 = vadd.xlane.f32.xlu0 %v1366
        %v1380 = vpop.xlane.xlu0 %1379
        %v1381 = vrcp.pop 128.0
        %v1382 = vmul.f32 %v1370, %v1381
        %v1383 = vmul.f32 %v1372, %v1381
        %v1384 = vmul.f32 %v1374, %v1381
        %v1385 = vmul.f32 %v1376, %v1381
        %v1386 = vmul.f32 %v1378, %v1381
        %v1387 = vmul.f32 %v1380, %v1381
        %v1388 = vsub.f32 %v1361, %v1382
        %v1389 = vsub.f32 %v1362, %v1383
        %v1390 = vsub.f32 %v1363, %v1384
        %v1391 = vsub.f32 %v1364, %v1385
        %v1392 = vsub.f32 %v1365, %v1386
        %v1393 = vsub.f32 %v1366, %v1387
        %v1394 = vmul.f32 %v1388, %v1388
        %v1395 = vmul.f32 %v1389, %v1389
        %v1396 = vmul.f32 %v1390, %v1390
        %v1397 = vmul.f32 %v1391, %v1391
        %v1398 = vmul.f32 %v1392, %v1392
        %v1399 = vmul.f32 %v1393, %v1393
        %1400 = vadd.xlane.f32.xlu0 %v1394
        %v1401 = vpop.xlane.xlu0 %1400
        %1402 = vadd.xlane.f32.xlu0 %v1395
        %v1403 = vpop.xlane.xlu0 %1402
        %1404 = vadd.xlane.f32.xlu0 %v1396
        %v1405 = vpop.xlane.xlu0 %1404
        %1406 = vadd.xlane.f32.xlu0 %v1397
        %v1407 = vpop.xlane.xlu0 %1406
        %1408 = vadd.xlane.f32.xlu0 %v1398
        %v1409 = vpop.xlane.xlu0 %1408
        %1410 = vadd.xlane.f32.xlu0 %v1399
        %v1411 = vpop.xlane.xlu0 %1410
        %v1412 = vmul.f32 %v1401, %v1381
        %v1413 = vmul.f32 %v1403, %v1381
        %v1414 = vmul.f32 %v1405, %v1381
        %v1415 = vmul.f32 %v1407, %v1381
        %v1416 = vmul.f32 %v1409, %v1381
        %v1417 = vmul.f32 %v1411, %v1381
        %v1418 = vadd.f32 %v1412, 1e-06
        %v1419 = vadd.f32 %v1413, 1e-06
        %v1420 = vadd.f32 %v1414, 1e-06
        %v1421 = vadd.f32 %v1415, 1e-06
        %v1422 = vadd.f32 %v1416, 1e-06
        %v1423 = vadd.f32 %v1417, 1e-06
        %v1424 = vrsqrt.pop %v1418
        %v1425 = vrsqrt.pop %v1419
        %v1426 = vrsqrt.pop %v1420
        %v1427 = vrsqrt.pop %v1421
        %v1428 = vrsqrt.pop %v1422
        %v1429 = vrsqrt.pop %v1423
        %v1430 = vmul.f32 %v1388, %v1424
        %v1431 = vmul.f32 %v1389, %v1425
        %v1432 = vmul.f32 %v1390, %v1426
        %v1433 = vmul.f32 %v1391, %v1427
        %v1434 = vmul.f32 %v1392, %v1428
        %v1435 = vmul.f32 %v1393, %v1429
        %v1437 = vlaneseq
        %v1438 = vshrl.u32 %v1437, 7
        %v1439 = vsub.s32 0, %v1438
        %v1440 = vrot.slane %v1367, %v1439
        %v1442 = vmul.f32 %v1430, %v1440
        %v1443 = vmul.f32 %v1431, %v1440
        %v1444 = vmul.f32 %v1432, %v1440
        %v1445 = vmul.f32 %v1433, %v1440
        %v1446 = vmul.f32 %v1434, %v1440
        %v1447 = vmul.f32 %v1435, %v1440
        %v1449 = vlaneseq
        %v1450 = vshrl.u32 %v1449, 7
        %v1451 = vsub.s32 0, %v1450
        %v1452 = vrot.slane %v1368, %v1451
        %v1454 = vadd.f32 %v1442, %v1452
        %v1455 = vadd.f32 %v1443, %v1452
        %v1456 = vadd.f32 %v1444, %v1452
        %v1457 = vadd.f32 %v1445, %v1452
        %v1458 = vadd.f32 %v1446, %v1452
        %v1459 = vadd.f32 %v1447, %v1452
        %v1460 = vpack.c.bf16 %v1455, %v1454
        %v1461 = vpack.c.bf16 %v1457, %v1456
        %v1462 = vpack.c.bf16 %v1459, %v1458
        %v1463 = vld [vmem:[%s593] sm:$0xff]
        %v1464 = vld [vmem:[%s593 + $0x8] sm:$0xf]
        %v1465 = vld [vmem:[%s593 + $0xc] sm:$0xff]
        %v1466 = vld [vmem:[%s593 + $0x14] sm:$0xf]
        %v1467 = vld [vmem:[%s593 + $0x18] sm:$0xff]
        %v1468 = vld [vmem:[%s593 + $0x20] sm:$0xf]
        %v1469 = vld [vmem:[%s593 + $0x24] sm:$0xff]
        %v1470 = vld [vmem:[%s593 + $0x2c] sm:$0xf]
        %v1471 = vld [vmem:[%s593 + $0x30] sm:$0xff]
        %v1472 = vld [vmem:[%s593 + $0x38] sm:$0xf]
        %v1473 = vld [vmem:[%s593 + $0x3c] sm:$0xff]
        %v1474 = vld [vmem:[%s593 + $0x44] sm:$0xf]
        %v1475 = vld [vmem:[%s593 + $0x48] sm:$0xff]
        %v1476 = vld [vmem:[%s593 + $0x50] sm:$0xf]
        %v1477 = vld [vmem:[%s593 + $0x54] sm:$0xff]
        %v1478 = vld [vmem:[%s593 + $0x5c] sm:$0xf]
        %v1479 = vld [vmem:[%s593 + $0x60] sm:$0xff]
        %v1480 = vld [vmem:[%s593 + $0x68] sm:$0xf]
        %v1481 = vld [vmem:[%s593 + $0x6c] sm:$0xff]
        %v1482 = vld [vmem:[%s593 + $0x74] sm:$0xf]
        %v1483 = vld [vmem:[%s593 + $0x78] sm:$0xff]
        %v1484 = vld [vmem:[%s593 + $0x80] sm:$0xf]
        %v1485 = vld [vmem:[%s593 + $0x84] sm:$0xff]
        %v1486 = vld [vmem:[%s593 + $0x8c] sm:$0xf]
        %v1487 = vld [vmem:[%s593 + $0x90] sm:$0xff]
        %v1488 = vld [vmem:[%s593 + $0x98] sm:$0xf]
        %v1489 = vld [vmem:[%s593 + $0x9c] sm:$0xff]
        %v1490 = vld [vmem:[%s593 + $0xa4] sm:$0xf]
        %v1491 = vld [vmem:[%s593 + $0xa8] sm:$0xff]
        %v1492 = vld [vmem:[%s593 + $0xb0] sm:$0xf]
        %v1493 = vld [vmem:[%s593 + $0xb4] sm:$0xff]
        %v1494 = vld [vmem:[%s593 + $0xbc] sm:$0xf]
        %v1495 = vld [vmem:[%s712] sm:$0x7]
        %v1497 = vlaneseq
        %v1498 = vshrl.u32 %v1497, 7
        %v1499 = vsub.s32 0, %v1498
        %v1500 = vrot.slane %v1495, %v1499
        %v1501 = vlaneseq
        %v1502 = vshrl.u32 %v1501, 7
        %v1503 = vsub.s32 1, %v1502
        %v1504 = vrot.slane %v1495, %v1503
        %v1505 = vlaneseq
        %v1506 = vshrl.u32 %v1505, 7
        %v1507 = vsub.s32 2, %v1506
        %v1508 = vrot.slane %v1495, %v1507
        %v1544 = vunpack.c.l.b16 %v1463
        %v1545 = vunpack.c.h.b16 %v1463
        %v1546 = vunpack.c.l.b16 %v1464
        %v1547 = vunpack.c.l.b16 %v1465
        %v1548 = vunpack.c.h.b16 %v1465
        %v1549 = vunpack.c.l.b16 %v1466
        %v1550 = vunpack.c.l.b16 %v1467
        %v1551 = vunpack.c.h.b16 %v1467
        %v1552 = vunpack.c.l.b16 %v1468
        %v1553 = vunpack.c.l.b16 %v1469
        %v1554 = vunpack.c.h.b16 %v1469
        %v1555 = vunpack.c.l.b16 %v1470
        %v1556 = vunpack.c.l.b16 %v1471
        %v1557 = vunpack.c.h.b16 %v1471
        %v1558 = vunpack.c.l.b16 %v1472
        %v1559 = vunpack.c.l.b16 %v1473
        %v1560 = vunpack.c.h.b16 %v1473
        %v1561 = vunpack.c.l.b16 %v1474
        %v1562 = vunpack.c.l.b16 %v1475
        %v1563 = vunpack.c.h.b16 %v1475
        %v1564 = vunpack.c.l.b16 %v1476
        %v1565 = vunpack.c.l.b16 %v1477
        %v1566 = vunpack.c.h.b16 %v1477
        %v1567 = vunpack.c.l.b16 %v1478
        %v1568 = vunpack.c.l.b16 %v1479
        %v1569 = vunpack.c.h.b16 %v1479
        %v1570 = vunpack.c.l.b16 %v1480
        %v1571 = vunpack.c.l.b16 %v1481
        %v1572 = vunpack.c.h.b16 %v1481
        %v1573 = vunpack.c.l.b16 %v1482
        %v1574 = vunpack.c.l.b16 %v1483
        %v1575 = vunpack.c.h.b16 %v1483
        %v1576 = vunpack.c.l.b16 %v1484
        %v1577 = vunpack.c.l.b16 %v1485
        %v1578 = vunpack.c.h.b16 %v1485
        %v1579 = vunpack.c.l.b16 %v1486
        %v1580 = vunpack.c.l.b16 %v1487
        %v1581 = vunpack.c.h.b16 %v1487
        %v1582 = vunpack.c.l.b16 %v1488
        %v1583 = vunpack.c.l.b16 %v1489
        %v1584 = vunpack.c.h.b16 %v1489
        %v1585 = vunpack.c.l.b16 %v1490
        %v1586 = vunpack.c.l.b16 %v1491
        %v1587 = vunpack.c.h.b16 %v1491
        %v1588 = vunpack.c.l.b16 %v1492
        %v1589 = vunpack.c.l.b16 %v1493
        %v1590 = vunpack.c.h.b16 %v1493
        %v1591 = vunpack.c.l.b16 %v1494
        %v1592 = vpack.c.b16 %v1547, %v1544
        %v1593 = vpack.c.b16 %v1548, %v1545
        %v1594 = vpack.c.b16 %v1549, %v1546
        %v1595 = vpack.c.b16 %v1553, %v1550
        %v1596 = vpack.c.b16 %v1554, %v1551
        %v1597 = vpack.c.b16 %v1555, %v1552
        %v1598 = vpack.c.b16 %v1559, %v1556
        %v1599 = vpack.c.b16 %v1560, %v1557
        %v1600 = vpack.c.b16 %v1561, %v1558
        %v1601 = vpack.c.b16 %v1565, %v1562
        %v1602 = vpack.c.b16 %v1566, %v1563
        %v1603 = vpack.c.b16 %v1567, %v1564
        %v1604 = vpack.c.b16 %v1571, %v1568
        %v1605 = vpack.c.b16 %v1572, %v1569
        %v1606 = vpack.c.b16 %v1573, %v1570
        %v1607 = vpack.c.b16 %v1577, %v1574
        %v1608 = vpack.c.b16 %v1578, %v1575
        %v1609 = vpack.c.b16 %v1579, %v1576
        %v1610 = vpack.c.b16 %v1583, %v1580
        %v1611 = vpack.c.b16 %v1584, %v1581
        %v1612 = vpack.c.b16 %v1585, %v1582
        %v1613 = vpack.c.b16 %v1589, %v1586
        %v1614 = vpack.c.b16 %v1590, %v1587
        %v1615 = vpack.c.b16 %v1591, %v1588
        %1640 = vmatprep.subr.bf16.mxu0 %v1593
        %1641 = vmatpush1.bf16.msra.mxu0 %v1592
        %1642 = vmatprep.subr.bf16.mxu0 %v1596
        %1643 = vmatpush1.bf16.msra.mxu0 %v1595
        %1644 = vmatprep.subr.bf16.mxu0 %v1599
        %1645 = vmatpush1.bf16.msra.mxu0 %v1598
        %1646 = vmatprep.subr.bf16.mxu0 %v1602
        %1647 = vmatpush1.bf16.msra.mxu0 %v1601
        %1648 = vmatprep.subr.bf16.mxu0 %v1605
        %1649 = vmatpush1.bf16.msra.mxu0 %v1604
        %1650 = vmatprep.subr.bf16.mxu0 %v1608
        %1651 = vmatpush1.bf16.msra.mxu0 %v1607
        %1652 = vmatprep.subr.bf16.mxu0 %v1611
        %1653 = vmatpush1.bf16.msra.mxu0 %v1610
        %1654 = vmatprep.subr.bf16.mxu0 %v1614
        %1655 = vmatpush1.bf16.msra.mxu0 %v1613
        %1656 = vmatprep.subr.bf16.mxu0 0
        %1657 = vmatpush1.bf16.msra.mxu0 0
        %1658 = vmatprep.subr.bf16.mxu0 0
        %1659 = vmatpush1.bf16.msra.mxu0 0
        %1660 = vmatprep.subr.bf16.mxu0 0
        %1661 = vmatpush1.bf16.msra.mxu0 0
        %1662 = vmatprep.subr.bf16.mxu0 0
        %1663 = vmatpush1.bf16.msra.mxu0 0
        %1664 = vmatprep.subr.bf16.mxu0 0
        %1665 = vmatpush1.bf16.msra.mxu0 0
        %1666 = vmatprep.subr.bf16.mxu0 0
        %1667 = vmatpush1.bf16.msra.mxu0 0
        %1668 = vmatprep.subr.bf16.mxu0 0
        %1669 = vmatpush1.bf16.msra.mxu0 0
        %1670 = vmatprep.subr.bf16.mxu0 0
        %1671 = vmatpush1.bf16.msra.mxu0 0
        %1672 = vmatprep.mubr.bf16.mxu0 0
        %1673 = vmatmul.mubr.bf16.gmra.mrb[0].mxu0 %v1460
        %v1674 = vpop.f32.mrb[0].mxu0
        %v1675 = vadd.f32 %v1500, %v1674
        %v1676 = vpop.f32.mrb[0].mxu0
        %v1677 = vadd.f32 %v1504, %v1676
        %v1678 = vpop.f32.mrb[0].mxu0
        %v1679 = vadd.f32 %v1500, %v1678
        %v1680 = vpop.f32.mrb[0].mxu0
        %v1681 = vadd.f32 %v1504, %v1680
        %1682 = vmatprep.mubr.bf16.mxu0 0
        %1683 = vmatmul.mubr.bf16.gmra.mrb[0].mxu0 %v1461
        %v1684 = vpop.f32.mrb[0].mxu0
        %v1685 = vadd.f32 %v1500, %v1684
        %v1686 = vpop.f32.mrb[0].mxu0
        %v1687 = vadd.f32 %v1504, %v1686
        %v1688 = vpop.f32.mrb[0].mxu0
        %v1689 = vadd.f32 %v1500, %v1688
        %v1690 = vpop.f32.mrb[0].mxu0
        %v1691 = vadd.f32 %v1504, %v1690
        %1692 = vmatprep.mubr.bf16.mxu0 0
        %1693 = vmatmul.mubr.bf16.gmra.mrb[0].mxu0 %v1462
        %v1694 = vpop.f32.mrb[0].mxu0
        %v1695 = vadd.f32 %v1500, %v1694
        %v1696 = vpop.f32.mrb[0].mxu0
        %v1697 = vadd.f32 %v1504, %v1696
        %v1698 = vpop.f32.mrb[0].mxu0
        %v1699 = vadd.f32 %v1500, %v1698
        %v1700 = vpop.f32.mrb[0].mxu0
        %v1701 = vadd.f32 %v1504, %v1700
        %1702 = vdwg.mxu0
        %1703 = vmatprep.subr.bf16.mxu0 0
        %1704 = vmatpush1.bf16.msra.mxu0 %v1594
        %1705 = vmatprep.subr.bf16.mxu0 0
        %1706 = vmatpush1.bf16.msra.mxu0 %v1597
        %1707 = vmatprep.subr.bf16.mxu0 0
        %1708 = vmatpush1.bf16.msra.mxu0 %v1600
        %1709 = vmatprep.subr.bf16.mxu0 0
        %1710 = vmatpush1.bf16.msra.mxu0 %v1603
        %1711 = vmatprep.subr.bf16.mxu0 0
        %1712 = vmatpush1.bf16.msra.mxu0 %v1606
        %1713 = vmatprep.subr.bf16.mxu0 0
        %1714 = vmatpush1.bf16.msra.mxu0 %v1609
        %1715 = vmatprep.subr.bf16.mxu0 0
        %1716 = vmatpush1.bf16.msra.mxu0 %v1612
        %1717 = vmatprep.subr.bf16.mxu0 0
        %1718 = vmatpush1.bf16.msra.mxu0 %v1615
        %1719 = vmatprep.subr.bf16.mxu0 0
        %1720 = vmatpush1.bf16.msra.mxu0 0
        %1721 = vmatprep.subr.bf16.mxu0 0
        %1722 = vmatpush1.bf16.msra.mxu0 0
        %1723 = vmatprep.subr.bf16.mxu0 0
        %1724 = vmatpush1.bf16.msra.mxu0 0
        %1725 = vmatprep.subr.bf16.mxu0 0
        %1726 = vmatpush1.bf16.msra.mxu0 0
        %1727 = vmatprep.subr.bf16.mxu0 0
        %1728 = vmatpush1.bf16.msra.mxu0 0
        %1729 = vmatprep.subr.bf16.mxu0 0
        %1730 = vmatpush1.bf16.msra.mxu0 0
        %1731 = vmatprep.subr.bf16.mxu0 0
        %1732 = vmatpush1.bf16.msra.mxu0 0
        %1733 = vmatprep.subr.bf16.mxu0 0
        %1734 = vmatpush1.bf16.msra.mxu0 0
        %1735 = vmatprep.mubr.bf16.mxu0 0
        %1736 = vmatmul.mubr.bf16.gmra.mrb[0].mxu0 %v1460
        %v1737 = vpop.f32.mrb[0].mxu0
        %v1738 = vadd.f32 %v1508, %v1737
        %v1739 = vpop.f32.mrb[0].mxu0
        %v1740 = vpop.f32.mrb[0].mxu0
        %v1741 = vadd.f32 %v1508, %v1740
        %v1742 = vpop.f32.mrb[0].mxu0
        %1743 = vmatprep.mubr.bf16.mxu0 0
        %1744 = vmatmul.mubr.bf16.gmra.mrb[0].mxu0 %v1461
        %v1745 = vpop.f32.mrb[0].mxu0
        %v1746 = vadd.f32 %v1508, %v1745
        %v1747 = vpop.f32.mrb[0].mxu0
        %v1748 = vpop.f32.mrb[0].mxu0
        %v1749 = vadd.f32 %v1508, %v1748
        %v1750 = vpop.f32.mrb[0].mxu0
        %1751 = vmatprep.mubr.bf16.mxu0 0
        %1752 = vmatmul.mubr.bf16.gmra.mrb[0].mxu0 %v1462
        %v1753 = vpop.f32.mrb[0].mxu0
        %v1754 = vadd.f32 %v1508, %v1753
        %v1755 = vpop.f32.mrb[0].mxu0
        %v1756 = vpop.f32.mrb[0].mxu0
        %v1757 = vadd.f32 %v1508, %v1756
        %v1758 = vpop.f32.mrb[0].mxu0
        %1759 = vdwg.mxu0
        %v1760 = vlaneseq
        %v1761 = vand.u32 %v1760, 127
        %vm1762 = vcmp.lt.s32.totalorder %v1761, 17
        %v1763 = vld [vmem:[%s717] sm:$0xf]
        %v1764 = vld [vmem:[%s717 + $0x4] sm:$0xf]
        %v1765 = vld [vmem:[%s717 + $0x8] sm:$0xf]
        %v1766 = vld [vmem:[%s717 + $0xc] sm:$0xf]
        %v1767 = vld [vmem:[%s717 + $0x10] sm:$0xf]
        %v1768 = vld [vmem:[%s717 + $0x14] sm:$0xf]
        %v1769 = vld [vmem:[%s717 + $0x18] sm:$0xf]
        %v1770 = vld [vmem:[%s717 + $0x1c] sm:$0xf]
        %v1771 = vld [vmem:[%s717 + $0x20] sm:$0xf]
        %v1772 = vld [vmem:[%s717 + $0x24] sm:$0xf]
        %v1773 = vld [vmem:[%s717 + $0x28] sm:$0xf]
        %v1774 = vld [vmem:[%s717 + $0x2c] sm:$0xf]
        %v1775 = vld [vmem:[%s717 + $0x30] sm:$0xf]
        %v1776 = vld [vmem:[%s717 + $0x34] sm:$0xf]
        %v1777 = vld [vmem:[%s717 + $0x38] sm:$0xf]
        %v1778 = vld [vmem:[%s717 + $0x3c] sm:$0xf]
        %v1779 = vpack.c.bf16 %v1679, %v1675
        %v1780 = vpack.c.bf16 %v1685, %v1685
        %v1781 = vpack.c.bf16 %v1695, %v1689
        %v1782 = vpack.c.bf16 %v1699, %v1699
        %v1783 = vpack.c.bf16 %v1681, %v1677
        %v1784 = vpack.c.bf16 %v1687, %v1687
        %v1785 = vpack.c.bf16 %v1697, %v1691
        %v1786 = vpack.c.bf16 %v1701, %v1701
        %v1787 = vpack.c.bf16 %v1741, %v1738
        %v1788 = vpack.c.bf16 %v1746, %v1746
        %v1789 = vpack.c.bf16 %v1754, %v1749
        %v1790 = vpack.c.bf16 %v1757, %v1757
        %vm1791 = vcmask 523264
        %v1793 = vsel %vm1791, %v1779, 0
        %v1796 = vsel %vm1791, %v1780, 0
        %v1799 = vsel %vm1791, %v1783, 0
        %v1802 = vsel %vm1791, %v1784, 0
        %1804 = vmatprep.subr.bf16.mxu0 0
        %1805 = vmatpush1.bf16.xpose.msra.mxu0 %v1799
        %1806 = vmatprep.subr.bf16.mxu0 0
        %1807 = vmatpush1.bf16.xpose.msra.mxu0 %v1802
        %1808 = vmatprep.subr.bf16.mxu0 0
        %1809 = vmatpush1.bf16.xpose.msra.mxu0 0
        %1810 = vmatprep.subr.bf16.mxu0 0
        %1811 = vmatpush1.bf16.xpose.msra.mxu0 0
        %1812 = vmatprep.subr.bf16.mxu0 0
        %1813 = vmatpush1.bf16.xpose.msra.mxu0 0
        %1814 = vmatprep.subr.bf16.mxu0 0
        %1815 = vmatpush1.bf16.xpose.msra.mxu0 0
        %1816 = vmatprep.subr.bf16.mxu0 0
        %1817 = vmatpush1.bf16.xpose.msra.mxu0 0
        %1818 = vmatprep.subr.bf16.mxu0 0
        %1819 = vmatpush1.bf16.xpose.msra.mxu0 0
        %1820 = vmatprep.subr.bf16.mxu0 0
        %1821 = vmatpush1.bf16.xpose.msra.mxu0 0
        %1822 = vmatprep.subr.bf16.mxu0 0
        %1823 = vmatpush1.bf16.xpose.msra.mxu0 0
        %1824 = vmatprep.subr.bf16.mxu0 0
        %1825 = vmatpush1.bf16.xpose.msra.mxu0 0
        %1826 = vmatprep.subr.bf16.mxu0 0
        %1827 = vmatpush1.bf16.xpose.msra.mxu0 0
        %1828 = vmatprep.subr.bf16.mxu0 0
        %1829 = vmatpush1.bf16.xpose.msra.mxu0 0
        %1830 = vmatprep.subr.bf16.mxu0 0
        %1831 = vmatpush1.bf16.xpose.msra.mxu0 0
        %1832 = vmatprep.subr.bf16.mxu0 0
        %1833 = vmatpush1.bf16.xpose.msra.mxu0 0
        %1834 = vmatprep.subr.bf16.mxu0 0
        %1835 = vmatpush1.bf16.xpose.msra.mxu0 0
        %1836 = vmatprep.mubr.bf16.mxu0 0
        %1837 = vmatmul.mubr.bf16.gmra.mrb[0].mxu0 %v1793
        %v1838 = vpop.f32.mrb[0].mxu0
        %v1839 = vadd.f32 0.0, %v1838
        %v1840 = vpop.f32.mrb[0].mxu0
        %v1841 = vpop.f32.mrb[0].mxu0
        %v1842 = vadd.f32 0.0, %v1841
        %v1843 = vpop.f32.mrb[0].mxu0
        %1844 = vmatprep.mubr.bf16.mxu0 0
        %1845 = vmatmul.mubr.bf16.gmra.mrb[0].mxu0 %v1796
        %v1846 = vpop.f32.mrb[0].mxu0
        %v1847 = vadd.f32 0.0, %v1846
        %v1848 = vpop.f32.mrb[0].mxu0
        %v1849 = vpop.f32.mrb[0].mxu0
        %v1850 = vpop.f32.mrb[0].mxu0
        %1851 = vdwg.mxu0
        %v1853 = vsel %vm1791, %v1781, 0
        %v1856 = vsel %vm1791, %v1782, 0
        %v1859 = vsel %vm1791, %v1785, 0
        %v1862 = vsel %vm1791, %v1786, 0
        %1864 = vmatprep.subr.bf16.mxu0 0
        %1865 = vmatpush1.bf16.xpose.msra.mxu0 %v1859
        %1866 = vmatprep.subr.bf16.mxu0 0
        %1867 = vmatpush1.bf16.xpose.msra.mxu0 %v1862
        %1868 = vmatprep.subr.bf16.mxu0 0
        %1869 = vmatpush1.bf16.xpose.msra.mxu0 0
        %1870 = vmatprep.subr.bf16.mxu0 0
        %1871 = vmatpush1.bf16.xpose.msra.mxu0 0
        %1872 = vmatprep.subr.bf16.mxu0 0
        %1873 = vmatpush1.bf16.xpose.msra.mxu0 0
        %1874 = vmatprep.subr.bf16.mxu0 0
        %1875 = vmatpush1.bf16.xpose.msra.mxu0 0
        %1876 = vmatprep.subr.bf16.mxu0 0
        %1877 = vmatpush1.bf16.xpose.msra.mxu0 0
        %1878 = vmatprep.subr.bf16.mxu0 0
        %1879 = vmatpush1.bf16.xpose.msra.mxu0 0
        %1880 = vmatprep.subr.bf16.mxu0 0
        %1881 = vmatpush1.bf16.xpose.msra.mxu0 0
        %1882 = vmatprep.subr.bf16.mxu0 0
        %1883 = vmatpush1.bf16.xpose.msra.mxu0 0
        %1884 = vmatprep.subr.bf16.mxu0 0
        %1885 = vmatpush1.bf16.xpose.msra.mxu0 0
        %1886 = vmatprep.subr.bf16.mxu0 0
        %1887 = vmatpush1.bf16.xpose.msra.mxu0 0
        %1888 = vmatprep.subr.bf16.mxu0 0
        %1889 = vmatpush1.bf16.xpose.msra.mxu0 0
        %1890 = vmatprep.subr.bf16.mxu0 0
        %1891 = vmatpush1.bf16.xpose.msra.mxu0 0
        %1892 = vmatprep.subr.bf16.mxu0 0
        %1893 = vmatpush1.bf16.xpose.msra.mxu0 0
        %1894 = vmatprep.subr.bf16.mxu0 0
        %1895 = vmatpush1.bf16.xpose.msra.mxu0 0
        %1896 = vmatprep.mubr.bf16.mxu0 0
        %1897 = vmatmul.mubr.bf16.gmra.mrb[0].mxu0 %v1853
        %v1898 = vpop.f32.mrb[0].mxu0
        %v1899 = vadd.f32 0.0, %v1898
        %v1900 = vpop.f32.mrb[0].mxu0
        %v1901 = vpop.f32.mrb[0].mxu0
        %v1902 = vadd.f32 0.0, %v1901
        %v1903 = vpop.f32.mrb[0].mxu0
        %1904 = vmatprep.mubr.bf16.mxu0 0
        %1905 = vmatmul.mubr.bf16.gmra.mrb[0].mxu0 %v1856
        %v1906 = vpop.f32.mrb[0].mxu0
        %v1907 = vadd.f32 0.0, %v1906
        %v1908 = vpop.f32.mrb[0].mxu0
        %v1909 = vpop.f32.mrb[0].mxu0
        %v1910 = vpop.f32.mrb[0].mxu0
        %1911 = vdwg.mxu0
        %v1912 = vsel %vm1762, 1, 0
        %vm1913 = vcmp.eq.s32.totalorder %v1912, 1
        %v1914 = vsel %vm1913, %v1839, -1e+30
        %v1915 = vsel %vm1913, %v1842, -1e+30
        %v1916 = vsel %vm1913, %v1847, -1e+30
        %v1917 = vsel %vm1913, %v1899, -1e+30
        %v1918 = vsel %vm1913, %v1902, -1e+30
        %v1919 = vsel %vm1913, %v1907, -1e+30
        %vm1920 = vcmask 195584
        %v1921 = vsel %vm1920, %v1914, -inf
        %1922 = vmax.xlane.f32.xlu0 %v1921
        %v1923 = vpop.xlane.xlu0 %1922
        %v1924 = vsel %vm1920, %v1915, -inf
        %1925 = vmax.xlane.f32.xlu0 %v1924
        %v1926 = vpop.xlane.xlu0 %1925
        %v1927 = vsel %vm1920, %v1916, -inf
        %1928 = vmax.xlane.f32.xlu0 %v1927
        %v1929 = vpop.xlane.xlu0 %1928
        %v1930 = vsel %vm1920, %v1917, -inf
        %1931 = vmax.xlane.f32.xlu0 %v1930
        %v1932 = vpop.xlane.xlu0 %1931
        %v1933 = vsel %vm1920, %v1918, -inf
        %1934 = vmax.xlane.f32.xlu0 %v1933
        %v1935 = vpop.xlane.xlu0 %1934
        %v1936 = vsel %vm1920, %v1919, -inf
        %1937 = vmax.xlane.f32.xlu0 %v1936
        %v1938 = vpop.xlane.xlu0 %1937
        %v1939 = vsub.f32 %v1914, %v1923
        %v1940 = vsub.f32 %v1915, %v1926
        %v1941 = vsub.f32 %v1916, %v1929
        %v1942 = vsub.f32 %v1917, %v1932
        %v1943 = vsub.f32 %v1918, %v1935
        %v1944 = vsub.f32 %v1919, %v1938
        %v1945 = vmul.f32 %v1939, 1.442695
        %v1946 = vpow.pop %v1945
        %v1947 = vmul.f32 %v1940, 1.442695
        %v1948 = vpow.pop %v1947
        %v1949 = vmul.f32 %v1941, 1.442695
        %v1950 = vpow.pop %v1949
        %v1951 = vmul.f32 %v1942, 1.442695
        %v1952 = vpow.pop %v1951
        %v1953 = vmul.f32 %v1943, 1.442695
        %v1954 = vpow.pop %v1953
        %v1955 = vmul.f32 %v1944, 1.442695
        %v1956 = vpow.pop %v1955
        %v1957 = vsel %vm1920, %v1946, 0.0
        %1958 = vadd.xlane.f32.xlu0 %v1957
        %v1959 = vpop.xlane.xlu0 %1958
        %v1960 = vsel %vm1920, %v1948, 0.0
        %1961 = vadd.xlane.f32.xlu0 %v1960
        %v1962 = vpop.xlane.xlu0 %1961
        %v1963 = vsel %vm1920, %v1950, 0.0
        %1964 = vadd.xlane.f32.xlu0 %v1963
        %v1965 = vpop.xlane.xlu0 %1964
        %v1966 = vsel %vm1920, %v1952, 0.0
        %1967 = vadd.xlane.f32.xlu0 %v1966
        %v1968 = vpop.xlane.xlu0 %1967
        %v1969 = vsel %vm1920, %v1954, 0.0
        %1970 = vadd.xlane.f32.xlu0 %v1969
        %v1971 = vpop.xlane.xlu0 %1970
        %v1972 = vsel %vm1920, %v1956, 0.0
        %1973 = vadd.xlane.f32.xlu0 %v1972
        %v1974 = vpop.xlane.xlu0 %1973
        %v1975 = vrcp.pop %v1959
        %v1976 = vrcp.pop %v1962
        %v1977 = vrcp.pop %v1965
        %v1978 = vrcp.pop %v1968
        %v1979 = vrcp.pop %v1971
        %v1980 = vrcp.pop %v1974
        %v1981 = vmul.f32 %v1946, %v1975
        %v1982 = vmul.f32 %v1948, %v1976
        %v1983 = vmul.f32 %v1950, %v1977
        %v1984 = vmul.f32 %v1952, %v1978
        %v1985 = vmul.f32 %v1954, %v1979
        %v1986 = vmul.f32 %v1956, %v1980
        %v1987 = vpack.c.bf16 %v1982, %v1981
        %v1988 = vpack.c.bf16 %v1983, %v1983
        %v1989 = vpack.c.bf16 %v1985, %v1984
        %v1990 = vpack.c.bf16 %v1986, %v1986
        %v1992 = vsel %vm1920, %v1987, 0
        %v1995 = vsel %vm1920, %v1988, 0
        %vm1997 = vcmask 1043456
        %v1999 = vsel %vm1997, %v1788, 0
        %2001 = vmatprep.subr.bf16.mxu0 0
        %2002 = vmatpush1.bf16.msra.mxu0 %v1787
        %2003 = vmatprep.subr.bf16.mxu0 0
        %2004 = vmatpush1.bf16.msra.mxu0 %v1999
        %2005 = vmatprep.subr.bf16.mxu0 0
        %2006 = vmatpush1.bf16.msra.mxu0 0
        %2007 = vmatprep.subr.bf16.mxu0 0
        %2008 = vmatpush1.bf16.msra.mxu0 0
        %2009 = vmatprep.subr.bf16.mxu0 0
        %2010 = vmatpush1.bf16.msra.mxu0 0
        %2011 = vmatprep.subr.bf16.mxu0 0
        %2012 = vmatpush1.bf16.msra.mxu0 0
        %2013 = vmatprep.subr.bf16.mxu0 0
        %2014 = vmatpush1.bf16.msra.mxu0 0
        %2015 = vmatprep.subr.bf16.mxu0 0
        %2016 = vmatpush1.bf16.msra.mxu0 0
        %2017 = vmatprep.subr.bf16.mxu0 0
        %2018 = vmatpush1.bf16.msra.mxu0 0
        %2019 = vmatprep.subr.bf16.mxu0 0
        %2020 = vmatpush1.bf16.msra.mxu0 0
        %2021 = vmatprep.subr.bf16.mxu0 0
        %2022 = vmatpush1.bf16.msra.mxu0 0
        %2023 = vmatprep.subr.bf16.mxu0 0
        %2024 = vmatpush1.bf16.msra.mxu0 0
        %2025 = vmatprep.subr.bf16.mxu0 0
        %2026 = vmatpush1.bf16.msra.mxu0 0
        %2027 = vmatprep.subr.bf16.mxu0 0
        %2028 = vmatpush1.bf16.msra.mxu0 0
        %2029 = vmatprep.subr.bf16.mxu0 0
        %2030 = vmatpush1.bf16.msra.mxu0 0
        %2031 = vmatprep.subr.bf16.mxu0 0
        %2032 = vmatpush1.bf16.msra.mxu0 0
        %2033 = vmatprep.mubr.bf16.mxu0 0
        %2034 = vmatmul.mubr.bf16.gmra.mrb[0].mxu0 %v1992
        %v2035 = vpop.f32.mrb[0].mxu0
        %v2036 = vadd.f32 0.0, %v2035
        %v2037 = vpop.f32.mrb[0].mxu0
        %v2038 = vpop.f32.mrb[0].mxu0
        %v2039 = vadd.f32 0.0, %v2038
        %v2040 = vpop.f32.mrb[0].mxu0
        %2041 = vmatprep.mubr.bf16.mxu0 0
        %2042 = vmatmul.mubr.bf16.gmra.mrb[0].mxu0 %v1995
        %v2043 = vpop.f32.mrb[0].mxu0
        %v2044 = vadd.f32 0.0, %v2043
        %v2045 = vpop.f32.mrb[0].mxu0
        %v2046 = vpop.f32.mrb[0].mxu0
        %v2047 = vpop.f32.mrb[0].mxu0
        %2048 = vdwg.mxu0
        %v2050 = vsel %vm1920, %v1989, 0
        %v2053 = vsel %vm1920, %v1990, 0
        %v2056 = vsel %vm1997, %v1790, 0
        %2058 = vmatprep.subr.bf16.mxu0 0
        %2059 = vmatpush1.bf16.msra.mxu0 %v1789
        %2060 = vmatprep.subr.bf16.mxu0 0
        %2061 = vmatpush1.bf16.msra.mxu0 %v2056
        %2062 = vmatprep.subr.bf16.mxu0 0
        %2063 = vmatpush1.bf16.msra.mxu0 0
        %2064 = vmatprep.subr.bf16.mxu0 0
        %2065 = vmatpush1.bf16.msra.mxu0 0
        %2066 = vmatprep.subr.bf16.mxu0 0
        %2067 = vmatpush1.bf16.msra.mxu0 0
        %2068 = vmatprep.subr.bf16.mxu0 0
        %2069 = vmatpush1.bf16.msra.mxu0 0
        %2070 = vmatprep.subr.bf16.mxu0 0
        %2071 = vmatpush1.bf16.msra.mxu0 0
        %2072 = vmatprep.subr.bf16.mxu0 0
        %2073 = vmatpush1.bf16.msra.mxu0 0
        %2074 = vmatprep.subr.bf16.mxu0 0
        %2075 = vmatpush1.bf16.msra.mxu0 0
        %2076 = vmatprep.subr.bf16.mxu0 0
        %2077 = vmatpush1.bf16.msra.mxu0 0
        %2078 = vmatprep.subr.bf16.mxu0 0
        %2079 = vmatpush1.bf16.msra.mxu0 0
        %2080 = vmatprep.subr.bf16.mxu0 0
        %2081 = vmatpush1.bf16.msra.mxu0 0
        %2082 = vmatprep.subr.bf16.mxu0 0
        %2083 = vmatpush1.bf16.msra.mxu0 0
        %2084 = vmatprep.subr.bf16.mxu0 0
        %2085 = vmatpush1.bf16.msra.mxu0 0
        %2086 = vmatprep.subr.bf16.mxu0 0
        %2087 = vmatpush1.bf16.msra.mxu0 0
        %2088 = vmatprep.subr.bf16.mxu0 0
        %2089 = vmatpush1.bf16.msra.mxu0 0
        %2090 = vmatprep.mubr.bf16.mxu0 0
        %2091 = vmatmul.mubr.bf16.gmra.mrb[0].mxu0 %v2050
        %v2092 = vpop.f32.mrb[0].mxu0
        %v2093 = vadd.f32 0.0, %v2092
        %v2094 = vpop.f32.mrb[0].mxu0
        %v2095 = vpop.f32.mrb[0].mxu0
        %v2096 = vadd.f32 0.0, %v2095
        %v2097 = vpop.f32.mrb[0].mxu0
        %2098 = vmatprep.mubr.bf16.mxu0 0
        %2099 = vmatmul.mubr.bf16.gmra.mrb[0].mxu0 %v2053
        %v2100 = vpop.f32.mrb[0].mxu0
        %v2101 = vadd.f32 0.0, %v2100
        %v2102 = vpop.f32.mrb[0].mxu0
        %v2103 = vpop.f32.mrb[0].mxu0
        %v2104 = vpop.f32.mrb[0].mxu0
        %2105 = vdwg.mxu0
        %v2106 = vpack.c.bf16 %v2039, %v2036
        %v2107 = vpack.c.bf16 %v2093, %v2044
        %v2108 = vpack.c.bf16 %v2101, %v2096
        %2111 = vrot.lane.b32.xlu0 %v1779, 64
        %v2112 = vpop.permute.xlu0 %2111
        %2113 = vrot.lane.b32.xlu0 %v1780, 64
        %v2114 = vpop.permute.xlu0 %2113
        %2117 = vrot.lane.b32.xlu0 %v1783, 64
        %v2118 = vpop.permute.xlu0 %2117
        %2119 = vrot.lane.b32.xlu0 %v1784, 64
        %v2120 = vpop.permute.xlu0 %2119
        %v2122 = vsel %vm1791, %v2112, 0
        %v2125 = vsel %vm1791, %v2114, 0
        %v2128 = vsel %vm1791, %v2118, 0
        %v2131 = vsel %vm1791, %v2120, 0
        %2133 = vmatprep.subr.bf16.mxu0 0
        %2134 = vmatpush1.bf16.xpose.msra.mxu0 %v2128
        %2135 = vmatprep.subr.bf16.mxu0 0
        %2136 = vmatpush1.bf16.xpose.msra.mxu0 %v2131
        %2137 = vmatprep.subr.bf16.mxu0 0
        %2138 = vmatpush1.bf16.xpose.msra.mxu0 0
        %2139 = vmatprep.subr.bf16.mxu0 0
        %2140 = vmatpush1.bf16.xpose.msra.mxu0 0
        %2141 = vmatprep.subr.bf16.mxu0 0
        %2142 = vmatpush1.bf16.xpose.msra.mxu0 0
        %2143 = vmatprep.subr.bf16.mxu0 0
        %2144 = vmatpush1.bf16.xpose.msra.mxu0 0
        %2145 = vmatprep.subr.bf16.mxu0 0
        %2146 = vmatpush1.bf16.xpose.msra.mxu0 0
        %2147 = vmatprep.subr.bf16.mxu0 0
        %2148 = vmatpush1.bf16.xpose.msra.mxu0 0
        %2149 = vmatprep.subr.bf16.mxu0 0
        %2150 = vmatpush1.bf16.xpose.msra.mxu0 0
        %2151 = vmatprep.subr.bf16.mxu0 0
        %2152 = vmatpush1.bf16.xpose.msra.mxu0 0
        %2153 = vmatprep.subr.bf16.mxu0 0
        %2154 = vmatpush1.bf16.xpose.msra.mxu0 0
        %2155 = vmatprep.subr.bf16.mxu0 0
        %2156 = vmatpush1.bf16.xpose.msra.mxu0 0
        %2157 = vmatprep.subr.bf16.mxu0 0
        %2158 = vmatpush1.bf16.xpose.msra.mxu0 0
        %2159 = vmatprep.subr.bf16.mxu0 0
        %2160 = vmatpush1.bf16.xpose.msra.mxu0 0
        %2161 = vmatprep.subr.bf16.mxu0 0
        %2162 = vmatpush1.bf16.xpose.msra.mxu0 0
        %2163 = vmatprep.subr.bf16.mxu0 0
        %2164 = vmatpush1.bf16.xpose.msra.mxu0 0
        %2165 = vmatprep.mubr.bf16.mxu0 0
        %2166 = vmatmul.mubr.bf16.gmra.mrb[0].mxu0 %v2122
        %v2167 = vpop.f32.mrb[0].mxu0
        %v2168 = vadd.f32 0.0, %v2167
        %v2169 = vpop.f32.mrb[0].mxu0
        %v2170 = vpop.f32.mrb[0].mxu0
        %v2171 = vadd.f32 0.0, %v2170
        %v2172 = vpop.f32.mrb[0].mxu0
        %2173 = vmatprep.mubr.bf16.mxu0 0
        %2174 = vmatmul.mubr.bf16.gmra.mrb[0].mxu0 %v2125
        %v2175 = vpop.f32.mrb[0].mxu0
        %v2176 = vadd.f32 0.0, %v2175
        %v2177 = vpop.f32.mrb[0].mxu0
        %v2178 = vpop.f32.mrb[0].mxu0
        %v2179 = vpop.f32.mrb[0].mxu0
        %2180 = vdwg.mxu0
        %2183 = vrot.lane.b32.xlu0 %v1781, 64
        %v2184 = vpop.permute.xlu0 %2183
        %2185 = vrot.lane.b32.xlu0 %v1782, 64
        %v2186 = vpop.permute.xlu0 %2185
        %2189 = vrot.lane.b32.xlu0 %v1785, 64
        %v2190 = vpop.permute.xlu0 %2189
        %2191 = vrot.lane.b32.xlu0 %v1786, 64
        %v2192 = vpop.permute.xlu0 %2191
        %v2194 = vsel %vm1791, %v2184, 0
        %v2197 = vsel %vm1791, %v2186, 0
        %v2200 = vsel %vm1791, %v2190, 0
        %v2203 = vsel %vm1791, %v2192, 0
        %2205 = vmatprep.subr.bf16.mxu0 0
        %2206 = vmatpush1.bf16.xpose.msra.mxu0 %v2200
        %2207 = vmatprep.subr.bf16.mxu0 0
        %2208 = vmatpush1.bf16.xpose.msra.mxu0 %v2203
        %2209 = vmatprep.subr.bf16.mxu0 0
        %2210 = vmatpush1.bf16.xpose.msra.mxu0 0
        %2211 = vmatprep.subr.bf16.mxu0 0
        %2212 = vmatpush1.bf16.xpose.msra.mxu0 0
        %2213 = vmatprep.subr.bf16.mxu0 0
        %2214 = vmatpush1.bf16.xpose.msra.mxu0 0
        %2215 = vmatprep.subr.bf16.mxu0 0
        %2216 = vmatpush1.bf16.xpose.msra.mxu0 0
        %2217 = vmatprep.subr.bf16.mxu0 0
        %2218 = vmatpush1.bf16.xpose.msra.mxu0 0
        %2219 = vmatprep.subr.bf16.mxu0 0
        %2220 = vmatpush1.bf16.xpose.msra.mxu0 0
        %2221 = vmatprep.subr.bf16.mxu0 0
        %2222 = vmatpush1.bf16.xpose.msra.mxu0 0
        %2223 = vmatprep.subr.bf16.mxu0 0
        %2224 = vmatpush1.bf16.xpose.msra.mxu0 0
        %2225 = vmatprep.subr.bf16.mxu0 0
        %2226 = vmatpush1.bf16.xpose.msra.mxu0 0
        %2227 = vmatprep.subr.bf16.mxu0 0
        %2228 = vmatpush1.bf16.xpose.msra.mxu0 0
        %2229 = vmatprep.subr.bf16.mxu0 0
        %2230 = vmatpush1.bf16.xpose.msra.mxu0 0
        %2231 = vmatprep.subr.bf16.mxu0 0
        %2232 = vmatpush1.bf16.xpose.msra.mxu0 0
        %2233 = vmatprep.subr.bf16.mxu0 0
        %2234 = vmatpush1.bf16.xpose.msra.mxu0 0
        %2235 = vmatprep.subr.bf16.mxu0 0
        %2236 = vmatpush1.bf16.xpose.msra.mxu0 0
        %2237 = vmatprep.mubr.bf16.mxu0 0
        %2238 = vmatmul.mubr.bf16.gmra.mrb[0].mxu0 %v2194
        %v2239 = vpop.f32.mrb[0].mxu0
        %v2240 = vadd.f32 0.0, %v2239
        %v2241 = vpop.f32.mrb[0].mxu0
        %v2242 = vpop.f32.mrb[0].mxu0
        %v2243 = vadd.f32 0.0, %v2242
        %v2244 = vpop.f32.mrb[0].mxu0
        %2245 = vmatprep.mubr.bf16.mxu0 0
        %2246 = vmatmul.mubr.bf16.gmra.mrb[0].mxu0 %v2197
        %v2247 = vpop.f32.mrb[0].mxu0
        %v2248 = vadd.f32 0.0, %v2247
        %v2249 = vpop.f32.mrb[0].mxu0
        %v2250 = vpop.f32.mrb[0].mxu0
        %v2251 = vpop.f32.mrb[0].mxu0
        %2252 = vdwg.mxu0
        %v2253 = vsel %vm1913, %v2168, -1e+30
        %v2254 = vsel %vm1913, %v2171, -1e+30
        %v2255 = vsel %vm1913, %v2176, -1e+30
        %v2256 = vsel %vm1913, %v2240, -1e+30
        %v2257 = vsel %vm1913, %v2243, -1e+30
        %v2258 = vsel %vm1913, %v2248, -1e+30
        %v2259 = vsel %vm1920, %v2253, -inf
        %2260 = vmax.xlane.f32.xlu0 %v2259
        %v2261 = vpop.xlane.xlu0 %2260
        %v2262 = vsel %vm1920, %v2254, -inf
        %2263 = vmax.xlane.f32.xlu0 %v2262
        %v2264 = vpop.xlane.xlu0 %2263
        %v2265 = vsel %vm1920, %v2255, -inf
        %2266 = vmax.xlane.f32.xlu0 %v2265
        %v2267 = vpop.xlane.xlu0 %2266
        %v2268 = vsel %vm1920, %v2256, -inf
        %2269 = vmax.xlane.f32.xlu0 %v2268
        %v2270 = vpop.xlane.xlu0 %2269
        %v2271 = vsel %vm1920, %v2257, -inf
        %2272 = vmax.xlane.f32.xlu0 %v2271
        %v2273 = vpop.xlane.xlu0 %2272
        %v2274 = vsel %vm1920, %v2258, -inf
        %2275 = vmax.xlane.f32.xlu0 %v2274
        %v2276 = vpop.xlane.xlu0 %2275
        %v2277 = vsub.f32 %v2253, %v2261
        %v2278 = vsub.f32 %v2254, %v2264
        %v2279 = vsub.f32 %v2255, %v2267
        %v2280 = vsub.f32 %v2256, %v2270
        %v2281 = vsub.f32 %v2257, %v2273
        %v2282 = vsub.f32 %v2258, %v2276
        %v2283 = vmul.f32 %v2277, 1.442695
        %v2284 = vpow.pop %v2283
        %v2285 = vmul.f32 %v2278, 1.442695
        %v2286 = vpow.pop %v2285
        %v2287 = vmul.f32 %v2279, 1.442695
        %v2288 = vpow.pop %v2287
        %v2289 = vmul.f32 %v2280, 1.442695
        %v2290 = vpow.pop %v2289
        %v2291 = vmul.f32 %v2281, 1.442695
        %v2292 = vpow.pop %v2291
        %v2293 = vmul.f32 %v2282, 1.442695
        %v2294 = vpow.pop %v2293
        %v2295 = vsel %vm1920, %v2284, 0.0
        %2296 = vadd.xlane.f32.xlu0 %v2295
        %v2297 = vpop.xlane.xlu0 %2296
        %v2298 = vsel %vm1920, %v2286, 0.0
        %2299 = vadd.xlane.f32.xlu0 %v2298
        %v2300 = vpop.xlane.xlu0 %2299
        %v2301 = vsel %vm1920, %v2288, 0.0
        %2302 = vadd.xlane.f32.xlu0 %v2301
        %v2303 = vpop.xlane.xlu0 %2302
        %v2304 = vsel %vm1920, %v2290, 0.0
        %2305 = vadd.xlane.f32.xlu0 %v2304
        %v2306 = vpop.xlane.xlu0 %2305
        %v2307 = vsel %vm1920, %v2292, 0.0
        %2308 = vadd.xlane.f32.xlu0 %v2307
        %v2309 = vpop.xlane.xlu0 %2308
        %v2310 = vsel %vm1920, %v2294, 0.0
        %2311 = vadd.xlane.f32.xlu0 %v2310
        %v2312 = vpop.xlane.xlu0 %2311
        %v2313 = vrcp.pop %v2297
        %v2314 = vrcp.pop %v2300
        %v2315 = vrcp.pop %v2303
        %v2316 = vrcp.pop %v2306
        %v2317 = vrcp.pop %v2309
        %v2318 = vrcp.pop %v2312
        %v2319 = vmul.f32 %v2284, %v2313
        %v2320 = vmul.f32 %v2286, %v2314
        %v2321 = vmul.f32 %v2288, %v2315
        %v2322 = vmul.f32 %v2290, %v2316
        %v2323 = vmul.f32 %v2292, %v2317
        %v2324 = vmul.f32 %v2294, %v2318
        %v2325 = vpack.c.bf16 %v2320, %v2319
        %v2326 = vpack.c.bf16 %v2321, %v2321
        %v2327 = vpack.c.bf16 %v2323, %v2322
        %v2328 = vpack.c.bf16 %v2324, %v2324
        %2331 = vrot.lane.b32.xlu0 %v1787, 64
        %v2332 = vpop.permute.xlu0 %2331
        %2333 = vrot.lane.b32.xlu0 %v1788, 64
        %v2334 = vpop.permute.xlu0 %2333
        %v2337 = vsel %vm1920, %v2325, 0
        %v2340 = vsel %vm1920, %v2326, 0
        %v2343 = vsel %vm1997, %v2334, 0
        %2345 = vmatprep.subr.bf16.mxu0 0
        %2346 = vmatpush1.bf16.msra.mxu0 %v2332
        %2347 = vmatprep.subr.bf16.mxu0 0
        %2348 = vmatpush1.bf16.msra.mxu0 %v2343
        %2349 = vmatprep.subr.bf16.mxu0 0
        %2350 = vmatpush1.bf16.msra.mxu0 0
        %2351 = vmatprep.subr.bf16.mxu0 0
        %2352 = vmatpush1.bf16.msra.mxu0 0
        %2353 = vmatprep.subr.bf16.mxu0 0
        %2354 = vmatpush1.bf16.msra.mxu0 0
        %2355 = vmatprep.subr.bf16.mxu0 0
        %2356 = vmatpush1.bf16.msra.mxu0 0
        %2357 = vmatprep.subr.bf16.mxu0 0
        %2358 = vmatpush1.bf16.msra.mxu0 0
        %2359 = vmatprep.subr.bf16.mxu0 0
        %2360 = vmatpush1.bf16.msra.mxu0 0
        %2361 = vmatprep.subr.bf16.mxu0 0
        %2362 = vmatpush1.bf16.msra.mxu0 0
        %2363 = vmatprep.subr.bf16.mxu0 0
        %2364 = vmatpush1.bf16.msra.mxu0 0
        %2365 = vmatprep.subr.bf16.mxu0 0
        %2366 = vmatpush1.bf16.msra.mxu0 0
        %2367 = vmatprep.subr.bf16.mxu0 0
        %2368 = vmatpush1.bf16.msra.mxu0 0
        %2369 = vmatprep.subr.bf16.mxu0 0
        %2370 = vmatpush1.bf16.msra.mxu0 0
        %2371 = vmatprep.subr.bf16.mxu0 0
        %2372 = vmatpush1.bf16.msra.mxu0 0
        %2373 = vmatprep.subr.bf16.mxu0 0
        %2374 = vmatpush1.bf16.msra.mxu0 0
        %2375 = vmatprep.subr.bf16.mxu0 0
        %2376 = vmatpush1.bf16.msra.mxu0 0
        %2377 = vmatprep.mubr.bf16.mxu0 0
        %2378 = vmatmul.mubr.bf16.gmra.mrb[0].mxu0 %v2337
        %v2379 = vpop.f32.mrb[0].mxu0
        %v2380 = vadd.f32 0.0, %v2379
        %v2381 = vpop.f32.mrb[0].mxu0
        %v2382 = vpop.f32.mrb[0].mxu0
        %v2383 = vadd.f32 0.0, %v2382
        %v2384 = vpop.f32.mrb[0].mxu0
        %2385 = vmatprep.mubr.bf16.mxu0 0
        %2386 = vmatmul.mubr.bf16.gmra.mrb[0].mxu0 %v2340
        %v2387 = vpop.f32.mrb[0].mxu0
        %v2388 = vadd.f32 0.0, %v2387
        %v2389 = vpop.f32.mrb[0].mxu0
        %v2390 = vpop.f32.mrb[0].mxu0
        %v2391 = vpop.f32.mrb[0].mxu0
        %2392 = vdwg.mxu0
        %2395 = vrot.lane.b32.xlu0 %v1789, 64
        %v2396 = vpop.permute.xlu0 %2395
        %2397 = vrot.lane.b32.xlu0 %v1790, 64
        %v2398 = vpop.permute.xlu0 %2397
        %v2401 = vsel %vm1920, %v2327, 0
        %v2404 = vsel %vm1920, %v2328, 0
        %v2407 = vsel %vm1997, %v2398, 0
        %2409 = vmatprep.subr.bf16.mxu0 0
        %2410 = vmatpush1.bf16.msra.mxu0 %v2396
        %2411 = vmatprep.subr.bf16.mxu0 0
        %2412 = vmatpush1.bf16.msra.mxu0 %v2407
        %2413 = vmatprep.subr.bf16.mxu0 0
        %2414 = vmatpush1.bf16.msra.mxu0 0
        %2415 = vmatprep.subr.bf16.mxu0 0
        %2416 = vmatpush1.bf16.msra.mxu0 0
        %2417 = vmatprep.subr.bf16.mxu0 0
        %2418 = vmatpush1.bf16.msra.mxu0 0
        %2419 = vmatprep.subr.bf16.mxu0 0
        %2420 = vmatpush1.bf16.msra.mxu0 0
        %2421 = vmatprep.subr.bf16.mxu0 0
        %2422 = vmatpush1.bf16.msra.mxu0 0
        %2423 = vmatprep.subr.bf16.mxu0 0
        %2424 = vmatpush1.bf16.msra.mxu0 0
        %2425 = vmatprep.subr.bf16.mxu0 0
        %2426 = vmatpush1.bf16.msra.mxu0 0
        %2427 = vmatprep.subr.bf16.mxu0 0
        %2428 = vmatpush1.bf16.msra.mxu0 0
        %2429 = vmatprep.subr.bf16.mxu0 0
        %2430 = vmatpush1.bf16.msra.mxu0 0
        %2431 = vmatprep.subr.bf16.mxu0 0
        %2432 = vmatpush1.bf16.msra.mxu0 0
        %2433 = vmatprep.subr.bf16.mxu0 0
        %2434 = vmatpush1.bf16.msra.mxu0 0
        %2435 = vmatprep.subr.bf16.mxu0 0
        %2436 = vmatpush1.bf16.msra.mxu0 0
        %2437 = vmatprep.subr.bf16.mxu0 0
        %2438 = vmatpush1.bf16.msra.mxu0 0
        %2439 = vmatprep.subr.bf16.mxu0 0
        %2440 = vmatpush1.bf16.msra.mxu0 0
        %2441 = vmatprep.mubr.bf16.mxu0 0
        %2442 = vmatmul.mubr.bf16.gmra.mrb[0].mxu0 %v2401
        %v2443 = vpop.f32.mrb[0].mxu0
        %v2444 = vadd.f32 0.0, %v2443
        %v2445 = vpop.f32.mrb[0].mxu0
        %v2446 = vpop.f32.mrb[0].mxu0
        %v2447 = vadd.f32 0.0, %v2446
        %v2448 = vpop.f32.mrb[0].mxu0
        %2449 = vmatprep.mubr.bf16.mxu0 0
        %2450 = vmatmul.mubr.bf16.gmra.mrb[0].mxu0 %v2404
        %v2451 = vpop.f32.mrb[0].mxu0
        %v2452 = vadd.f32 0.0, %v2451
        %v2453 = vpop.f32.mrb[0].mxu0
        %v2454 = vpop.f32.mrb[0].mxu0
        %v2455 = vpop.f32.mrb[0].mxu0
        %2456 = vdwg.mxu0
        %v2457 = vpack.c.bf16 %v2383, %v2380
        %v2458 = vpack.c.bf16 %v2444, %v2388
        %v2459 = vpack.c.bf16 %v2452, %v2447
        %v2468 = vunpack.c.l.b16 %v1771
        %v2469 = vunpack.c.l.b16 %v1772
        %v2470 = vunpack.c.l.b16 %v1773
        %v2471 = vunpack.c.l.b16 %v1774
        %v2472 = vunpack.c.l.b16 %v1775
        %v2473 = vunpack.c.l.b16 %v1776
        %v2474 = vunpack.c.l.b16 %v1777
        %v2475 = vunpack.c.l.b16 %v1778
        %v2476 = vpack.c.b16 %v2469, %v2468
        %v2477 = vpack.c.b16 %v2471, %v2470
        %v2478 = vpack.c.b16 %v2473, %v2472
        %v2479 = vpack.c.b16 %v2475, %v2474
        %v2485 = vsel %vm1791, %v2457, 0
        %v2488 = vsel %vm1791, %v2458, 0
        %v2491 = vsel %vm1791, %v2459, 0
        %2493 = vmatprep.subr.bf16.mxu0 0
        %2494 = vmatpush1.bf16.msra.mxu0 %v2476
        %2495 = vmatprep.subr.bf16.mxu0 0
        %2496 = vmatpush1.bf16.msra.mxu0 %v2477
        %2497 = vmatprep.subr.bf16.mxu0 0
        %2498 = vmatpush1.bf16.msra.mxu0 %v2478
        %2499 = vmatprep.subr.bf16.mxu0 0
        %2500 = vmatpush1.bf16.msra.mxu0 %v2479
        %2501 = vmatprep.subr.bf16.mxu0 0
        %2502 = vmatpush1.bf16.msra.mxu0 0
        %2503 = vmatprep.subr.bf16.mxu0 0
        %2504 = vmatpush1.bf16.msra.mxu0 0
        %2505 = vmatprep.subr.bf16.mxu0 0
        %2506 = vmatpush1.bf16.msra.mxu0 0
        %2507 = vmatprep.subr.bf16.mxu0 0
        %2508 = vmatpush1.bf16.msra.mxu0 0
        %2509 = vmatprep.subr.bf16.mxu0 0
        %2510 = vmatpush1.bf16.msra.mxu0 0
        %2511 = vmatprep.subr.bf16.mxu0 0
        %2512 = vmatpush1.bf16.msra.mxu0 0
        %2513 = vmatprep.subr.bf16.mxu0 0
        %2514 = vmatpush1.bf16.msra.mxu0 0
        %2515 = vmatprep.subr.bf16.mxu0 0
        %2516 = vmatpush1.bf16.msra.mxu0 0
        %2517 = vmatprep.subr.bf16.mxu0 0
        %2518 = vmatpush1.bf16.msra.mxu0 0
        %2519 = vmatprep.subr.bf16.mxu0 0
        %2520 = vmatpush1.bf16.msra.mxu0 0
        %2521 = vmatprep.subr.bf16.mxu0 0
        %2522 = vmatpush1.bf16.msra.mxu0 0
        %2523 = vmatprep.subr.bf16.mxu0 0
        %2524 = vmatpush1.bf16.msra.mxu0 0
        %2525 = vmatprep.mubr.bf16.mxu0 0
        %2526 = vmatmul.mubr.bf16.gmra.mrb[0].mxu0 %v2485
        %v2527 = vpop.f32.mrb[0].mxu0
        %v2528 = vadd.f32 0.0, %v2527
        %v2529 = vpop.f32.mrb[0].mxu0
        %v2530 = vpop.f32.mrb[0].mxu0
        %v2531 = vadd.f32 0.0, %v2530
        %v2532 = vpop.f32.mrb[0].mxu0
        %2533 = vmatprep.mubr.bf16.mxu0 0
        %2534 = vmatmul.mubr.bf16.gmra.mrb[0].mxu0 %v2488
        %v2535 = vpop.f32.mrb[0].mxu0
        %v2536 = vadd.f32 0.0, %v2535
        %v2537 = vpop.f32.mrb[0].mxu0
        %v2538 = vpop.f32.mrb[0].mxu0
        %v2539 = vadd.f32 0.0, %v2538
        %v2540 = vpop.f32.mrb[0].mxu0
        %2541 = vmatprep.mubr.bf16.mxu0 0
        %2542 = vmatmul.mubr.bf16.gmra.mrb[0].mxu0 %v2491
        %v2543 = vpop.f32.mrb[0].mxu0
        %v2544 = vadd.f32 0.0, %v2543
        %v2545 = vpop.f32.mrb[0].mxu0
        %v2546 = vpop.f32.mrb[0].mxu0
        %v2547 = vadd.f32 0.0, %v2546
        %v2548 = vpop.f32.mrb[0].mxu0
        %2549 = vdwg.mxu0
        %v2558 = vunpack.c.l.b16 %v1763
        %v2559 = vunpack.c.l.b16 %v1764
        %v2560 = vunpack.c.l.b16 %v1765
        %v2561 = vunpack.c.l.b16 %v1766
        %v2562 = vunpack.c.l.b16 %v1767
        %v2563 = vunpack.c.l.b16 %v1768
        %v2564 = vunpack.c.l.b16 %v1769
        %v2565 = vunpack.c.l.b16 %v1770
        %v2566 = vpack.c.b16 %v2559, %v2558
        %v2567 = vpack.c.b16 %v2561, %v2560
        %v2568 = vpack.c.b16 %v2563, %v2562
        %v2569 = vpack.c.b16 %v2565, %v2564
        %v2575 = vsel %vm1791, %v2106, 0
        %v2578 = vsel %vm1791, %v2107, 0
        %v2581 = vsel %vm1791, %v2108, 0
        %2583 = vmatprep.subr.bf16.mxu0 0
        %2584 = vmatpush1.bf16.msra.mxu0 %v2566
        %2585 = vmatprep.subr.bf16.mxu0 0
        %2586 = vmatpush1.bf16.msra.mxu0 %v2567
        %2587 = vmatprep.subr.bf16.mxu0 0
        %2588 = vmatpush1.bf16.msra.mxu0 %v2568
        %2589 = vmatprep.subr.bf16.mxu0 0
        %2590 = vmatpush1.bf16.msra.mxu0 %v2569
        %2591 = vmatprep.subr.bf16.mxu0 0
        %2592 = vmatpush1.bf16.msra.mxu0 0
        %2593 = vmatprep.subr.bf16.mxu0 0
        %2594 = vmatpush1.bf16.msra.mxu0 0
        %2595 = vmatprep.subr.bf16.mxu0 0
        %2596 = vmatpush1.bf16.msra.mxu0 0
        %2597 = vmatprep.subr.bf16.mxu0 0
        %2598 = vmatpush1.bf16.msra.mxu0 0
        %2599 = vmatprep.subr.bf16.mxu0 0
        %2600 = vmatpush1.bf16.msra.mxu0 0
        %2601 = vmatprep.subr.bf16.mxu0 0
        %2602 = vmatpush1.bf16.msra.mxu0 0
        %2603 = vmatprep.subr.bf16.mxu0 0
        %2604 = vmatpush1.bf16.msra.mxu0 0
        %2605 = vmatprep.subr.bf16.mxu0 0
        %2606 = vmatpush1.bf16.msra.mxu0 0
        %2607 = vmatprep.subr.bf16.mxu0 0
        %2608 = vmatpush1.bf16.msra.mxu0 0
        %2609 = vmatprep.subr.bf16.mxu0 0
        %2610 = vmatpush1.bf16.msra.mxu0 0
        %2611 = vmatprep.subr.bf16.mxu0 0
        %2612 = vmatpush1.bf16.msra.mxu0 0
        %2613 = vmatprep.subr.bf16.mxu0 0
        %2614 = vmatpush1.bf16.msra.mxu0 0
        %2615 = vmatprep.mubr.bf16.mxu0 0
        %2616 = vmatmul.mubr.bf16.gmra.mrb[0].mxu0 %v2575
        %v2617 = vpop.f32.mrb[0].mxu0
        %v2618 = vadd.f32 %v2528, %v2617
        %v2619 = vpop.f32.mrb[0].mxu0
        %v2620 = vpop.f32.mrb[0].mxu0
        %v2621 = vadd.f32 %v2531, %v2620
        %v2622 = vpop.f32.mrb[0].mxu0
        %2623 = vmatprep.mubr.bf16.mxu0 0
        %2624 = vmatmul.mubr.bf16.gmra.mrb[0].mxu0 %v2578
        %v2625 = vpop.f32.mrb[0].mxu0
        %v2626 = vadd.f32 %v2536, %v2625
        %v2627 = vpop.f32.mrb[0].mxu0
        %v2628 = vpop.f32.mrb[0].mxu0
        %v2629 = vadd.f32 %v2539, %v2628
        %v2630 = vpop.f32.mrb[0].mxu0
        %2631 = vmatprep.mubr.bf16.mxu0 0
        %2632 = vmatmul.mubr.bf16.gmra.mrb[0].mxu0 %v2581
        %v2633 = vpop.f32.mrb[0].mxu0
        %v2634 = vadd.f32 %v2544, %v2633
        %v2635 = vpop.f32.mrb[0].mxu0
        %v2636 = vpop.f32.mrb[0].mxu0
        %v2637 = vadd.f32 %v2547, %v2636
        %v2638 = vpop.f32.mrb[0].mxu0
        %2639 = vdwg.mxu0
        %v2640 = vadd.f32 %v1361, %v2618
        %v2641 = vadd.f32 %v1362, %v2621
        %v2642 = vadd.f32 %v1363, %v2626
        %v2643 = vadd.f32 %v1364, %v2629
        %v2644 = vadd.f32 %v1365, %v2634
        %v2645 = vadd.f32 %v1366, %v2637
        %v2646 = vld [vmem:[%s720] sm:$0x1]
        %v2648 = vlaneseq
        %v2649 = vshrl.u32 %v2648, 7
        %v2650 = vsub.s32 0, %v2649
        %v2651 = vrot.slane %v2646, %v2650
        %v2653 = vadd.f32 %v2640, %v2651
        %v2654 = vadd.f32 %v2641, %v2651
        %v2655 = vadd.f32 %v2642, %v2651
        %v2656 = vadd.f32 %v2643, %v2651
        %v2657 = vadd.f32 %v2644, %v2651
        %v2658 = vadd.f32 %v2645, %v2651
        %v2659 = vld [vmem:[%s601] sm:$0x1]
        %v2660 = vld [vmem:[%s609] sm:$0x1]
        %2661 = vadd.xlane.f32.xlu0 %v2653
        %v2662 = vpop.xlane.xlu0 %2661
        %2663 = vadd.xlane.f32.xlu0 %v2654
        %v2664 = vpop.xlane.xlu0 %2663
        %2665 = vadd.xlane.f32.xlu0 %v2655
        %v2666 = vpop.xlane.xlu0 %2665
        %2667 = vadd.xlane.f32.xlu0 %v2656
        %v2668 = vpop.xlane.xlu0 %2667
        %2669 = vadd.xlane.f32.xlu0 %v2657
        %v2670 = vpop.xlane.xlu0 %2669
        %2671 = vadd.xlane.f32.xlu0 %v2658
        %v2672 = vpop.xlane.xlu0 %2671
        %v2673 = vmul.f32 %v2662, %v1381
        %v2674 = vmul.f32 %v2664, %v1381
        %v2675 = vmul.f32 %v2666, %v1381
        %v2676 = vmul.f32 %v2668, %v1381
        %v2677 = vmul.f32 %v2670, %v1381
        %v2678 = vmul.f32 %v2672, %v1381
        %v2679 = vsub.f32 %v2653, %v2673
        %v2680 = vsub.f32 %v2654, %v2674
        %v2681 = vsub.f32 %v2655, %v2675
        %v2682 = vsub.f32 %v2656, %v2676
        %v2683 = vsub.f32 %v2657, %v2677
        %v2684 = vsub.f32 %v2658, %v2678
        %v2685 = vmul.f32 %v2679, %v2679
        %v2686 = vmul.f32 %v2680, %v2680
        %v2687 = vmul.f32 %v2681, %v2681
        %v2688 = vmul.f32 %v2682, %v2682
        %v2689 = vmul.f32 %v2683, %v2683
        %v2690 = vmul.f32 %v2684, %v2684
        %2691 = vadd.xlane.f32.xlu0 %v2685
        %v2692 = vpop.xlane.xlu0 %2691
        %2693 = vadd.xlane.f32.xlu0 %v2686
        %v2694 = vpop.xlane.xlu0 %2693
        %2695 = vadd.xlane.f32.xlu0 %v2687
        %v2696 = vpop.xlane.xlu0 %2695
        %2697 = vadd.xlane.f32.xlu0 %v2688
        %v2698 = vpop.xlane.xlu0 %2697
        %2699 = vadd.xlane.f32.xlu0 %v2689
        %v2700 = vpop.xlane.xlu0 %2699
        %2701 = vadd.xlane.f32.xlu0 %v2690
        %v2702 = vpop.xlane.xlu0 %2701
        %v2703 = vmul.f32 %v2692, %v1381
        %v2704 = vmul.f32 %v2694, %v1381
        %v2705 = vmul.f32 %v2696, %v1381
        %v2706 = vmul.f32 %v2698, %v1381
        %v2707 = vmul.f32 %v2700, %v1381
        %v2708 = vmul.f32 %v2702, %v1381
        %v2709 = vadd.f32 %v2703, 1e-06
        %v2710 = vadd.f32 %v2704, 1e-06
        %v2711 = vadd.f32 %v2705, 1e-06
        %v2712 = vadd.f32 %v2706, 1e-06
        %v2713 = vadd.f32 %v2707, 1e-06
        %v2714 = vadd.f32 %v2708, 1e-06
        %v2715 = vrsqrt.pop %v2709
        %v2716 = vrsqrt.pop %v2710
        %v2717 = vrsqrt.pop %v2711
        %v2718 = vrsqrt.pop %v2712
        %v2719 = vrsqrt.pop %v2713
        %v2720 = vrsqrt.pop %v2714
        %v2721 = vmul.f32 %v2679, %v2715
        %v2722 = vmul.f32 %v2680, %v2716
        %v2723 = vmul.f32 %v2681, %v2717
        %v2724 = vmul.f32 %v2682, %v2718
        %v2725 = vmul.f32 %v2683, %v2719
        %v2726 = vmul.f32 %v2684, %v2720
        %v2728 = vlaneseq
        %v2729 = vshrl.u32 %v2728, 7
        %v2730 = vsub.s32 0, %v2729
        %v2731 = vrot.slane %v2659, %v2730
        %v2733 = vmul.f32 %v2721, %v2731
        %v2734 = vmul.f32 %v2722, %v2731
        %v2735 = vmul.f32 %v2723, %v2731
        %v2736 = vmul.f32 %v2724, %v2731
        %v2737 = vmul.f32 %v2725, %v2731
        %v2738 = vmul.f32 %v2726, %v2731
        %v2740 = vlaneseq
        %v2741 = vshrl.u32 %v2740, 7
        %v2742 = vsub.s32 0, %v2741
        %v2743 = vrot.slane %v2660, %v2742
        %v2745 = vadd.f32 %v2733, %v2743
        %v2746 = vadd.f32 %v2734, %v2743
        %v2747 = vadd.f32 %v2735, %v2743
        %v2748 = vadd.f32 %v2736, %v2743
        %v2749 = vadd.f32 %v2737, %v2743
        %v2750 = vadd.f32 %v2738, %v2743
        %v2751 = vpack.c.bf16 %v2746, %v2745
        %v2752 = vpack.c.bf16 %v2748, %v2747
        %v2753 = vpack.c.bf16 %v2750, %v2749
        %v2754 = vld [vmem:[%s725] sm:$0xff]
        %v2755 = vld [vmem:[%s725 + $0x8] sm:$0xff]
        %v2756 = vld [vmem:[%s725 + $0x10] sm:$0xff]
        %v2757 = vld [vmem:[%s725 + $0x18] sm:$0xff]
        %v2758 = vld [vmem:[%s725 + $0x20] sm:$0xff]
        %v2759 = vld [vmem:[%s725 + $0x28] sm:$0xff]
        %v2760 = vld [vmem:[%s725 + $0x30] sm:$0xff]
        %v2761 = vld [vmem:[%s725 + $0x38] sm:$0xff]
        %v2762 = vld [vmem:[%s725 + $0x40] sm:$0xff]
        %v2763 = vld [vmem:[%s725 + $0x48] sm:$0xff]
        %v2764 = vld [vmem:[%s725 + $0x50] sm:$0xff]
        %v2765 = vld [vmem:[%s725 + $0x58] sm:$0xff]
        %v2766 = vld [vmem:[%s725 + $0x60] sm:$0xff]
        %v2767 = vld [vmem:[%s725 + $0x68] sm:$0xff]
        %v2768 = vld [vmem:[%s725 + $0x70] sm:$0xff]
        %v2769 = vld [vmem:[%s725 + $0x78] sm:$0xff]
        %v2770 = vld [vmem:[%s725 + $0x80] sm:$0xff]
        %v2771 = vld [vmem:[%s725 + $0x88] sm:$0xff]
        %v2772 = vld [vmem:[%s725 + $0x90] sm:$0xff]
        %v2773 = vld [vmem:[%s725 + $0x98] sm:$0xff]
        %v2774 = vld [vmem:[%s725 + $0xa0] sm:$0xff]
        %v2775 = vld [vmem:[%s725 + $0xa8] sm:$0xff]
        %v2776 = vld [vmem:[%s725 + $0xb0] sm:$0xff]
        %v2777 = vld [vmem:[%s725 + $0xb8] sm:$0xff]
        %v2778 = vld [vmem:[%s725 + $0xc0] sm:$0xff]
        %v2779 = vld [vmem:[%s725 + $0xc8] sm:$0xff]
        %v2780 = vld [vmem:[%s725 + $0xd0] sm:$0xff]
        %v2781 = vld [vmem:[%s725 + $0xd8] sm:$0xff]
        %v2782 = vld [vmem:[%s725 + $0xe0] sm:$0xff]
        %v2783 = vld [vmem:[%s725 + $0xe8] sm:$0xff]
        %v2784 = vld [vmem:[%s725 + $0xf0] sm:$0xff]
        %v2785 = vld [vmem:[%s725 + $0xf8] sm:$0xff]
        %v2786 = vld [vmem:[%s729] sm:$0xf]
        %v2788 = vlaneseq
        %v2789 = vshrl.u32 %v2788, 7
        %v2790 = vsub.s32 0, %v2789
        %v2791 = vrot.slane %v2786, %v2790
        %v2792 = vlaneseq
        %v2793 = vshrl.u32 %v2792, 7
        %v2794 = vsub.s32 1, %v2793
        %v2795 = vrot.slane %v2786, %v2794
        %v2796 = vlaneseq
        %v2797 = vshrl.u32 %v2796, 7
        %v2798 = vsub.s32 2, %v2797
        %v2799 = vrot.slane %v2786, %v2798
        %v2800 = vlaneseq
        %v2801 = vshrl.u32 %v2800, 7
        %v2802 = vsub.s32 3, %v2801
        %v2803 = vrot.slane %v2786, %v2802
        %v2840 = vunpack.c.l.b16 %v2754
        %v2841 = vunpack.c.h.b16 %v2754
        %v2842 = vunpack.c.l.b16 %v2755
        %v2843 = vunpack.c.h.b16 %v2755
        %v2844 = vunpack.c.l.b16 %v2756
        %v2845 = vunpack.c.h.b16 %v2756
        %v2846 = vunpack.c.l.b16 %v2757
        %v2847 = vunpack.c.h.b16 %v2757
        %v2848 = vunpack.c.l.b16 %v2758
        %v2849 = vunpack.c.h.b16 %v2758
        %v2850 = vunpack.c.l.b16 %v2759
        %v2851 = vunpack.c.h.b16 %v2759
        %v2852 = vunpack.c.l.b16 %v2760
        %v2853 = vunpack.c.h.b16 %v2760
        %v2854 = vunpack.c.l.b16 %v2761
        %v2855 = vunpack.c.h.b16 %v2761
        %v2856 = vunpack.c.l.b16 %v2762
        %v2857 = vunpack.c.h.b16 %v2762
        %v2858 = vunpack.c.l.b16 %v2763
        %v2859 = vunpack.c.h.b16 %v2763
        %v2860 = vunpack.c.l.b16 %v2764
        %v2861 = vunpack.c.h.b16 %v2764
        %v2862 = vunpack.c.l.b16 %v2765
        %v2863 = vunpack.c.h.b16 %v2765
        %v2864 = vunpack.c.l.b16 %v2766
        %v2865 = vunpack.c.h.b16 %v2766
        %v2866 = vunpack.c.l.b16 %v2767
        %v2867 = vunpack.c.h.b16 %v2767
        %v2868 = vunpack.c.l.b16 %v2768
        %v2869 = vunpack.c.h.b16 %v2768
        %v2870 = vunpack.c.l.b16 %v2769
        %v2871 = vunpack.c.h.b16 %v2769
        %v2872 = vunpack.c.l.b16 %v2770
        %v2873 = vunpack.c.h.b16 %v2770
        %v2874 = vunpack.c.l.b16 %v2771
        %v2875 = vunpack.c.h.b16 %v2771
        %v2876 = vunpack.c.l.b16 %v2772
        %v2877 = vunpack.c.h.b16 %v2772
        %v2878 = vunpack.c.l.b16 %v2773
        %v2879 = vunpack.c.h.b16 %v2773
        %v2880 = vunpack.c.l.b16 %v2774
        %v2881 = vunpack.c.h.b16 %v2774
        %v2882 = vunpack.c.l.b16 %v2775
        %v2883 = vunpack.c.h.b16 %v2775
        %v2884 = vunpack.c.l.b16 %v2776
        %v2885 = vunpack.c.h.b16 %v2776
        %v2886 = vunpack.c.l.b16 %v2777
        %v2887 = vunpack.c.h.b16 %v2777
        %v2888 = vunpack.c.l.b16 %v2778
        %v2889 = vunpack.c.h.b16 %v2778
        %v2890 = vunpack.c.l.b16 %v2779
        %v2891 = vunpack.c.h.b16 %v2779
        %v2892 = vunpack.c.l.b16 %v2780
        %v2893 = vunpack.c.h.b16 %v2780
        %v2894 = vunpack.c.l.b16 %v2781
        %v2895 = vunpack.c.h.b16 %v2781
        %v2896 = vunpack.c.l.b16 %v2782
        %v2897 = vunpack.c.h.b16 %v2782
        %v2898 = vunpack.c.l.b16 %v2783
        %v2899 = vunpack.c.h.b16 %v2783
        %v2900 = vunpack.c.l.b16 %v2784
        %v2901 = vunpack.c.h.b16 %v2784
        %v2902 = vunpack.c.l.b16 %v2785
        %v2903 = vunpack.c.h.b16 %v2785
        %v2904 = vpack.c.b16 %v2844, %v2840
        %v2905 = vpack.c.b16 %v2845, %v2841
        %v2906 = vpack.c.b16 %v2846, %v2842
        %v2907 = vpack.c.b16 %v2847, %v2843
        %v2908 = vpack.c.b16 %v2852, %v2848
        %v2909 = vpack.c.b16 %v2853, %v2849
        %v2910 = vpack.c.b16 %v2854, %v2850
        %v2911 = vpack.c.b16 %v2855, %v2851
        %v2912 = vpack.c.b16 %v2860, %v2856
        %v2913 = vpack.c.b16 %v2861, %v2857
        %v2914 = vpack.c.b16 %v2862, %v2858
        %v2915 = vpack.c.b16 %v2863, %v2859
        %v2916 = vpack.c.b16 %v2868, %v2864
        %v2917 = vpack.c.b16 %v2869, %v2865
        %v2918 = vpack.c.b16 %v2870, %v2866
        %v2919 = vpack.c.b16 %v2871, %v2867
        %v2920 = vpack.c.b16 %v2876, %v2872
        %v2921 = vpack.c.b16 %v2877, %v2873
        %v2922 = vpack.c.b16 %v2878, %v2874
        %v2923 = vpack.c.b16 %v2879, %v2875
        %v2924 = vpack.c.b16 %v2884, %v2880
        %v2925 = vpack.c.b16 %v2885, %v2881
        %v2926 = vpack.c.b16 %v2886, %v2882
        %v2927 = vpack.c.b16 %v2887, %v2883
        %v2928 = vpack.c.b16 %v2892, %v2888
        %v2929 = vpack.c.b16 %v2893, %v2889
        %v2930 = vpack.c.b16 %v2894, %v2890
        %v2931 = vpack.c.b16 %v2895, %v2891
        %v2932 = vpack.c.b16 %v2900, %v2896
        %v2933 = vpack.c.b16 %v2901, %v2897
        %v2934 = vpack.c.b16 %v2902, %v2898
        %v2935 = vpack.c.b16 %v2903, %v2899
        %2968 = vmatprep.subr.bf16.mxu0 %v2905
        %2969 = vmatpush1.bf16.msra.mxu0 %v2904
        %2970 = vmatprep.subr.bf16.mxu0 %v2909
        %2971 = vmatpush1.bf16.msra.mxu0 %v2908
        %2972 = vmatprep.subr.bf16.mxu0 %v2913
        %2973 = vmatpush1.bf16.msra.mxu0 %v2912
        %2974 = vmatprep.subr.bf16.mxu0 %v2917
        %2975 = vmatpush1.bf16.msra.mxu0 %v2916
        %2976 = vmatprep.subr.bf16.mxu0 %v2921
        %2977 = vmatpush1.bf16.msra.mxu0 %v2920
        %2978 = vmatprep.subr.bf16.mxu0 %v2925
        %2979 = vmatpush1.bf16.msra.mxu0 %v2924
        %2980 = vmatprep.subr.bf16.mxu0 %v2929
        %2981 = vmatpush1.bf16.msra.mxu0 %v2928
        %2982 = vmatprep.subr.bf16.mxu0 %v2933
        %2983 = vmatpush1.bf16.msra.mxu0 %v2932
        %2984 = vmatprep.subr.bf16.mxu0 0
        %2985 = vmatpush1.bf16.msra.mxu0 0
        %2986 = vmatprep.subr.bf16.mxu0 0
        %2987 = vmatpush1.bf16.msra.mxu0 0
        %2988 = vmatprep.subr.bf16.mxu0 0
        %2989 = vmatpush1.bf16.msra.mxu0 0
        %2990 = vmatprep.subr.bf16.mxu0 0
        %2991 = vmatpush1.bf16.msra.mxu0 0
        %2992 = vmatprep.subr.bf16.mxu0 0
        %2993 = vmatpush1.bf16.msra.mxu0 0
        %2994 = vmatprep.subr.bf16.mxu0 0
        %2995 = vmatpush1.bf16.msra.mxu0 0
        %2996 = vmatprep.subr.bf16.mxu0 0
        %2997 = vmatpush1.bf16.msra.mxu0 0
        %2998 = vmatprep.subr.bf16.mxu0 0
        %2999 = vmatpush1.bf16.msra.mxu0 0
        %3000 = vmatprep.mubr.bf16.mxu0 0
        %3001 = vmatmul.mubr.bf16.gmra.mrb[0].mxu0 %v2751
        %v3002 = vpop.f32.mrb[0].mxu0
        %v3003 = vadd.f32 %v2791, %v3002
        %v3004 = vpop.f32.mrb[0].mxu0
        %v3005 = vadd.f32 %v2795, %v3004
        %v3006 = vpop.f32.mrb[0].mxu0
        %v3007 = vadd.f32 %v2791, %v3006
        %v3008 = vpop.f32.mrb[0].mxu0
        %v3009 = vadd.f32 %v2795, %v3008
        %3010 = vmatprep.mubr.bf16.mxu0 0
        %3011 = vmatmul.mubr.bf16.gmra.mrb[0].mxu0 %v2752
        %v3012 = vpop.f32.mrb[0].mxu0
        %v3013 = vadd.f32 %v2791, %v3012
        %v3014 = vpop.f32.mrb[0].mxu0
        %v3015 = vadd.f32 %v2795, %v3014
        %v3016 = vpop.f32.mrb[0].mxu0
        %v3017 = vadd.f32 %v2791, %v3016
        %v3018 = vpop.f32.mrb[0].mxu0
        %v3019 = vadd.f32 %v2795, %v3018
        %3020 = vmatprep.mubr.bf16.mxu0 0
        %3021 = vmatmul.mubr.bf16.gmra.mrb[0].mxu0 %v2753
        %v3022 = vpop.f32.mrb[0].mxu0
        %v3023 = vadd.f32 %v2791, %v3022
        %v3024 = vpop.f32.mrb[0].mxu0
        %v3025 = vadd.f32 %v2795, %v3024
        %v3026 = vpop.f32.mrb[0].mxu0
        %v3027 = vadd.f32 %v2791, %v3026
        %v3028 = vpop.f32.mrb[0].mxu0
        %v3029 = vadd.f32 %v2795, %v3028
        %3030 = vdwg.mxu0
        %3031 = vmatprep.subr.bf16.mxu0 %v2907
        %3032 = vmatpush1.bf16.msra.mxu0 %v2906
        %3033 = vmatprep.subr.bf16.mxu0 %v2911
        %3034 = vmatpush1.bf16.msra.mxu0 %v2910
        %3035 = vmatprep.subr.bf16.mxu0 %v2915
        %3036 = vmatpush1.bf16.msra.mxu0 %v2914
        %3037 = vmatprep.subr.bf16.mxu0 %v2919
        %3038 = vmatpush1.bf16.msra.mxu0 %v2918
        %3039 = vmatprep.subr.bf16.mxu0 %v2923
        %3040 = vmatpush1.bf16.msra.mxu0 %v2922
        %3041 = vmatprep.subr.bf16.mxu0 %v2927
        %3042 = vmatpush1.bf16.msra.mxu0 %v2926
        %3043 = vmatprep.subr.bf16.mxu0 %v2931
        %3044 = vmatpush1.bf16.msra.mxu0 %v2930
        %3045 = vmatprep.subr.bf16.mxu0 %v2935
        %3046 = vmatpush1.bf16.msra.mxu0 %v2934
        %3047 = vmatprep.subr.bf16.mxu0 0
        %3048 = vmatpush1.bf16.msra.mxu0 0
        %3049 = vmatprep.subr.bf16.mxu0 0
        %3050 = vmatpush1.bf16.msra.mxu0 0
        %3051 = vmatprep.subr.bf16.mxu0 0
        %3052 = vmatpush1.bf16.msra.mxu0 0
        %3053 = vmatprep.subr.bf16.mxu0 0
        %3054 = vmatpush1.bf16.msra.mxu0 0
        %3055 = vmatprep.subr.bf16.mxu0 0
        %3056 = vmatpush1.bf16.msra.mxu0 0
        %3057 = vmatprep.subr.bf16.mxu0 0
        %3058 = vmatpush1.bf16.msra.mxu0 0
        %3059 = vmatprep.subr.bf16.mxu0 0
        %3060 = vmatpush1.bf16.msra.mxu0 0
        %3061 = vmatprep.subr.bf16.mxu0 0
        %3062 = vmatpush1.bf16.msra.mxu0 0
        %3063 = vmatprep.mubr.bf16.mxu0 0
        %3064 = vmatmul.mubr.bf16.gmra.mrb[0].mxu0 %v2751
        %v3065 = vpop.f32.mrb[0].mxu0
        %v3066 = vadd.f32 %v2799, %v3065
        %v3067 = vpop.f32.mrb[0].mxu0
        %v3068 = vadd.f32 %v2803, %v3067
        %v3069 = vpop.f32.mrb[0].mxu0
        %v3070 = vadd.f32 %v2799, %v3069
        %v3071 = vpop.f32.mrb[0].mxu0
        %v3072 = vadd.f32 %v2803, %v3071
        %3073 = vmatprep.mubr.bf16.mxu0 0
        %3074 = vmatmul.mubr.bf16.gmra.mrb[0].mxu0 %v2752
        %v3075 = vpop.f32.mrb[0].mxu0
        %v3076 = vadd.f32 %v2799, %v3075
        %v3077 = vpop.f32.mrb[0].mxu0
        %v3078 = vadd.f32 %v2803, %v3077
        %v3079 = vpop.f32.mrb[0].mxu0
        %v3080 = vadd.f32 %v2799, %v3079
        %v3081 = vpop.f32.mrb[0].mxu0
        %v3082 = vadd.f32 %v2803, %v3081
        %3083 = vmatprep.mubr.bf16.mxu0 0
        %3084 = vmatmul.mubr.bf16.gmra.mrb[0].mxu0 %v2753
        %v3085 = vpop.f32.mrb[0].mxu0
        %v3086 = vadd.f32 %v2799, %v3085
        %v3087 = vpop.f32.mrb[0].mxu0
        %v3088 = vadd.f32 %v2803, %v3087
        %v3089 = vpop.f32.mrb[0].mxu0
        %v3090 = vadd.f32 %v2799, %v3089
        %v3091 = vpop.f32.mrb[0].mxu0
        %v3092 = vadd.f32 %v2803, %v3091
        %3093 = vdwg.mxu0
        %v3094 = vmul.f32 %v3003, 0.5
        %v3095 = vmul.f32 %v3005, 0.5
        %v3096 = vmul.f32 %v3066, 0.5
        %v3097 = vmul.f32 %v3068, 0.5
        %v3098 = vmul.f32 %v3007, 0.5
        %v3099 = vmul.f32 %v3009, 0.5
        %v3100 = vmul.f32 %v3070, 0.5
        %v3101 = vmul.f32 %v3072, 0.5
        %v3102 = vmul.f32 %v3013, 0.5
        %v3103 = vmul.f32 %v3015, 0.5
        %v3104 = vmul.f32 %v3076, 0.5
        %v3105 = vmul.f32 %v3078, 0.5
        %v3106 = vmul.f32 %v3017, 0.5
        %v3107 = vmul.f32 %v3019, 0.5
        %v3108 = vmul.f32 %v3080, 0.5
        %v3109 = vmul.f32 %v3082, 0.5
        %v3110 = vmul.f32 %v3023, 0.5
        %v3111 = vmul.f32 %v3025, 0.5
        %v3112 = vmul.f32 %v3086, 0.5
        %v3113 = vmul.f32 %v3088, 0.5
        %v3114 = vmul.f32 %v3027, 0.5
        %v3115 = vmul.f32 %v3029, 0.5
        %v3116 = vmul.f32 %v3090, 0.5
        %v3117 = vmul.f32 %v3092, 0.5
        %v3118 = vmul.f32 %v3003, 0.044715
        %v3119 = vmul.f32 %v3005, 0.044715
        %v3120 = vmul.f32 %v3066, 0.044715
        %v3121 = vmul.f32 %v3068, 0.044715
        %v3122 = vmul.f32 %v3007, 0.044715
        %v3123 = vmul.f32 %v3009, 0.044715
        %v3124 = vmul.f32 %v3070, 0.044715
        %v3125 = vmul.f32 %v3072, 0.044715
        %v3126 = vmul.f32 %v3013, 0.044715
        %v3127 = vmul.f32 %v3015, 0.044715
        %v3128 = vmul.f32 %v3076, 0.044715
        %v3129 = vmul.f32 %v3078, 0.044715
        %v3130 = vmul.f32 %v3017, 0.044715
        %v3131 = vmul.f32 %v3019, 0.044715
        %v3132 = vmul.f32 %v3080, 0.044715
        %v3133 = vmul.f32 %v3082, 0.044715
        %v3134 = vmul.f32 %v3023, 0.044715
        %v3135 = vmul.f32 %v3025, 0.044715
        %v3136 = vmul.f32 %v3086, 0.044715
        %v3137 = vmul.f32 %v3088, 0.044715
        %v3138 = vmul.f32 %v3027, 0.044715
        %v3139 = vmul.f32 %v3029, 0.044715
        %v3140 = vmul.f32 %v3090, 0.044715
        %v3141 = vmul.f32 %v3092, 0.044715
        %v3142 = vmul.f32 %v3118, %v3003
        %v3143 = vmul.f32 %v3119, %v3005
        %v3144 = vmul.f32 %v3120, %v3066
        %v3145 = vmul.f32 %v3121, %v3068
        %v3146 = vmul.f32 %v3122, %v3007
        %v3147 = vmul.f32 %v3123, %v3009
        %v3148 = vmul.f32 %v3124, %v3070
        %v3149 = vmul.f32 %v3125, %v3072
        %v3150 = vmul.f32 %v3126, %v3013
        %v3151 = vmul.f32 %v3127, %v3015
        %v3152 = vmul.f32 %v3128, %v3076
        %v3153 = vmul.f32 %v3129, %v3078
        %v3154 = vmul.f32 %v3130, %v3017
        %v3155 = vmul.f32 %v3131, %v3019
        %v3156 = vmul.f32 %v3132, %v3080
        %v3157 = vmul.f32 %v3133, %v3082
        %v3158 = vmul.f32 %v3134, %v3023
        %v3159 = vmul.f32 %v3135, %v3025
        %v3160 = vmul.f32 %v3136, %v3086
        %v3161 = vmul.f32 %v3137, %v3088
        %v3162 = vmul.f32 %v3138, %v3027
        %v3163 = vmul.f32 %v3139, %v3029
        %v3164 = vmul.f32 %v3140, %v3090
        %v3165 = vmul.f32 %v3141, %v3092
        %v3166 = vmul.f32 %v3142, %v3003
        %v3167 = vmul.f32 %v3143, %v3005
        %v3168 = vmul.f32 %v3144, %v3066
        %v3169 = vmul.f32 %v3145, %v3068
        %v3170 = vmul.f32 %v3146, %v3007
        %v3171 = vmul.f32 %v3147, %v3009
        %v3172 = vmul.f32 %v3148, %v3070
        %v3173 = vmul.f32 %v3149, %v3072
        %v3174 = vmul.f32 %v3150, %v3013
        %v3175 = vmul.f32 %v3151, %v3015
        %v3176 = vmul.f32 %v3152, %v3076
        %v3177 = vmul.f32 %v3153, %v3078
        %v3178 = vmul.f32 %v3154, %v3017
        %v3179 = vmul.f32 %v3155, %v3019
        %v3180 = vmul.f32 %v3156, %v3080
        %v3181 = vmul.f32 %v3157, %v3082
        %v3182 = vmul.f32 %v3158, %v3023
        %v3183 = vmul.f32 %v3159, %v3025
        %v3184 = vmul.f32 %v3160, %v3086
        %v3185 = vmul.f32 %v3161, %v3088
        %v3186 = vmul.f32 %v3162, %v3027
        %v3187 = vmul.f32 %v3163, %v3029
        %v3188 = vmul.f32 %v3164, %v3090
        %v3189 = vmul.f32 %v3165, %v3092
        %v3190 = vadd.f32 %v3003, %v3166
        %v3191 = vadd.f32 %v3005, %v3167
        %v3192 = vadd.f32 %v3066, %v3168
        %v3193 = vadd.f32 %v3068, %v3169
        %v3194 = vadd.f32 %v3007, %v3170
        %v3195 = vadd.f32 %v3009, %v3171
        %v3196 = vadd.f32 %v3070, %v3172
        %v3197 = vadd.f32 %v3072, %v3173
        %v3198 = vadd.f32 %v3013, %v3174
        %v3199 = vadd.f32 %v3015, %v3175
        %v3200 = vadd.f32 %v3076, %v3176
        %v3201 = vadd.f32 %v3078, %v3177
        %v3202 = vadd.f32 %v3017, %v3178
        %v3203 = vadd.f32 %v3019, %v3179
        %v3204 = vadd.f32 %v3080, %v3180
        %v3205 = vadd.f32 %v3082, %v3181
        %v3206 = vadd.f32 %v3023, %v3182
        %v3207 = vadd.f32 %v3025, %v3183
        %v3208 = vadd.f32 %v3086, %v3184
        %v3209 = vadd.f32 %v3088, %v3185
        %v3210 = vadd.f32 %v3027, %v3186
        %v3211 = vadd.f32 %v3029, %v3187
        %v3212 = vadd.f32 %v3090, %v3188
        %v3213 = vadd.f32 %v3092, %v3189
        %v3214 = vmul.f32 %v3190, 0.7978846
        %v3215 = vmul.f32 %v3191, 0.7978846
        %v3216 = vmul.f32 %v3192, 0.7978846
        %v3217 = vmul.f32 %v3193, 0.7978846
        %v3218 = vmul.f32 %v3194, 0.7978846
        %v3219 = vmul.f32 %v3195, 0.7978846
        %v3220 = vmul.f32 %v3196, 0.7978846
        %v3221 = vmul.f32 %v3197, 0.7978846
        %v3222 = vmul.f32 %v3198, 0.7978846
        %v3223 = vmul.f32 %v3199, 0.7978846
        %v3224 = vmul.f32 %v3200, 0.7978846
        %v3225 = vmul.f32 %v3201, 0.7978846
        %v3226 = vmul.f32 %v3202, 0.7978846
        %v3227 = vmul.f32 %v3203, 0.7978846
        %v3228 = vmul.f32 %v3204, 0.7978846
        %v3229 = vmul.f32 %v3205, 0.7978846
        %v3230 = vmul.f32 %v3206, 0.7978846
        %v3231 = vmul.f32 %v3207, 0.7978846
        %v3232 = vmul.f32 %v3208, 0.7978846
        %v3233 = vmul.f32 %v3209, 0.7978846
        %v3234 = vmul.f32 %v3210, 0.7978846
        %v3235 = vmul.f32 %v3211, 0.7978846
        %v3236 = vmul.f32 %v3212, 0.7978846
        %v3237 = vmul.f32 %v3213, 0.7978846
        %v3238 = vtanh.pop %v3214
        %v3239 = vtanh.pop %v3215
        %v3240 = vtanh.pop %v3216
        %v3241 = vtanh.pop %v3217
        %v3242 = vtanh.pop %v3218
        %v3243 = vtanh.pop %v3219
        %v3244 = vtanh.pop %v3220
        %v3245 = vtanh.pop %v3221
        %v3246 = vtanh.pop %v3222
        %v3247 = vtanh.pop %v3223
        %v3248 = vtanh.pop %v3224
        %v3249 = vtanh.pop %v3225
        %v3250 = vtanh.pop %v3226
        %v3251 = vtanh.pop %v3227
        %v3252 = vtanh.pop %v3228
        %v3253 = vtanh.pop %v3229
        %v3254 = vtanh.pop %v3230
        %v3255 = vtanh.pop %v3231
        %v3256 = vtanh.pop %v3232
        %v3257 = vtanh.pop %v3233
        %v3258 = vtanh.pop %v3234
        %v3259 = vtanh.pop %v3235
        %v3260 = vtanh.pop %v3236
        %v3261 = vtanh.pop %v3237
        %v3262 = vadd.f32 %v3238, 1.0
        %v3263 = vadd.f32 %v3239, 1.0
        %v3264 = vadd.f32 %v3240, 1.0
        %v3265 = vadd.f32 %v3241, 1.0
        %v3266 = vadd.f32 %v3242, 1.0
        %v3267 = vadd.f32 %v3243, 1.0
        %v3268 = vadd.f32 %v3244, 1.0
        %v3269 = vadd.f32 %v3245, 1.0
        %v3270 = vadd.f32 %v3246, 1.0
        %v3271 = vadd.f32 %v3247, 1.0
        %v3272 = vadd.f32 %v3248, 1.0
        %v3273 = vadd.f32 %v3249, 1.0
        %v3274 = vadd.f32 %v3250, 1.0
        %v3275 = vadd.f32 %v3251, 1.0
        %v3276 = vadd.f32 %v3252, 1.0
        %v3277 = vadd.f32 %v3253, 1.0
        %v3278 = vadd.f32 %v3254, 1.0
        %v3279 = vadd.f32 %v3255, 1.0
        %v3280 = vadd.f32 %v3256, 1.0
        %v3281 = vadd.f32 %v3257, 1.0
        %v3282 = vadd.f32 %v3258, 1.0
        %v3283 = vadd.f32 %v3259, 1.0
        %v3284 = vadd.f32 %v3260, 1.0
        %v3285 = vadd.f32 %v3261, 1.0
        %v3286 = vmul.f32 %v3094, %v3262
        %v3287 = vmul.f32 %v3095, %v3263
        %v3288 = vmul.f32 %v3096, %v3264
        %v3289 = vmul.f32 %v3097, %v3265
        %v3290 = vmul.f32 %v3098, %v3266
        %v3291 = vmul.f32 %v3099, %v3267
        %v3292 = vmul.f32 %v3100, %v3268
        %v3293 = vmul.f32 %v3101, %v3269
        %v3294 = vmul.f32 %v3102, %v3270
        %v3295 = vmul.f32 %v3103, %v3271
        %v3296 = vmul.f32 %v3104, %v3272
        %v3297 = vmul.f32 %v3105, %v3273
        %v3298 = vmul.f32 %v3106, %v3274
        %v3299 = vmul.f32 %v3107, %v3275
        %v3300 = vmul.f32 %v3108, %v3276
        %v3301 = vmul.f32 %v3109, %v3277
        %v3302 = vmul.f32 %v3110, %v3278
        %v3303 = vmul.f32 %v3111, %v3279
        %v3304 = vmul.f32 %v3112, %v3280
        %v3305 = vmul.f32 %v3113, %v3281
        %v3306 = vmul.f32 %v3114, %v3282
        %v3307 = vmul.f32 %v3115, %v3283
        %v3308 = vmul.f32 %v3116, %v3284
        %v3309 = vmul.f32 %v3117, %v3285
        %v3310 = vpack.c.bf16 %v3290, %v3286
        %v3311 = vpack.c.bf16 %v3291, %v3287
        %v3312 = vpack.c.bf16 %v3292, %v3288
        %v3313 = vpack.c.bf16 %v3293, %v3289
        %v3314 = vpack.c.bf16 %v3298, %v3294
        %v3315 = vpack.c.bf16 %v3299, %v3295
        %v3316 = vpack.c.bf16 %v3300, %v3296
        %v3317 = vpack.c.bf16 %v3301, %v3297
        %v3318 = vpack.c.bf16 %v3306, %v3302
        %v3319 = vpack.c.bf16 %v3307, %v3303
        %v3320 = vpack.c.bf16 %v3308, %v3304
        %v3321 = vpack.c.bf16 %v3309, %v3305
        %v3322 = vld [vmem:[%s734] sm:$0xf]
        %v3323 = vld [vmem:[%s734 + $0x4] sm:$0xf]
        %v3324 = vld [vmem:[%s734 + $0x8] sm:$0xf]
        %v3325 = vld [vmem:[%s734 + $0xc] sm:$0xf]
        %v3326 = vld [vmem:[%s734 + $0x10] sm:$0xf]
        %v3327 = vld [vmem:[%s734 + $0x14] sm:$0xf]
        %v3328 = vld [vmem:[%s734 + $0x18] sm:$0xf]
        %v3329 = vld [vmem:[%s734 + $0x1c] sm:$0xf]
        %v3330 = vld [vmem:[%s734 + $0x20] sm:$0xf]
        %v3331 = vld [vmem:[%s734 + $0x24] sm:$0xf]
        %v3332 = vld [vmem:[%s734 + $0x28] sm:$0xf]
        %v3333 = vld [vmem:[%s734 + $0x2c] sm:$0xf]
        %v3334 = vld [vmem:[%s734 + $0x30] sm:$0xf]
        %v3335 = vld [vmem:[%s734 + $0x34] sm:$0xf]
        %v3336 = vld [vmem:[%s734 + $0x38] sm:$0xf]
        %v3337 = vld [vmem:[%s734 + $0x3c] sm:$0xf]
        %v3338 = vld [vmem:[%s734 + $0x40] sm:$0xf]
        %v3339 = vld [vmem:[%s734 + $0x44] sm:$0xf]
        %v3340 = vld [vmem:[%s734 + $0x48] sm:$0xf]
        %v3341 = vld [vmem:[%s734 + $0x4c] sm:$0xf]
        %v3342 = vld [vmem:[%s734 + $0x50] sm:$0xf]
        %v3343 = vld [vmem:[%s734 + $0x54] sm:$0xf]
        %v3344 = vld [vmem:[%s734 + $0x58] sm:$0xf]
        %v3345 = vld [vmem:[%s734 + $0x5c] sm:$0xf]
        %v3346 = vld [vmem:[%s734 + $0x60] sm:$0xf]
        %v3347 = vld [vmem:[%s734 + $0x64] sm:$0xf]
        %v3348 = vld [vmem:[%s734 + $0x68] sm:$0xf]
        %v3349 = vld [vmem:[%s734 + $0x6c] sm:$0xf]
        %v3350 = vld [vmem:[%s734 + $0x70] sm:$0xf]
        %v3351 = vld [vmem:[%s734 + $0x74] sm:$0xf]
        %v3352 = vld [vmem:[%s734 + $0x78] sm:$0xf]
        %v3353 = vld [vmem:[%s734 + $0x7c] sm:$0xf]
        %v3354 = vld [vmem:[%s734 + $0x80] sm:$0xf]
        %v3355 = vld [vmem:[%s734 + $0x84] sm:$0xf]
        %v3356 = vld [vmem:[%s734 + $0x88] sm:$0xf]
        %v3357 = vld [vmem:[%s734 + $0x8c] sm:$0xf]
        %v3358 = vld [vmem:[%s734 + $0x90] sm:$0xf]
        %v3359 = vld [vmem:[%s734 + $0x94] sm:$0xf]
        %v3360 = vld [vmem:[%s734 + $0x98] sm:$0xf]
        %v3361 = vld [vmem:[%s734 + $0x9c] sm:$0xf]
        %v3362 = vld [vmem:[%s734 + $0xa0] sm:$0xf]
        %v3363 = vld [vmem:[%s734 + $0xa4] sm:$0xf]
        %v3364 = vld [vmem:[%s734 + $0xa8] sm:$0xf]
        %v3365 = vld [vmem:[%s734 + $0xac] sm:$0xf]
        %v3366 = vld [vmem:[%s734 + $0xb0] sm:$0xf]
        %v3367 = vld [vmem:[%s734 + $0xb4] sm:$0xf]
        %v3368 = vld [vmem:[%s734 + $0xb8] sm:$0xf]
        %v3369 = vld [vmem:[%s734 + $0xbc] sm:$0xf]
        %v3370 = vld [vmem:[%s734 + $0xc0] sm:$0xf]
        %v3371 = vld [vmem:[%s734 + $0xc4] sm:$0xf]
        %v3372 = vld [vmem:[%s734 + $0xc8] sm:$0xf]
        %v3373 = vld [vmem:[%s734 + $0xcc] sm:$0xf]
        %v3374 = vld [vmem:[%s734 + $0xd0] sm:$0xf]
        %v3375 = vld [vmem:[%s734 + $0xd4] sm:$0xf]
        %v3376 = vld [vmem:[%s734 + $0xd8] sm:$0xf]
        %v3377 = vld [vmem:[%s734 + $0xdc] sm:$0xf]
        %v3378 = vld [vmem:[%s734 + $0xe0] sm:$0xf]
        %v3379 = vld [vmem:[%s734 + $0xe4] sm:$0xf]
        %v3380 = vld [vmem:[%s734 + $0xe8] sm:$0xf]
        %v3381 = vld [vmem:[%s734 + $0xec] sm:$0xf]
        %v3382 = vld [vmem:[%s734 + $0xf0] sm:$0xf]
        %v3383 = vld [vmem:[%s734 + $0xf4] sm:$0xf]
        %v3384 = vld [vmem:[%s734 + $0xf8] sm:$0xf]
        %v3385 = vld [vmem:[%s734 + $0xfc] sm:$0xf]
        %v3386 = vld [vmem:[%s617] sm:$0x1]
        %v3388 = vlaneseq
        %v3389 = vshrl.u32 %v3388, 7
        %v3390 = vsub.s32 0, %v3389
        %v3391 = vrot.slane %v3386, %v3390
        %v3457 = vunpack.c.l.b16 %v3322
        %v3458 = vunpack.c.l.b16 %v3323
        %v3459 = vunpack.c.l.b16 %v3324
        %v3460 = vunpack.c.l.b16 %v3325
        %v3461 = vunpack.c.l.b16 %v3326
        %v3462 = vunpack.c.l.b16 %v3327
        %v3463 = vunpack.c.l.b16 %v3328
        %v3464 = vunpack.c.l.b16 %v3329
        %v3465 = vunpack.c.l.b16 %v3330
        %v3466 = vunpack.c.l.b16 %v3331
        %v3467 = vunpack.c.l.b16 %v3332
        %v3468 = vunpack.c.l.b16 %v3333
        %v3469 = vunpack.c.l.b16 %v3334
        %v3470 = vunpack.c.l.b16 %v3335
        %v3471 = vunpack.c.l.b16 %v3336
        %v3472 = vunpack.c.l.b16 %v3337
        %v3473 = vunpack.c.l.b16 %v3338
        %v3474 = vunpack.c.l.b16 %v3339
        %v3475 = vunpack.c.l.b16 %v3340
        %v3476 = vunpack.c.l.b16 %v3341
        %v3477 = vunpack.c.l.b16 %v3342
        %v3478 = vunpack.c.l.b16 %v3343
        %v3479 = vunpack.c.l.b16 %v3344
        %v3480 = vunpack.c.l.b16 %v3345
        %v3481 = vunpack.c.l.b16 %v3346
        %v3482 = vunpack.c.l.b16 %v3347
        %v3483 = vunpack.c.l.b16 %v3348
        %v3484 = vunpack.c.l.b16 %v3349
        %v3485 = vunpack.c.l.b16 %v3350
        %v3486 = vunpack.c.l.b16 %v3351
        %v3487 = vunpack.c.l.b16 %v3352
        %v3488 = vunpack.c.l.b16 %v3353
        %v3489 = vunpack.c.l.b16 %v3354
        %v3490 = vunpack.c.l.b16 %v3355
        %v3491 = vunpack.c.l.b16 %v3356
        %v3492 = vunpack.c.l.b16 %v3357
        %v3493 = vunpack.c.l.b16 %v3358
        %v3494 = vunpack.c.l.b16 %v3359
        %v3495 = vunpack.c.l.b16 %v3360
        %v3496 = vunpack.c.l.b16 %v3361
        %v3497 = vunpack.c.l.b16 %v3362
        %v3498 = vunpack.c.l.b16 %v3363
        %v3499 = vunpack.c.l.b16 %v3364
        %v3500 = vunpack.c.l.b16 %v3365
        %v3501 = vunpack.c.l.b16 %v3366
        %v3502 = vunpack.c.l.b16 %v3367
        %v3503 = vunpack.c.l.b16 %v3368
        %v3504 = vunpack.c.l.b16 %v3369
        %v3505 = vunpack.c.l.b16 %v3370
        %v3506 = vunpack.c.l.b16 %v3371
        %v3507 = vunpack.c.l.b16 %v3372
        %v3508 = vunpack.c.l.b16 %v3373
        %v3509 = vunpack.c.l.b16 %v3374
        %v3510 = vunpack.c.l.b16 %v3375
        %v3511 = vunpack.c.l.b16 %v3376
        %v3512 = vunpack.c.l.b16 %v3377
        %v3513 = vunpack.c.l.b16 %v3378
        %v3514 = vunpack.c.l.b16 %v3379
        %v3515 = vunpack.c.l.b16 %v3380
        %v3516 = vunpack.c.l.b16 %v3381
        %v3517 = vunpack.c.l.b16 %v3382
        %v3518 = vunpack.c.l.b16 %v3383
        %v3519 = vunpack.c.l.b16 %v3384
        %v3520 = vunpack.c.l.b16 %v3385
        %v3521 = vpack.c.b16 %v3458, %v3457
        %v3522 = vpack.c.b16 %v3460, %v3459
        %v3523 = vpack.c.b16 %v3462, %v3461
        %v3524 = vpack.c.b16 %v3464, %v3463
        %v3525 = vpack.c.b16 %v3466, %v3465
        %v3526 = vpack.c.b16 %v3468, %v3467
        %v3527 = vpack.c.b16 %v3470, %v3469
        %v3528 = vpack.c.b16 %v3472, %v3471
        %v3529 = vpack.c.b16 %v3474, %v3473
        %v3530 = vpack.c.b16 %v3476, %v3475
        %v3531 = vpack.c.b16 %v3478, %v3477
        %v3532 = vpack.c.b16 %v3480, %v3479
        %v3533 = vpack.c.b16 %v3482, %v3481
        %v3534 = vpack.c.b16 %v3484, %v3483
        %v3535 = vpack.c.b16 %v3486, %v3485
        %v3536 = vpack.c.b16 %v3488, %v3487
        %v3537 = vpack.c.b16 %v3490, %v3489
        %v3538 = vpack.c.b16 %v3492, %v3491
        %v3539 = vpack.c.b16 %v3494, %v3493
        %v3540 = vpack.c.b16 %v3496, %v3495
        %v3541 = vpack.c.b16 %v3498, %v3497
        %v3542 = vpack.c.b16 %v3500, %v3499
        %v3543 = vpack.c.b16 %v3502, %v3501
        %v3544 = vpack.c.b16 %v3504, %v3503
        %v3545 = vpack.c.b16 %v3506, %v3505
        %v3546 = vpack.c.b16 %v3508, %v3507
        %v3547 = vpack.c.b16 %v3510, %v3509
        %v3548 = vpack.c.b16 %v3512, %v3511
        %v3549 = vpack.c.b16 %v3514, %v3513
        %v3550 = vpack.c.b16 %v3516, %v3515
        %v3551 = vpack.c.b16 %v3518, %v3517
        %v3552 = vpack.c.b16 %v3520, %v3519
        %3585 = vmatprep.subr.bf16.mxu0 0
        %3586 = vmatpush1.bf16.msra.mxu0 %v3521
        %3587 = vmatprep.subr.bf16.mxu0 0
        %3588 = vmatpush1.bf16.msra.mxu0 %v3522
        %3589 = vmatprep.subr.bf16.mxu0 0
        %3590 = vmatpush1.bf16.msra.mxu0 %v3523
        %3591 = vmatprep.subr.bf16.mxu0 0
        %3592 = vmatpush1.bf16.msra.mxu0 %v3524
        %3593 = vmatprep.subr.bf16.mxu0 0
        %3594 = vmatpush1.bf16.msra.mxu0 %v3525
        %3595 = vmatprep.subr.bf16.mxu0 0
        %3596 = vmatpush1.bf16.msra.mxu0 %v3526
        %3597 = vmatprep.subr.bf16.mxu0 0
        %3598 = vmatpush1.bf16.msra.mxu0 %v3527
        %3599 = vmatprep.subr.bf16.mxu0 0
        %3600 = vmatpush1.bf16.msra.mxu0 %v3528
        %3601 = vmatprep.subr.bf16.mxu0 0
        %3602 = vmatpush1.bf16.msra.mxu0 %v3529
        %3603 = vmatprep.subr.bf16.mxu0 0
        %3604 = vmatpush1.bf16.msra.mxu0 %v3530
        %3605 = vmatprep.subr.bf16.mxu0 0
        %3606 = vmatpush1.bf16.msra.mxu0 %v3531
        %3607 = vmatprep.subr.bf16.mxu0 0
        %3608 = vmatpush1.bf16.msra.mxu0 %v3532
        %3609 = vmatprep.subr.bf16.mxu0 0
        %3610 = vmatpush1.bf16.msra.mxu0 %v3533
        %3611 = vmatprep.subr.bf16.mxu0 0
        %3612 = vmatpush1.bf16.msra.mxu0 %v3534
        %3613 = vmatprep.subr.bf16.mxu0 0
        %3614 = vmatpush1.bf16.msra.mxu0 %v3535
        %3615 = vmatprep.subr.bf16.mxu0 0
        %3616 = vmatpush1.bf16.msra.mxu0 %v3536
        %3617 = vmatprep.mubr.bf16.mxu0 %v3311
        %3618 = vmatmul.mubr.bf16.gmra.mrb[0].mxu0 %v3310
        %v3619 = vpop.f32.mrb[0].mxu0
        %v3620 = vadd.f32 %v3391, %v3619
        %v3621 = vpop.f32.mrb[0].mxu0
        %v3622 = vpop.f32.mrb[0].mxu0
        %v3623 = vadd.f32 %v3391, %v3622
        %v3624 = vpop.f32.mrb[0].mxu0
        %3625 = vmatprep.mubr.bf16.mxu0 %v3315
        %3626 = vmatmul.mubr.bf16.gmra.mrb[0].mxu0 %v3314
        %v3627 = vpop.f32.mrb[0].mxu0
        %v3628 = vadd.f32 %v3391, %v3627
        %v3629 = vpop.f32.mrb[0].mxu0
        %v3630 = vpop.f32.mrb[0].mxu0
        %v3631 = vadd.f32 %v3391, %v3630
        %v3632 = vpop.f32.mrb[0].mxu0
        %3633 = vmatprep.mubr.bf16.mxu0 %v3319
        %3634 = vmatmul.mubr.bf16.gmra.mrb[0].mxu0 %v3318
        %v3635 = vpop.f32.mrb[0].mxu0
        %v3636 = vadd.f32 %v3391, %v3635
        %v3637 = vpop.f32.mrb[0].mxu0
        %v3638 = vpop.f32.mrb[0].mxu0
        %v3639 = vadd.f32 %v3391, %v3638
        %v3640 = vpop.f32.mrb[0].mxu0
        %3641 = vdwg.mxu0
        %3642 = vmatprep.subr.bf16.mxu0 0
        %3643 = vmatpush1.bf16.msra.mxu0 %v3537
        %3644 = vmatprep.subr.bf16.mxu0 0
        %3645 = vmatpush1.bf16.msra.mxu0 %v3538
        %3646 = vmatprep.subr.bf16.mxu0 0
        %3647 = vmatpush1.bf16.msra.mxu0 %v3539
        %3648 = vmatprep.subr.bf16.mxu0 0
        %3649 = vmatpush1.bf16.msra.mxu0 %v3540
        %3650 = vmatprep.subr.bf16.mxu0 0
        %3651 = vmatpush1.bf16.msra.mxu0 %v3541
        %3652 = vmatprep.subr.bf16.mxu0 0
        %3653 = vmatpush1.bf16.msra.mxu0 %v3542
        %3654 = vmatprep.subr.bf16.mxu0 0
        %3655 = vmatpush1.bf16.msra.mxu0 %v3543
        %3656 = vmatprep.subr.bf16.mxu0 0
        %3657 = vmatpush1.bf16.msra.mxu0 %v3544
        %3658 = vmatprep.subr.bf16.mxu0 0
        %3659 = vmatpush1.bf16.msra.mxu0 %v3545
        %3660 = vmatprep.subr.bf16.mxu0 0
        %3661 = vmatpush1.bf16.msra.mxu0 %v3546
        %3662 = vmatprep.subr.bf16.mxu0 0
        %3663 = vmatpush1.bf16.msra.mxu0 %v3547
        %3664 = vmatprep.subr.bf16.mxu0 0
        %3665 = vmatpush1.bf16.msra.mxu0 %v3548
        %3666 = vmatprep.subr.bf16.mxu0 0
        %3667 = vmatpush1.bf16.msra.mxu0 %v3549
        %3668 = vmatprep.subr.bf16.mxu0 0
        %3669 = vmatpush1.bf16.msra.mxu0 %v3550
        %3670 = vmatprep.subr.bf16.mxu0 0
        %3671 = vmatpush1.bf16.msra.mxu0 %v3551
        %3672 = vmatprep.subr.bf16.mxu0 0
        %3673 = vmatpush1.bf16.msra.mxu0 %v3552
        %3674 = vmatprep.mubr.bf16.mxu0 %v3313
        %3675 = vmatmul.mubr.bf16.gmra.mrb[0].mxu0 %v3312
        %v3676 = vpop.f32.mrb[0].mxu0
        %v3677 = vadd.f32 %v3620, %v3676
        %v3678 = vpop.f32.mrb[0].mxu0
        %v3679 = vpop.f32.mrb[0].mxu0
        %v3680 = vadd.f32 %v3623, %v3679
        %v3681 = vpop.f32.mrb[0].mxu0
        %3682 = vmatprep.mubr.bf16.mxu0 %v3317
        %3683 = vmatmul.mubr.bf16.gmra.mrb[0].mxu0 %v3316
        %v3684 = vpop.f32.mrb[0].mxu0
        %v3685 = vadd.f32 %v3628, %v3684
        %v3686 = vpop.f32.mrb[0].mxu0
        %v3687 = vpop.f32.mrb[0].mxu0
        %v3688 = vadd.f32 %v3631, %v3687
        %v3689 = vpop.f32.mrb[0].mxu0
        %3690 = vmatprep.mubr.bf16.mxu0 %v3321
        %3691 = vmatmul.mubr.bf16.gmra.mrb[0].mxu0 %v3320
        %v3692 = vpop.f32.mrb[0].mxu0
        %v3693 = vadd.f32 %v3636, %v3692
        %v3694 = vpop.f32.mrb[0].mxu0
        %v3695 = vpop.f32.mrb[0].mxu0
        %v3696 = vadd.f32 %v3639, %v3695
        %v3697 = vpop.f32.mrb[0].mxu0
        %3698 = vdwg.mxu0
        %v3699 = vadd.f32 %v2653, %v3677
        %v3700 = vadd.f32 %v2654, %v3680
        %v3701 = vadd.f32 %v2655, %v3685
        %v3702 = vadd.f32 %v2656, %v3688
        %v3703 = vadd.f32 %v2657, %v3693
        %v3704 = vadd.f32 %v2658, %v3696
        %3705 = vst [vmem:[#allocation2] sm:$0xff] %v3699
        %3706 = vst [vmem:[#allocation2 + $0x8] sm:$0xff] %v3700
        %3707 = vst [vmem:[#allocation2 + $0x10] sm:$0xff] %v3701
        %3708 = vst [vmem:[#allocation2 + $0x18] sm:$0xff] %v3702
        %3709 = vst [vmem:[#allocation2 + $0x20] sm:$0xff] %v3703
        %3710 = vst [vmem:[#allocation2 + $0x28] sm:$0xff] %v3704
        %p3711 = scmp.eq.s32.totalorder %s35, 2
        // Predicated region
        $region101: #{encoder_forward.1} parent=79 // pred_check
          %p3712 = pneg %p3711
        $region102: #{encoder_forward.1} parent=79 // pred_check_branch
          %3714 = sbr.rel (%p3712) target = $region104
        $region103: #{encoder_forward.1} parent=79 // pred_region
          %3715 = vst [vmem:[%s15] sm:$0xff] %v3699
          %3716 = vst [vmem:[%s15 + $0x8] sm:$0xff] %v3700
          %3717 = vst [vmem:[%s15 + $0x10] sm:$0xff] %v3701
          %3718 = vst [vmem:[%s15 + $0x18] sm:$0xff] %v3702
          %3719 = vst [vmem:[%s15 + $0x20] sm:$0xff] %v3703
          %3720 = vst [vmem:[%s15 + $0x28] sm:$0xff] %v3704
        $region104: #{encoder_forward.1} parent=79 // pred_fallthru
          _
        %p3721 = scmp.eq.s32.totalorder %s35, 5
        // Predicated region
        $region105: #{encoder_forward.1} parent=79 // pred_check
          %p3722 = pneg %p3721
        $region106: #{encoder_forward.1} parent=79 // pred_check_branch
          %3724 = sbr.rel (%p3722) target = $region108
        $region107: #{encoder_forward.1} parent=79 // pred_region
          %s3725 = scalar_lea.vmem %s15, 48
          %3726 = vst [vmem:[%s3725] sm:$0xff] %v3699
          %3727 = vst [vmem:[%s3725 + $0x8] sm:$0xff] %v3700
          %3728 = vst [vmem:[%s3725 + $0x10] sm:$0xff] %v3701
          %3729 = vst [vmem:[%s3725 + $0x18] sm:$0xff] %v3702
          %3730 = vst [vmem:[%s3725 + $0x20] sm:$0xff] %v3703
          %3731 = vst [vmem:[%s3725 + $0x28] sm:$0xff] %v3704
        $region108: #{encoder_forward.1} parent=79 // pred_fallthru
          _
        %p3732 = scmp.eq.s32.totalorder %s35, 8
        // Predicated region
        $region109: #{encoder_forward.1} parent=79 // pred_check
          %p3733 = pneg %p3732
        $region110: #{encoder_forward.1} parent=79 // pred_check_branch
          %3735 = sbr.rel (%p3733) target = $region112
        $region111: #{encoder_forward.1} parent=79 // pred_region
          %s3736 = scalar_lea.vmem %s15, 96
          %3737 = vst [vmem:[%s3736] sm:$0xff] %v3699
          %3738 = vst [vmem:[%s3736 + $0x8] sm:$0xff] %v3700
          %3739 = vst [vmem:[%s3736 + $0x10] sm:$0xff] %v3701
          %3740 = vst [vmem:[%s3736 + $0x18] sm:$0xff] %v3702
          %3741 = vst [vmem:[%s3736 + $0x20] sm:$0xff] %v3703
          %3742 = vst [vmem:[%s3736 + $0x28] sm:$0xff] %v3704
        $region112: #{encoder_forward.1} parent=79 // pred_fallthru
          _
        %p3743 = scmp.eq.s32.totalorder %s35, 11
        // Predicated region
        $region113: #{encoder_forward.1} parent=79 // pred_check
          %p3744 = pneg %p3743
        $region114: #{encoder_forward.1} parent=79 // pred_check_branch
          %3746 = sbr.rel (%p3744) target = $region116
        $region115: #{encoder_forward.1} parent=79 // pred_region
          %s3747 = scalar_lea.vmem %s15, 144
          %3748 = vst [vmem:[%s3747] sm:$0xff] %v3699
          %3749 = vst [vmem:[%s3747 + $0x8] sm:$0xff] %v3700
          %3750 = vst [vmem:[%s3747 + $0x10] sm:$0xff] %v3701
          %3751 = vst [vmem:[%s3747 + $0x18] sm:$0xff] %v3702
          %3752 = vst [vmem:[%s3747 + $0x20] sm:$0xff] %v3703
          %3753 = vst [vmem:[%s3747 + $0x28] sm:$0xff] %v3704
        $region116: #{encoder_forward.1} parent=79 // pred_fallthru
          _
        // Predicated region
        $region117: #{encoder_forward.1} parent=79 // pred_check
          %p3754 = pneg %p423
        $region118: #{encoder_forward.1} parent=79 // pred_check_branch
          %3756 = sbr.rel (%p3754) target = $region120
        $region119: #{encoder_forward.1} parent=79 // pred_region
          _
        $region120: #{encoder_forward.1} parent=79 // pred_fallthru
          _
        // Predicated region
        $region121: #{encoder_forward.1} parent=79 // pred_check
          %p3757 = pneg %p423
        $region122: #{encoder_forward.1} parent=79 // pred_check_branch
          %3759 = sbr.rel (%p3757) target = $region124
        $region123: #{encoder_forward.1} parent=79 // pred_region
          _
        $region124: #{encoder_forward.1} parent=79 // pred_fallthru
          _
      $region80: #{encoder_forward.1} parent=5 // pred_fallthru
        _
      %p3760 = scmp.le.s32.totalorder 2, %s30
      // Predicated region
      $region125: #{encoder_forward.1} parent=5 // pred_check
        %p3761 = pneg %p3760
      $region126: #{encoder_forward.1} parent=5 // pred_check_branch
        %3763 = sbr.rel (%p3761) target = $region128
      $region127: #{encoder_forward.1} parent=5 // pred_region
        %s3764 = ssub.s32 %s30, 2
      $region128: #{encoder_forward.1} parent=5 // pred_fallthru
        _
    $region6: #{encoder_forward.1} parent=1 // loop_footer
      %s34 = sadd.s32 1, %s30
    $region7: #{encoder_forward.1} parent=1 // loop_footer_branch
      %29 = sbr.rel target = $region3
    $region8: #{encoder_forward.1} parent=1 // loop_exit
      _
    %3765 = vsyncpa [#allocation4], 1
    %s3766 = scalar_lea.sflag [#allocation4], 1
    %3767 = vsyncpa %s3766, 1
    %3768 = vsyncpa [#allocation6], 1
    %s3769 = scalar_lea.sflag [#allocation6], 1
    %3770 = vsyncpa %s3769, 1
    %3771 = vsyncpa [#allocation9], 1
    %s3772 = scalar_lea.sflag [#allocation9], 1
    %3773 = vsyncpa %s3772, 1

</llo_original>
